<compile_context>
chip_gen: v6e
topology: v6e:2x2x1
jax: 0.10.0
libtpu: 0.0.40
codegen_flags: <defaults>
</compile_context>

<pallas_src>
import functools

import jax
import jax.numpy as jnp
import numpy as np
from jax.experimental import pallas as pl


def _round_up(n, m):
    return -(-n // m) * m


# ------------------------------ fused kernel --------------------------------

def _cnn_fused_kernel(*refs, B, stage_hw, eps):
    """Entire CNN forward.  Ref order:
         x_ext,
         (wmat, gamma, beta) per conv        [2 * n_stages triples],
         valid-mask per stage                [n_stages],
         pool source-index per Down stage    [n_stages - 1],
         flatten source-index,
         (w, b) per MLP Linear,
         out_ref.
    """
    n_stages = len(stage_hw)
    idx = 0
    x_ext_ref = refs[idx]; idx += 1
    conv_refs = []
    for _ in range(2 * n_stages):
        conv_refs.append(refs[idx:idx + 3]); idx += 3
    mask_refs = refs[idx:idx + n_stages]; idx += n_stages
    psrc_refs = refs[idx:idx + n_stages - 1]; idx += n_stages - 1
    vsrc_ref = refs[idx]; idx += 1
    mlp_refs = refs[idx:-1]
    o_ref = refs[-1]

    def extend(y, ext):
        # zero lane-extension on both ends so the 9 tap windows stay in-bounds
        z = jnp.zeros((y.shape[0], ext), jnp.float32)
        return jnp.concatenate([z, y, z], axis=1)

    def conv_bn_relu(x_ext, w_ref, g_ref, bt_ref, mask, wp, length, n_valid):
        # x_ext : (Cin_p, ext + L + ext) zero-extended padded-flat activation
        # w_ref : (Cout, 9*Cin_p) tap-major weight
        ext = wp + 1
        taps = []
        for dy in (-1, 0, 1):
            for dx in (-1, 0, 1):
                s = ext + dy * wp + dx                 # static lane offset
                taps.append(x_ext[:, s:s + length])    # (Cin_p, L)
        patches = jnp.concatenate(taps, axis=0)        # (9*Cin_p, L)
        acc = jnp.dot(w_ref[...], patches,
                      preferred_element_type=jnp.float32)   # (Cout, L)
        # conv bias omitted: train-mode BN mean-subtraction cancels it exactly.
        # One-pass BN batch stats over valid positions (biased var, torch train).
        am = acc * mask
        inv_n = 1.0 / float(n_valid)
        mean = jnp.sum(am, axis=1, keepdims=True) * inv_n
        var = jnp.maximum(
            jnp.sum(am * acc, axis=1, keepdims=True) * inv_n - mean * mean, 0.0)
        scale = g_ref[...] * jax.lax.rsqrt(var + eps)
        shift = bt_ref[...] - mean * scale
        # normalize + affine + ReLU; re-zero the padding ring for the next conv
        return jnp.maximum(acc * scale + shift, 0.0) * mask

    y = None
    y_ext = x_ext_ref[...]
    ci = 0
    for si, (h, w) in enumerate(stage_hw):
        wp = w + 2
        length = B * (h + 2) * (w + 2)
        n_valid = B * h * w
        mask = mask_refs[si][...]
        if si > 0:
            # MaxPool2d(2): max of 4 lane-shifted copies of the previous
            # stage's output, then a 0/1 selection matmul that deposits the
            # subsampled values into this stage's padded-flat layout (ring
            # columns are all-zero, so the ring stays zeroed).
            ph, pw = stage_hw[si - 1]
            pwp = pw + 2
            plen = B * (ph + 2) * (pw + 2)
            yz = jnp.concatenate(
                [y, jnp.zeros((y.shape[0], pwp + 1), jnp.float32)], axis=1)
            t = jnp.maximum(
                jnp.maximum(yz[:, 0:plen], yz[:, 1:1 + plen]),
                jnp.maximum(yz[:, pwp:pwp + plen],
                            yz[:, pwp + 1:pwp + 1 + plen]))
            qidx = jax.lax.broadcasted_iota(jnp.int32, (plen, length), 0)
            spool = (qidx == psrc_refs[si - 1][...]).astype(jnp.float32)
            pooled = jnp.dot(t, spool, preferred_element_type=jnp.float32)
            y_ext = extend(pooled, wp + 1)
        w_r, g_r, bt_r = conv_refs[ci]; ci += 1
        y = conv_bn_relu(y_ext, w_r, g_r, bt_r, mask, wp, length, n_valid)
        w_r, g_r, bt_r = conv_refs[ci]; ci += 1
        y = conv_bn_relu(extend(y, wp + 1), w_r, g_r, bt_r, mask, wp, length,
                         n_valid)

    # Flatten (strip ring, torch channel-major order) fused into the first
    # Linear: ring-strip selection matmul to (C_last, B*h*w), then
    # per-(batch, channel) row-slab dots against the matching W0 row blocks.
    h_l, w_l = stage_hw[-1]
    hw = h_l * w_l
    plen = B * (h_l + 2) * (w_l + 2)
    vidx = jax.lax.broadcasted_iota(jnp.int32, (plen, B * hw), 0)
    vsel = (vidx == vsrc_ref[...]).astype(jnp.float32)
    valid = jnp.dot(y, vsel, preferred_element_type=jnp.float32)  # (C_last, B*hw)

    w0_ref, b0_ref = mlp_refs[0], mlp_refs[1]
    c_last = y.shape[0]
    rows = []
    for b in range(B):
        acc = b0_ref[...]                                          # (1, d0)
        for c in range(c_last):
            acc = acc + jnp.dot(valid[c:c + 1, b * hw:(b + 1) * hw],
                                w0_ref[c * hw:(c + 1) * hw, :],
                                preferred_element_type=jnp.float32)
        rows.append(acc)
    hvec = jnp.concatenate(rows, axis=0)                           # (B, d0)

    n_linear = len(mlp_refs) // 2
    for li in range(1, n_linear):
        hvec = jnp.maximum(hvec, 0.0)
        w_r, b_r = mlp_refs[2 * li], mlp_refs[2 * li + 1]
        hvec = (jnp.dot(hvec, w_r[...], preferred_element_type=jnp.float32)
                + b_r[...])
    o_ref[...] = hvec


# --------------------------- host-side index helpers ------------------------
# Built with numpy at trace time -> compile-time constants (no runtime glue).

def _valid_mask_np(B, h, w):
    m = np.zeros((h + 2, w + 2), np.float32)
    m[1:h + 1, 1:w + 1] = 1.0
    return np.tile(m, (B, 1, 1)).reshape(1, -1).astype(np.float32)


def _pool_src_np(B, h_out, w_out):
    # source flat index (previous stage, spatial 2h x 2w, padded-flat) for
    # every position of this stage's padded-flat layout; -1 on the ring.
    hp_o, wp_o = h_out + 2, w_out + 2
    hp_i, wp_i = 2 * h_out + 2, 2 * w_out + 2
    src = np.full((1, B * hp_o * wp_o), -1, np.int32)
    for b in range(B):
        for i in range(h_out):
            for j in range(w_out):
                r = b * hp_o * wp_o + (i + 1) * wp_o + (j + 1)
                q = b * hp_i * wp_i + (1 + 2 * i) * wp_i + (1 + 2 * j)
                src[0, r] = q
    return src


def _flat_src_np(B, h, w):
    # padded-flat source index for torch's channel-major x.view(B, -1) order
    hp, wp = h + 2, w + 2
    src = np.zeros((1, B * h * w), np.int32)
    for b in range(B):
        for i in range(h):
            for j in range(w):
                src[0, b * h * w + i * w + j] = (b * hp * wp
                                                 + (i + 1) * wp + (j + 1))
    return src


# --------------------------------- wrappers ---------------------------------

def prepare_params(params):
    """One-time conversion of torch-layout params into kernel operands."""
    convs = []
    for (p1, p2) in [params["inc"]] + list(params["downs"]):
        for p in (p1, p2):
            w = p["w"]                                   # (Cout, Cin, 3, 3)
            cout, cin = int(w.shape[0]), int(w.shape[1])
            cin_p = _round_up(cin, 8)                    # sublane-align taps
            if cin_p != cin:
                w = jnp.pad(w, ((0, 0), (0, cin_p - cin), (0, 0), (0, 0)))
            wmat = jnp.transpose(w, (0, 2, 3, 1)).reshape(cout, 9 * cin_p)
            # NOTE: conv bias p["b"] is dropped on purpose -- training-mode
            # BatchNorm subtracts the batch mean, which cancels it exactly.
            convs.append((wmat, p["gamma"].reshape(cout, 1),
                          p["beta"].reshape(cout, 1)))
    mlp = [(w, b.reshape(1, -1)) for (w, b) in params["mlp"]]
    return {"convs": convs, "mlp": mlp}


def cnn_forward(prepared, x_nchw):
    """x_nchw: [B, C, H, W] (torch convention); returns [B, output_channel]."""
    B, C, H, W = x_nchw.shape
    n_stages = len(prepared["convs"]) // 2
    stage_hw = tuple((H // (2 ** i), W // (2 ** i)) for i in range(n_stages))

    # The only per-call XLA glue: channel-major padded-flat input layout with
    # the conv zero ring and the tap lane-extension (~22 KB).
    c_p = _round_up(C, 8)
    e0 = (W + 2) + 1
    xc = jnp.transpose(x_nchw, (1, 0, 2, 3))
    xc = jnp.pad(xc, ((0, c_p - C), (0, 0), (1, 1), (1, 1)))
    x_ext = jnp.pad(xc.reshape(c_p, B * (H + 2) * (W + 2)), ((0, 0), (e0, e0)))

    masks = [jnp.asarray(_valid_mask_np(B, h, w)) for (h, w) in stage_hw]
    psrcs = [jnp.asarray(_pool_src_np(B, h, w)) for (h, w) in stage_hw[1:]]
    vsrc = jnp.asarray(_flat_src_np(B, *stage_hw[-1]))

    args = [x_ext]
    for (wm, g, bt) in prepared["convs"]:
        args += [wm, g, bt]
    args += list(masks) + list(psrcs) + [vsrc]
    for (wl, bl) in prepared["mlp"]:
        args += [wl, bl]

    n_out = int(prepared["mlp"][-1][0].shape[1])
    kernel = functools.partial(_cnn_fused_kernel, B=int(B), stage_hw=stage_hw,
                               eps=1e-5)
    # TODO(synk): only at much larger B/H/W, add a ("parallel",) batch grid
    # axis + two-pass BN reduction to engage megacore; at these shapes a
    # single grid-less invocation (everything VMEM-resident) is fastest.
    return pl.pallas_call(
        kernel,
        out_shape=jax.ShapeDtypeStruct((int(B), n_out), jnp.float32),
    )(*args)


# ------------------------------ parameter init ------------------------------

def init_params(key, input_channel, input_height, input_width,
                channels_list, output_mlp_hidden, output_channel):
    keys = iter(jax.random.split(key, 128))

    def conv_bn(cin, cout):
        w = jax.random.normal(next(keys), (cout, cin, 3, 3), jnp.float32)
        w = w / jnp.sqrt(9.0 * cin)
        b = 0.05 * jax.random.normal(next(keys), (cout,), jnp.float32)
        return {"w": w, "b": b,
                "gamma": jnp.ones((cout,), jnp.float32),   # nn.BatchNorm2d init
                "beta": jnp.zeros((cout,), jnp.float32)}

    inc = (conv_bn(input_channel, channels_list[0]),
           conv_bn(channels_list[0], channels_list[0]))
    downs = []
    oh, ow = input_height, input_width
    for i in range(1, len(channels_list)):
        downs.append((conv_bn(channels_list[i - 1], channels_list[i]),
                      conv_bn(channels_list[i], channels_list[i])))
        oh //= 2
        ow //= 2
    conv_out_dim = oh * ow * channels_list[-1]
    dims = [conv_out_dim] + list(output_mlp_hidden) + [output_channel]
    mlp = []
    for i in range(len(dims) - 1):
        w = jax.random.normal(next(keys), (dims[i], dims[i + 1]), jnp.float32)
        w = w / jnp.sqrt(float(dims[i]))
        b = 0.05 * jax.random.normal(next(keys), (dims[i + 1],), jnp.float32)
        mlp.append((w, b))
    return {"inc": inc, "downs": downs, "mlp": mlp}


# ------------------------------ pure-XLA reference ---------------------------

def reference_forward(params, x):
    """Same math (train-mode BN, 3x3 pad-1 convs, 2x2 maxpool, MLP) in XLA."""
    hi = jax.lax.Precision.HIGHEST

    def conv_bn_relu(v, p):
        out = jax.lax.conv_general_dilated(
            v, p["w"], (1, 1), "SAME",
            dimension_numbers=("NCHW", "OIHW", "NCHW"), precision=hi)
        out = out + p["b"][None, :, None, None]
        mean = out.mean(axis=(0, 2, 3), keepdims=True)
        var = out.var(axis=(0, 2, 3), keepdims=True)     # biased, like torch
        out = (out - mean) * jax.lax.rsqrt(var + 1e-5)
        out = (out * p["gamma"][None, :, None, None]
               + p["beta"][None, :, None, None])
        return jnp.maximum(out, 0.0)

    v = x
    for si, (p1, p2) in enumerate([params["inc"]] + list(params["downs"])):
        if si > 0:
            b_, c_, h_, w_ = v.shape
            v = v.reshape(b_, c_, h_ // 2, 2, w_ // 2, 2).max(axis=(3, 5))
        v = conv_bn_relu(v, p1)
        v = conv_bn_relu(v, p2)
    h = v.reshape(v.shape[0], -1)
    mlp = params["mlp"]
    for i, (w, b) in enumerate(mlp):
        h = jnp.dot(h, w, precision=hi) + b
        if i < len(mlp) - 1:
            h = jnp.maximum(h, 0.0)
    return h


# ----------------------------------- main ------------------------------------

if __name__ == "__main__":
    B = 2
    input_channel, input_height, input_width = 4, 16, 16
    channels_list = [8, 16]
    output_mlp_hidden = [32]
    output_channel = 6

    key = jax.random.PRNGKey(0)
    kx, kp = jax.random.split(key)
    x = jax.random.normal(kx, (B, input_channel, input_height, input_width),
                          jnp.float32)
    params = init_params(kp, input_channel, input_height, input_width,
                         channels_list, output_mlp_hidden, output_channel)
    prepared = prepare_params(params)   # one-time, outside the forward pass

    fwd = jax.jit(cnn_forward)
    out = jax.block_until_ready(fwd(prepared, x))
    assert out.shape == (B, output_channel)
    assert bool(jnp.all(jnp.isfinite(out)))

    ref = jax.block_until_ready(jax.jit(reference_forward)(params, x))
    np.testing.assert_allclose(np.asarray(out), np.asarray(ref),
                               rtol=1e-2, atol=1e-2)
    print("KERNEL_OK")
</pallas_src>

<mosaic_0001>
module attributes {stable_mosaic.version = 11 : i64} {
  func.func @_cnn_fused_kernel(%arg0: memref<8x686xf32, #tpu.memory_space<vmem>>, %arg1: memref<8x72xf32, #tpu.memory_space<vmem>>, %arg2: memref<8x1xf32, #tpu.memory_space<vmem>>, %arg3: memref<8x1xf32, #tpu.memory_space<vmem>>, %arg4: memref<8x72xf32, #tpu.memory_space<vmem>>, %arg5: memref<8x1xf32, #tpu.memory_space<vmem>>, %arg6: memref<8x1xf32, #tpu.memory_space<vmem>>, %arg7: memref<16x72xf32, #tpu.memory_space<vmem>>, %arg8: memref<16x1xf32, #tpu.memory_space<vmem>>, %arg9: memref<16x1xf32, #tpu.memory_space<vmem>>, %arg10: memref<16x144xf32, #tpu.memory_space<vmem>>, %arg11: memref<16x1xf32, #tpu.memory_space<vmem>>, %arg12: memref<16x1xf32, #tpu.memory_space<vmem>>, %arg13: memref<1x648xf32, #tpu.memory_space<vmem>>, %arg14: memref<1x200xf32, #tpu.memory_space<vmem>>, %arg15: memref<1x200xi32, #tpu.memory_space<vmem>>, %arg16: memref<1x128xi32, #tpu.memory_space<vmem>>, %arg17: memref<1024x32xf32, #tpu.memory_space<vmem>>, %arg18: memref<1x32xf32, #tpu.memory_space<vmem>>, %arg19: memref<32x6xf32, #tpu.memory_space<vmem>>, %arg20: memref<1x6xf32, #tpu.memory_space<vmem>>, %arg21: memref<2x6xf32, #tpu.memory_space<vmem>>) attributes {dimension_semantics = [], scalar_prefetch = 0 : i64, scratch_operands = 0 : i64, tpu.core_type = #tpu.core_type<tc>} {
    %c0 = arith.constant 0 : index
    %c0_0 = arith.constant 0 : index
    %0 = vector.load %arg0[%c0, %c0_0] : memref<8x686xf32, #tpu.memory_space<vmem>>, vector<8x686xf32>
    %c0_1 = arith.constant 0 : index
    %c0_2 = arith.constant 0 : index
    %1 = vector.load %arg13[%c0_1, %c0_2] : memref<1x648xf32, #tpu.memory_space<vmem>>, vector<1x648xf32>
    %2 = vector.extract_strided_slice %0 {offsets = [0, 0], sizes = [8, 648], strides = [1, 1]} : vector<8x686xf32> to vector<8x648xf32>
    %3 = vector.extract_strided_slice %0 {offsets = [0, 1], sizes = [8, 648], strides = [1, 1]} : vector<8x686xf32> to vector<8x648xf32>
    %4 = vector.extract_strided_slice %0 {offsets = [0, 2], sizes = [8, 648], strides = [1, 1]} : vector<8x686xf32> to vector<8x648xf32>
    %5 = vector.extract_strided_slice %0 {offsets = [0, 18], sizes = [8, 648], strides = [1, 1]} : vector<8x686xf32> to vector<8x648xf32>
    %6 = vector.extract_strided_slice %0 {offsets = [0, 19], sizes = [8, 648], strides = [1, 1]} : vector<8x686xf32> to vector<8x648xf32>
    %7 = vector.extract_strided_slice %0 {offsets = [0, 20], sizes = [8, 648], strides = [1, 1]} : vector<8x686xf32> to vector<8x648xf32>
    %8 = vector.extract_strided_slice %0 {offsets = [0, 36], sizes = [8, 648], strides = [1, 1]} : vector<8x686xf32> to vector<8x648xf32>
    %9 = vector.extract_strided_slice %0 {offsets = [0, 37], sizes = [8, 648], strides = [1, 1]} : vector<8x686xf32> to vector<8x648xf32>
    %10 = vector.extract_strided_slice %0 {offsets = [0, 38], sizes = [8, 648], strides = [1, 1]} : vector<8x686xf32> to vector<8x648xf32>
    %11 = tpu.concatenate %2, %3, %4, %5, %6, %7, %8, %9, %10 in 0 : vector<8x648xf32>, vector<8x648xf32>, vector<8x648xf32>, vector<8x648xf32>, vector<8x648xf32>, vector<8x648xf32>, vector<8x648xf32>, vector<8x648xf32>, vector<8x648xf32> -> vector<72x648xf32>
    %c0_3 = arith.constant 0 : index
    %c0_4 = arith.constant 0 : index
    %12 = vector.load %arg1[%c0_3, %c0_4] : memref<8x72xf32, #tpu.memory_space<vmem>>, vector<8x72xf32>
    %cst = arith.constant dense<0.000000e+00> : vector<8x648xf32>
    %13 = tpu.matmul %12, %11, %cst {dimension_numbers = #tpu.dot_dimension_numbers<[1], [0], [0], [1], [0, 0, 1, 1], [], []>} : vector<8x72xf32>, vector<72x648xf32>, vector<8x648xf32> -> vector<8x648xf32>
    %14 = vector.broadcast %1 : vector<1x648xf32> to vector<8x648xf32>
    %15 = arith.mulf %13, %14 : vector<8x648xf32>
    %cst_5 = arith.constant dense<0.000000e+00> : vector<8xf32>
    %16 = vector.multi_reduction <add>, %15, %cst_5 [1] : vector<8x648xf32> to vector<8xf32>
    %17 = vector.shape_cast %16 : vector<8xf32> to vector<8x1xf32>
    %cst_6 = arith.constant 0.001953125 : f32
    %18 = vector.broadcast %cst_6 : f32 to vector<8x1xf32>
    %19 = arith.mulf %17, %18 : vector<8x1xf32>
    %20 = arith.mulf %15, %13 : vector<8x648xf32>
    %cst_7 = arith.constant dense<0.000000e+00> : vector<8xf32>
    %21 = vector.multi_reduction <add>, %20, %cst_7 [1] : vector<8x648xf32> to vector<8xf32>
    %22 = vector.shape_cast %21 : vector<8xf32> to vector<8x1xf32>
    %cst_8 = arith.constant 0.001953125 : f32
    %23 = vector.broadcast %cst_8 : f32 to vector<8x1xf32>
    %24 = arith.mulf %22, %23 : vector<8x1xf32>
    %25 = arith.mulf %19, %19 : vector<8x1xf32>
    %26 = arith.subf %24, %25 : vector<8x1xf32>
    %cst_9 = arith.constant 0.000000e+00 : f32
    %27 = vector.broadcast %cst_9 : f32 to vector<8x1xf32>
    %28 = arith.maximumf %26, %27 : vector<8x1xf32>
    %c0_10 = arith.constant 0 : index
    %c0_11 = arith.constant 0 : index
    %29 = vector.load %arg2[%c0_10, %c0_11] : memref<8x1xf32, #tpu.memory_space<vmem>>, vector<8x1xf32>
    %cst_12 = arith.constant 9.99999974E-6 : f32
    %30 = vector.broadcast %cst_12 : f32 to vector<8x1xf32>
    %31 = arith.addf %28, %30 : vector<8x1xf32>
    %32 = math.rsqrt %31 : vector<8x1xf32>
    %33 = arith.mulf %29, %32 : vector<8x1xf32>
    %c0_13 = arith.constant 0 : index
    %c0_14 = arith.constant 0 : index
    %34 = vector.load %arg3[%c0_13, %c0_14] : memref<8x1xf32, #tpu.memory_space<vmem>>, vector<8x1xf32>
    %35 = arith.mulf %19, %33 : vector<8x1xf32>
    %36 = arith.subf %34, %35 : vector<8x1xf32>
    %37 = vector.broadcast %33 : vector<8x1xf32> to vector<8x648xf32>
    %38 = arith.mulf %13, %37 : vector<8x648xf32>
    %39 = vector.broadcast %36 : vector<8x1xf32> to vector<8x648xf32>
    %40 = arith.addf %38, %39 : vector<8x648xf32>
    %cst_15 = arith.constant 0.000000e+00 : f32
    %41 = vector.broadcast %cst_15 : f32 to vector<8x648xf32>
    %42 = arith.maximumf %40, %41 : vector<8x648xf32>
    %43 = vector.broadcast %1 : vector<1x648xf32> to vector<8x648xf32>
    %44 = arith.mulf %42, %43 : vector<8x648xf32>
    %cst_16 = arith.constant 0.000000e+00 : f32
    %45 = vector.broadcast %cst_16 : f32 to vector<8x19xf32>
    %46 = tpu.concatenate %45, %44, %45 in 1 : vector<8x19xf32>, vector<8x648xf32>, vector<8x19xf32> -> vector<8x686xf32>
    %47 = vector.extract_strided_slice %46 {offsets = [0, 0], sizes = [8, 648], strides = [1, 1]} : vector<8x686xf32> to vector<8x648xf32>
    %48 = vector.extract_strided_slice %46 {offsets = [0, 1], sizes = [8, 648], strides = [1, 1]} : vector<8x686xf32> to vector<8x648xf32>
    %49 = vector.extract_strided_slice %46 {offsets = [0, 2], sizes = [8, 648], strides = [1, 1]} : vector<8x686xf32> to vector<8x648xf32>
    %50 = vector.extract_strided_slice %46 {offsets = [0, 18], sizes = [8, 648], strides = [1, 1]} : vector<8x686xf32> to vector<8x648xf32>
    %51 = vector.extract_strided_slice %46 {offsets = [0, 19], sizes = [8, 648], strides = [1, 1]} : vector<8x686xf32> to vector<8x648xf32>
    %52 = vector.extract_strided_slice %46 {offsets = [0, 20], sizes = [8, 648], strides = [1, 1]} : vector<8x686xf32> to vector<8x648xf32>
    %53 = vector.extract_strided_slice %46 {offsets = [0, 36], sizes = [8, 648], strides = [1, 1]} : vector<8x686xf32> to vector<8x648xf32>
    %54 = vector.extract_strided_slice %46 {offsets = [0, 37], sizes = [8, 648], strides = [1, 1]} : vector<8x686xf32> to vector<8x648xf32>
    %55 = vector.extract_strided_slice %46 {offsets = [0, 38], sizes = [8, 648], strides = [1, 1]} : vector<8x686xf32> to vector<8x648xf32>
    %56 = tpu.concatenate %47, %48, %49, %50, %51, %52, %53, %54, %55 in 0 : vector<8x648xf32>, vector<8x648xf32>, vector<8x648xf32>, vector<8x648xf32>, vector<8x648xf32>, vector<8x648xf32>, vector<8x648xf32>, vector<8x648xf32>, vector<8x648xf32> -> vector<72x648xf32>
    %c0_17 = arith.constant 0 : index
    %c0_18 = arith.constant 0 : index
    %57 = vector.load %arg4[%c0_17, %c0_18] : memref<8x72xf32, #tpu.memory_space<vmem>>, vector<8x72xf32>
    %cst_19 = arith.constant dense<0.000000e+00> : vector<8x648xf32>
    %58 = tpu.matmul %57, %56, %cst_19 {dimension_numbers = #tpu.dot_dimension_numbers<[1], [0], [0], [1], [0, 0, 1, 1], [], []>} : vector<8x72xf32>, vector<72x648xf32>, vector<8x648xf32> -> vector<8x648xf32>
    %59 = vector.broadcast %1 : vector<1x648xf32> to vector<8x648xf32>
    %60 = arith.mulf %58, %59 : vector<8x648xf32>
    %cst_20 = arith.constant dense<0.000000e+00> : vector<8xf32>
    %61 = vector.multi_reduction <add>, %60, %cst_20 [1] : vector<8x648xf32> to vector<8xf32>
    %62 = vector.shape_cast %61 : vector<8xf32> to vector<8x1xf32>
    %cst_21 = arith.constant 0.001953125 : f32
    %63 = vector.broadcast %cst_21 : f32 to vector<8x1xf32>
    %64 = arith.mulf %62, %63 : vector<8x1xf32>
    %65 = arith.mulf %60, %58 : vector<8x648xf32>
    %cst_22 = arith.constant dense<0.000000e+00> : vector<8xf32>
    %66 = vector.multi_reduction <add>, %65, %cst_22 [1] : vector<8x648xf32> to vector<8xf32>
    %67 = vector.shape_cast %66 : vector<8xf32> to vector<8x1xf32>
    %cst_23 = arith.constant 0.001953125 : f32
    %68 = vector.broadcast %cst_23 : f32 to vector<8x1xf32>
    %69 = arith.mulf %67, %68 : vector<8x1xf32>
    %70 = arith.mulf %64, %64 : vector<8x1xf32>
    %71 = arith.subf %69, %70 : vector<8x1xf32>
    %cst_24 = arith.constant 0.000000e+00 : f32
    %72 = vector.broadcast %cst_24 : f32 to vector<8x1xf32>
    %73 = arith.maximumf %71, %72 : vector<8x1xf32>
    %c0_25 = arith.constant 0 : index
    %c0_26 = arith.constant 0 : index
    %74 = vector.load %arg5[%c0_25, %c0_26] : memref<8x1xf32, #tpu.memory_space<vmem>>, vector<8x1xf32>
    %cst_27 = arith.constant 9.99999974E-6 : f32
    %75 = vector.broadcast %cst_27 : f32 to vector<8x1xf32>
    %76 = arith.addf %73, %75 : vector<8x1xf32>
    %77 = math.rsqrt %76 : vector<8x1xf32>
    %78 = arith.mulf %74, %77 : vector<8x1xf32>
    %c0_28 = arith.constant 0 : index
    %c0_29 = arith.constant 0 : index
    %79 = vector.load %arg6[%c0_28, %c0_29] : memref<8x1xf32, #tpu.memory_space<vmem>>, vector<8x1xf32>
    %80 = arith.mulf %64, %78 : vector<8x1xf32>
    %81 = arith.subf %79, %80 : vector<8x1xf32>
    %82 = vector.broadcast %78 : vector<8x1xf32> to vector<8x648xf32>
    %83 = arith.mulf %58, %82 : vector<8x648xf32>
    %84 = vector.broadcast %81 : vector<8x1xf32> to vector<8x648xf32>
    %85 = arith.addf %83, %84 : vector<8x648xf32>
    %cst_30 = arith.constant 0.000000e+00 : f32
    %86 = vector.broadcast %cst_30 : f32 to vector<8x648xf32>
    %87 = arith.maximumf %85, %86 : vector<8x648xf32>
    %88 = vector.broadcast %1 : vector<1x648xf32> to vector<8x648xf32>
    %89 = arith.mulf %87, %88 : vector<8x648xf32>
    %c0_31 = arith.constant 0 : index
    %c0_32 = arith.constant 0 : index
    %90 = vector.load %arg14[%c0_31, %c0_32] : memref<1x200xf32, #tpu.memory_space<vmem>>, vector<1x200xf32>
    %cst_33 = arith.constant 0.000000e+00 : f32
    %91 = vector.broadcast %cst_33 : f32 to vector<8x19xf32>
    %92 = tpu.concatenate %89, %91 in 1 : vector<8x648xf32>, vector<8x19xf32> -> vector<8x667xf32>
    %93 = vector.extract_strided_slice %92 {offsets = [0, 0], sizes = [8, 648], strides = [1, 1]} : vector<8x667xf32> to vector<8x648xf32>
    %94 = vector.extract_strided_slice %92 {offsets = [0, 1], sizes = [8, 648], strides = [1, 1]} : vector<8x667xf32> to vector<8x648xf32>
    %95 = arith.maximumf %93, %94 : vector<8x648xf32>
    %96 = vector.extract_strided_slice %92 {offsets = [0, 18], sizes = [8, 648], strides = [1, 1]} : vector<8x667xf32> to vector<8x648xf32>
    %97 = vector.extract_strided_slice %92 {offsets = [0, 19], sizes = [8, 648], strides = [1, 1]} : vector<8x667xf32> to vector<8x648xf32>
    %98 = arith.maximumf %96, %97 : vector<8x648xf32>
    %99 = arith.maximumf %95, %98 : vector<8x648xf32>
    %100 = tpu.iota {dimensions = array<i32: 0>} : vector<648x200xi32>
    %c0_34 = arith.constant 0 : index
    %c0_35 = arith.constant 0 : index
    %101 = vector.load %arg15[%c0_34, %c0_35] : memref<1x200xi32, #tpu.memory_space<vmem>>, vector<1x200xi32>
    %102 = vector.broadcast %101 : vector<1x200xi32> to vector<648x200xi32>
    %103 = arith.cmpi eq, %100, %102 : vector<648x200xi32>
    %104 = arith.extui %103 : vector<648x200xi1> to vector<648x200xi32>
    %105 = arith.sitofp %104 : vector<648x200xi32> to vector<648x200xf32>
    %cst_36 = arith.constant dense<0.000000e+00> : vector<8x200xf32>
    %106 = tpu.matmul %99, %105, %cst_36 {dimension_numbers = #tpu.dot_dimension_numbers<[1], [0], [0], [1], [0, 0, 1, 1], [], []>} : vector<8x648xf32>, vector<648x200xf32>, vector<8x200xf32> -> vector<8x200xf32>
    %cst_37 = arith.constant 0.000000e+00 : f32
    %107 = vector.broadcast %cst_37 : f32 to vector<8x11xf32>
    %108 = tpu.concatenate %107, %106, %107 in 1 : vector<8x11xf32>, vector<8x200xf32>, vector<8x11xf32> -> vector<8x222xf32>
    %109 = vector.extract_strided_slice %108 {offsets = [0, 0], sizes = [8, 200], strides = [1, 1]} : vector<8x222xf32> to vector<8x200xf32>
    %110 = vector.extract_strided_slice %108 {offsets = [0, 1], sizes = [8, 200], strides = [1, 1]} : vector<8x222xf32> to vector<8x200xf32>
    %111 = vector.extract_strided_slice %108 {offsets = [0, 2], sizes = [8, 200], strides = [1, 1]} : vector<8x222xf32> to vector<8x200xf32>
    %112 = vector.extract_strided_slice %108 {offsets = [0, 10], sizes = [8, 200], strides = [1, 1]} : vector<8x222xf32> to vector<8x200xf32>
    %113 = vector.extract_strided_slice %108 {offsets = [0, 11], sizes = [8, 200], strides = [1, 1]} : vector<8x222xf32> to vector<8x200xf32>
    %114 = vector.extract_strided_slice %108 {offsets = [0, 12], sizes = [8, 200], strides = [1, 1]} : vector<8x222xf32> to vector<8x200xf32>
    %115 = vector.extract_strided_slice %108 {offsets = [0, 20], sizes = [8, 200], strides = [1, 1]} : vector<8x222xf32> to vector<8x200xf32>
    %116 = vector.extract_strided_slice %108 {offsets = [0, 21], sizes = [8, 200], strides = [1, 1]} : vector<8x222xf32> to vector<8x200xf32>
    %117 = vector.extract_strided_slice %108 {offsets = [0, 22], sizes = [8, 200], strides = [1, 1]} : vector<8x222xf32> to vector<8x200xf32>
    %118 = tpu.concatenate %109, %110, %111, %112, %113, %114, %115, %116, %117 in 0 : vector<8x200xf32>, vector<8x200xf32>, vector<8x200xf32>, vector<8x200xf32>, vector<8x200xf32>, vector<8x200xf32>, vector<8x200xf32>, vector<8x200xf32>, vector<8x200xf32> -> vector<72x200xf32>
    %c0_38 = arith.constant 0 : index
    %c0_39 = arith.constant 0 : index
    %119 = vector.load %arg7[%c0_38, %c0_39] : memref<16x72xf32, #tpu.memory_space<vmem>>, vector<16x72xf32>
    %cst_40 = arith.constant dense<0.000000e+00> : vector<16x200xf32>
    %120 = tpu.matmul %119, %118, %cst_40 {dimension_numbers = #tpu.dot_dimension_numbers<[1], [0], [0], [1], [0, 0, 1, 1], [], []>} : vector<16x72xf32>, vector<72x200xf32>, vector<16x200xf32> -> vector<16x200xf32>
    %121 = vector.broadcast %90 : vector<1x200xf32> to vector<16x200xf32>
    %122 = arith.mulf %120, %121 : vector<16x200xf32>
    %cst_41 = arith.constant dense<0.000000e+00> : vector<16xf32>
    %123 = vector.multi_reduction <add>, %122, %cst_41 [1] : vector<16x200xf32> to vector<16xf32>
    %124 = vector.shape_cast %123 : vector<16xf32> to vector<16x1xf32>
    %cst_42 = arith.constant 7.812500e-03 : f32
    %125 = vector.broadcast %cst_42 : f32 to vector<16x1xf32>
    %126 = arith.mulf %124, %125 : vector<16x1xf32>
    %127 = arith.mulf %122, %120 : vector<16x200xf32>
    %cst_43 = arith.constant dense<0.000000e+00> : vector<16xf32>
    %128 = vector.multi_reduction <add>, %127, %cst_43 [1] : vector<16x200xf32> to vector<16xf32>
    %129 = vector.shape_cast %128 : vector<16xf32> to vector<16x1xf32>
    %cst_44 = arith.constant 7.812500e-03 : f32
    %130 = vector.broadcast %cst_44 : f32 to vector<16x1xf32>
    %131 = arith.mulf %129, %130 : vector<16x1xf32>
    %132 = arith.mulf %126, %126 : vector<16x1xf32>
    %133 = arith.subf %131, %132 : vector<16x1xf32>
    %cst_45 = arith.constant 0.000000e+00 : f32
    %134 = vector.broadcast %cst_45 : f32 to vector<16x1xf32>
    %135 = arith.maximumf %133, %134 : vector<16x1xf32>
    %c0_46 = arith.constant 0 : index
    %c0_47 = arith.constant 0 : index
    %136 = vector.load %arg8[%c0_46, %c0_47] : memref<16x1xf32, #tpu.memory_space<vmem>>, vector<16x1xf32>
    %cst_48 = arith.constant 9.99999974E-6 : f32
    %137 = vector.broadcast %cst_48 : f32 to vector<16x1xf32>
    %138 = arith.addf %135, %137 : vector<16x1xf32>
    %139 = math.rsqrt %138 : vector<16x1xf32>
    %140 = arith.mulf %136, %139 : vector<16x1xf32>
    %c0_49 = arith.constant 0 : index
    %c0_50 = arith.constant 0 : index
    %141 = vector.load %arg9[%c0_49, %c0_50] : memref<16x1xf32, #tpu.memory_space<vmem>>, vector<16x1xf32>
    %142 = arith.mulf %126, %140 : vector<16x1xf32>
    %143 = arith.subf %141, %142 : vector<16x1xf32>
    %144 = vector.broadcast %140 : vector<16x1xf32> to vector<16x200xf32>
    %145 = arith.mulf %120, %144 : vector<16x200xf32>
    %146 = vector.broadcast %143 : vector<16x1xf32> to vector<16x200xf32>
    %147 = arith.addf %145, %146 : vector<16x200xf32>
    %cst_51 = arith.constant 0.000000e+00 : f32
    %148 = vector.broadcast %cst_51 : f32 to vector<16x200xf32>
    %149 = arith.maximumf %147, %148 : vector<16x200xf32>
    %150 = vector.broadcast %90 : vector<1x200xf32> to vector<16x200xf32>
    %151 = arith.mulf %149, %150 : vector<16x200xf32>
    %cst_52 = arith.constant 0.000000e+00 : f32
    %152 = vector.broadcast %cst_52 : f32 to vector<16x11xf32>
    %153 = tpu.concatenate %152, %151, %152 in 1 : vector<16x11xf32>, vector<16x200xf32>, vector<16x11xf32> -> vector<16x222xf32>
    %154 = vector.extract_strided_slice %153 {offsets = [0, 0], sizes = [16, 200], strides = [1, 1]} : vector<16x222xf32> to vector<16x200xf32>
    %155 = vector.extract_strided_slice %153 {offsets = [0, 1], sizes = [16, 200], strides = [1, 1]} : vector<16x222xf32> to vector<16x200xf32>
    %156 = vector.extract_strided_slice %153 {offsets = [0, 2], sizes = [16, 200], strides = [1, 1]} : vector<16x222xf32> to vector<16x200xf32>
    %157 = vector.extract_strided_slice %153 {offsets = [0, 10], sizes = [16, 200], strides = [1, 1]} : vector<16x222xf32> to vector<16x200xf32>
    %158 = vector.extract_strided_slice %153 {offsets = [0, 11], sizes = [16, 200], strides = [1, 1]} : vector<16x222xf32> to vector<16x200xf32>
    %159 = vector.extract_strided_slice %153 {offsets = [0, 12], sizes = [16, 200], strides = [1, 1]} : vector<16x222xf32> to vector<16x200xf32>
    %160 = vector.extract_strided_slice %153 {offsets = [0, 20], sizes = [16, 200], strides = [1, 1]} : vector<16x222xf32> to vector<16x200xf32>
    %161 = vector.extract_strided_slice %153 {offsets = [0, 21], sizes = [16, 200], strides = [1, 1]} : vector<16x222xf32> to vector<16x200xf32>
    %162 = vector.extract_strided_slice %153 {offsets = [0, 22], sizes = [16, 200], strides = [1, 1]} : vector<16x222xf32> to vector<16x200xf32>
    %163 = tpu.concatenate %154, %155, %156, %157, %158, %159, %160, %161, %162 in 0 : vector<16x200xf32>, vector<16x200xf32>, vector<16x200xf32>, vector<16x200xf32>, vector<16x200xf32>, vector<16x200xf32>, vector<16x200xf32>, vector<16x200xf32>, vector<16x200xf32> -> vector<144x200xf32>
    %c0_53 = arith.constant 0 : index
    %c0_54 = arith.constant 0 : index
    %164 = vector.load %arg10[%c0_53, %c0_54] : memref<16x144xf32, #tpu.memory_space<vmem>>, vector<16x144xf32>
    %cst_55 = arith.constant dense<0.000000e+00> : vector<16x200xf32>
    %165 = tpu.matmul %164, %163, %cst_55 {dimension_numbers = #tpu.dot_dimension_numbers<[1], [0], [0], [1], [0, 0, 1, 1], [], []>} : vector<16x144xf32>, vector<144x200xf32>, vector<16x200xf32> -> vector<16x200xf32>
    %166 = vector.broadcast %90 : vector<1x200xf32> to vector<16x200xf32>
    %167 = arith.mulf %165, %166 : vector<16x200xf32>
    %cst_56 = arith.constant dense<0.000000e+00> : vector<16xf32>
    %168 = vector.multi_reduction <add>, %167, %cst_56 [1] : vector<16x200xf32> to vector<16xf32>
    %169 = vector.shape_cast %168 : vector<16xf32> to vector<16x1xf32>
    %cst_57 = arith.constant 7.812500e-03 : f32
    %170 = vector.broadcast %cst_57 : f32 to vector<16x1xf32>
    %171 = arith.mulf %169, %170 : vector<16x1xf32>
    %172 = arith.mulf %167, %165 : vector<16x200xf32>
    %cst_58 = arith.constant dense<0.000000e+00> : vector<16xf32>
    %173 = vector.multi_reduction <add>, %172, %cst_58 [1] : vector<16x200xf32> to vector<16xf32>
    %174 = vector.shape_cast %173 : vector<16xf32> to vector<16x1xf32>
    %cst_59 = arith.constant 7.812500e-03 : f32
    %175 = vector.broadcast %cst_59 : f32 to vector<16x1xf32>
    %176 = arith.mulf %174, %175 : vector<16x1xf32>
    %177 = arith.mulf %171, %171 : vector<16x1xf32>
    %178 = arith.subf %176, %177 : vector<16x1xf32>
    %cst_60 = arith.constant 0.000000e+00 : f32
    %179 = vector.broadcast %cst_60 : f32 to vector<16x1xf32>
    %180 = arith.maximumf %178, %179 : vector<16x1xf32>
    %c0_61 = arith.constant 0 : index
    %c0_62 = arith.constant 0 : index
    %181 = vector.load %arg11[%c0_61, %c0_62] : memref<16x1xf32, #tpu.memory_space<vmem>>, vector<16x1xf32>
    %cst_63 = arith.constant 9.99999974E-6 : f32
    %182 = vector.broadcast %cst_63 : f32 to vector<16x1xf32>
    %183 = arith.addf %180, %182 : vector<16x1xf32>
    %184 = math.rsqrt %183 : vector<16x1xf32>
    %185 = arith.mulf %181, %184 : vector<16x1xf32>
    %c0_64 = arith.constant 0 : index
    %c0_65 = arith.constant 0 : index
    %186 = vector.load %arg12[%c0_64, %c0_65] : memref<16x1xf32, #tpu.memory_space<vmem>>, vector<16x1xf32>
    %187 = arith.mulf %171, %185 : vector<16x1xf32>
    %188 = arith.subf %186, %187 : vector<16x1xf32>
    %189 = vector.broadcast %185 : vector<16x1xf32> to vector<16x200xf32>
    %190 = arith.mulf %165, %189 : vector<16x200xf32>
    %191 = vector.broadcast %188 : vector<16x1xf32> to vector<16x200xf32>
    %192 = arith.addf %190, %191 : vector<16x200xf32>
    %cst_66 = arith.constant 0.000000e+00 : f32
    %193 = vector.broadcast %cst_66 : f32 to vector<16x200xf32>
    %194 = arith.maximumf %192, %193 : vector<16x200xf32>
    %195 = vector.broadcast %90 : vector<1x200xf32> to vector<16x200xf32>
    %196 = arith.mulf %194, %195 : vector<16x200xf32>
    %197 = tpu.iota {dimensions = array<i32: 0>} : vector<200x128xi32>
    %c0_67 = arith.constant 0 : index
    %c0_68 = arith.constant 0 : index
    %198 = vector.load %arg16[%c0_67, %c0_68] : memref<1x128xi32, #tpu.memory_space<vmem>>, vector<1x128xi32>
    %199 = vector.broadcast %198 : vector<1x128xi32> to vector<200x128xi32>
    %200 = arith.cmpi eq, %197, %199 : vector<200x128xi32>
    %201 = arith.extui %200 : vector<200x128xi1> to vector<200x128xi32>
    %202 = arith.sitofp %201 : vector<200x128xi32> to vector<200x128xf32>
    %cst_69 = arith.constant dense<0.000000e+00> : vector<16x128xf32>
    %203 = tpu.matmul %196, %202, %cst_69 {dimension_numbers = #tpu.dot_dimension_numbers<[1], [0], [0], [1], [0, 0, 1, 1], [], []>} : vector<16x200xf32>, vector<200x128xf32>, vector<16x128xf32> -> vector<16x128xf32>
    %c0_70 = arith.constant 0 : index
    %c0_71 = arith.constant 0 : index
    %204 = vector.load %arg18[%c0_70, %c0_71] : memref<1x32xf32, #tpu.memory_space<vmem>>, vector<1x32xf32>
    %205 = vector.extract_strided_slice %203 {offsets = [0, 0], sizes = [1, 64], strides = [1, 1]} : vector<16x128xf32> to vector<1x64xf32>
    %c0_72 = arith.constant 0 : index
    %c0_73 = arith.constant 0 : index
    %206 = vector.load %arg17[%c0_72, %c0_73] : memref<1024x32xf32, #tpu.memory_space<vmem>>, vector<64x32xf32>
    %cst_74 = arith.constant dense<0.000000e+00> : vector<1x32xf32>
    %207 = tpu.matmul %205, %206, %cst_74 {dimension_numbers = #tpu.dot_dimension_numbers<[1], [0], [0], [1], [0, 0, 1, 1], [], []>} : vector<1x64xf32>, vector<64x32xf32>, vector<1x32xf32> -> vector<1x32xf32>
    %208 = arith.addf %204, %207 : vector<1x32xf32>
    %209 = vector.extract_strided_slice %203 {offsets = [1, 0], sizes = [1, 64], strides = [1, 1]} : vector<16x128xf32> to vector<1x64xf32>
    %c64 = arith.constant 64 : index
    %c0_75 = arith.constant 0 : index
    %210 = vector.load %arg17[%c64, %c0_75] : memref<1024x32xf32, #tpu.memory_space<vmem>>, vector<64x32xf32>
    %cst_76 = arith.constant dense<0.000000e+00> : vector<1x32xf32>
    %211 = tpu.matmul %209, %210, %cst_76 {dimension_numbers = #tpu.dot_dimension_numbers<[1], [0], [0], [1], [0, 0, 1, 1], [], []>} : vector<1x64xf32>, vector<64x32xf32>, vector<1x32xf32> -> vector<1x32xf32>
    %212 = arith.addf %208, %211 : vector<1x32xf32>
    %213 = vector.extract_strided_slice %203 {offsets = [2, 0], sizes = [1, 64], strides = [1, 1]} : vector<16x128xf32> to vector<1x64xf32>
    %c128 = arith.constant 128 : index
    %c0_77 = arith.constant 0 : index
    %214 = vector.load %arg17[%c128, %c0_77] : memref<1024x32xf32, #tpu.memory_space<vmem>>, vector<64x32xf32>
    %cst_78 = arith.constant dense<0.000000e+00> : vector<1x32xf32>
    %215 = tpu.matmul %213, %214, %cst_78 {dimension_numbers = #tpu.dot_dimension_numbers<[1], [0], [0], [1], [0, 0, 1, 1], [], []>} : vector<1x64xf32>, vector<64x32xf32>, vector<1x32xf32> -> vector<1x32xf32>
    %216 = arith.addf %212, %215 : vector<1x32xf32>
    %217 = vector.extract_strided_slice %203 {offsets = [3, 0], sizes = [1, 64], strides = [1, 1]} : vector<16x128xf32> to vector<1x64xf32>
    %c192 = arith.constant 192 : index
    %c0_79 = arith.constant 0 : index
    %218 = vector.load %arg17[%c192, %c0_79] : memref<1024x32xf32, #tpu.memory_space<vmem>>, vector<64x32xf32>
    %cst_80 = arith.constant dense<0.000000e+00> : vector<1x32xf32>
    %219 = tpu.matmul %217, %218, %cst_80 {dimension_numbers = #tpu.dot_dimension_numbers<[1], [0], [0], [1], [0, 0, 1, 1], [], []>} : vector<1x64xf32>, vector<64x32xf32>, vector<1x32xf32> -> vector<1x32xf32>
    %220 = arith.addf %216, %219 : vector<1x32xf32>
    %221 = vector.extract_strided_slice %203 {offsets = [4, 0], sizes = [1, 64], strides = [1, 1]} : vector<16x128xf32> to vector<1x64xf32>
    %c256 = arith.constant 256 : index
    %c0_81 = arith.constant 0 : index
    %222 = vector.load %arg17[%c256, %c0_81] : memref<1024x32xf32, #tpu.memory_space<vmem>>, vector<64x32xf32>
    %cst_82 = arith.constant dense<0.000000e+00> : vector<1x32xf32>
    %223 = tpu.matmul %221, %222, %cst_82 {dimension_numbers = #tpu.dot_dimension_numbers<[1], [0], [0], [1], [0, 0, 1, 1], [], []>} : vector<1x64xf32>, vector<64x32xf32>, vector<1x32xf32> -> vector<1x32xf32>
    %224 = arith.addf %220, %223 : vector<1x32xf32>
    %225 = vector.extract_strided_slice %203 {offsets = [5, 0], sizes = [1, 64], strides = [1, 1]} : vector<16x128xf32> to vector<1x64xf32>
    %c320 = arith.constant 320 : index
    %c0_83 = arith.constant 0 : index
    %226 = vector.load %arg17[%c320, %c0_83] : memref<1024x32xf32, #tpu.memory_space<vmem>>, vector<64x32xf32>
    %cst_84 = arith.constant dense<0.000000e+00> : vector<1x32xf32>
    %227 = tpu.matmul %225, %226, %cst_84 {dimension_numbers = #tpu.dot_dimension_numbers<[1], [0], [0], [1], [0, 0, 1, 1], [], []>} : vector<1x64xf32>, vector<64x32xf32>, vector<1x32xf32> -> vector<1x32xf32>
    %228 = arith.addf %224, %227 : vector<1x32xf32>
    %229 = vector.extract_strided_slice %203 {offsets = [6, 0], sizes = [1, 64], strides = [1, 1]} : vector<16x128xf32> to vector<1x64xf32>
    %c384 = arith.constant 384 : index
    %c0_85 = arith.constant 0 : index
    %230 = vector.load %arg17[%c384, %c0_85] : memref<1024x32xf32, #tpu.memory_space<vmem>>, vector<64x32xf32>
    %cst_86 = arith.constant dense<0.000000e+00> : vector<1x32xf32>
    %231 = tpu.matmul %229, %230, %cst_86 {dimension_numbers = #tpu.dot_dimension_numbers<[1], [0], [0], [1], [0, 0, 1, 1], [], []>} : vector<1x64xf32>, vector<64x32xf32>, vector<1x32xf32> -> vector<1x32xf32>
    %232 = arith.addf %228, %231 : vector<1x32xf32>
    %233 = vector.extract_strided_slice %203 {offsets = [7, 0], sizes = [1, 64], strides = [1, 1]} : vector<16x128xf32> to vector<1x64xf32>
    %c448 = arith.constant 448 : index
    %c0_87 = arith.constant 0 : index
    %234 = vector.load %arg17[%c448, %c0_87] : memref<1024x32xf32, #tpu.memory_space<vmem>>, vector<64x32xf32>
    %cst_88 = arith.constant dense<0.000000e+00> : vector<1x32xf32>
    %235 = tpu.matmul %233, %234, %cst_88 {dimension_numbers = #tpu.dot_dimension_numbers<[1], [0], [0], [1], [0, 0, 1, 1], [], []>} : vector<1x64xf32>, vector<64x32xf32>, vector<1x32xf32> -> vector<1x32xf32>
    %236 = arith.addf %232, %235 : vector<1x32xf32>
    %237 = vector.extract_strided_slice %203 {offsets = [8, 0], sizes = [1, 64], strides = [1, 1]} : vector<16x128xf32> to vector<1x64xf32>
    %c512 = arith.constant 512 : index
    %c0_89 = arith.constant 0 : index
    %238 = vector.load %arg17[%c512, %c0_89] : memref<1024x32xf32, #tpu.memory_space<vmem>>, vector<64x32xf32>
    %cst_90 = arith.constant dense<0.000000e+00> : vector<1x32xf32>
    %239 = tpu.matmul %237, %238, %cst_90 {dimension_numbers = #tpu.dot_dimension_numbers<[1], [0], [0], [1], [0, 0, 1, 1], [], []>} : vector<1x64xf32>, vector<64x32xf32>, vector<1x32xf32> -> vector<1x32xf32>
    %240 = arith.addf %236, %239 : vector<1x32xf32>
    %241 = vector.extract_strided_slice %203 {offsets = [9, 0], sizes = [1, 64], strides = [1, 1]} : vector<16x128xf32> to vector<1x64xf32>
    %c576 = arith.constant 576 : index
    %c0_91 = arith.constant 0 : index
    %242 = vector.load %arg17[%c576, %c0_91] : memref<1024x32xf32, #tpu.memory_space<vmem>>, vector<64x32xf32>
    %cst_92 = arith.constant dense<0.000000e+00> : vector<1x32xf32>
    %243 = tpu.matmul %241, %242, %cst_92 {dimension_numbers = #tpu.dot_dimension_numbers<[1], [0], [0], [1], [0, 0, 1, 1], [], []>} : vector<1x64xf32>, vector<64x32xf32>, vector<1x32xf32> -> vector<1x32xf32>
    %244 = arith.addf %240, %243 : vector<1x32xf32>
    %245 = vector.extract_strided_slice %203 {offsets = [10, 0], sizes = [1, 64], strides = [1, 1]} : vector<16x128xf32> to vector<1x64xf32>
    %c640 = arith.constant 640 : index
    %c0_93 = arith.constant 0 : index
    %246 = vector.load %arg17[%c640, %c0_93] : memref<1024x32xf32, #tpu.memory_space<vmem>>, vector<64x32xf32>
    %cst_94 = arith.constant dense<0.000000e+00> : vector<1x32xf32>
    %247 = tpu.matmul %245, %246, %cst_94 {dimension_numbers = #tpu.dot_dimension_numbers<[1], [0], [0], [1], [0, 0, 1, 1], [], []>} : vector<1x64xf32>, vector<64x32xf32>, vector<1x32xf32> -> vector<1x32xf32>
    %248 = arith.addf %244, %247 : vector<1x32xf32>
    %249 = vector.extract_strided_slice %203 {offsets = [11, 0], sizes = [1, 64], strides = [1, 1]} : vector<16x128xf32> to vector<1x64xf32>
    %c704 = arith.constant 704 : index
    %c0_95 = arith.constant 0 : index
    %250 = vector.load %arg17[%c704, %c0_95] : memref<1024x32xf32, #tpu.memory_space<vmem>>, vector<64x32xf32>
    %cst_96 = arith.constant dense<0.000000e+00> : vector<1x32xf32>
    %251 = tpu.matmul %249, %250, %cst_96 {dimension_numbers = #tpu.dot_dimension_numbers<[1], [0], [0], [1], [0, 0, 1, 1], [], []>} : vector<1x64xf32>, vector<64x32xf32>, vector<1x32xf32> -> vector<1x32xf32>
    %252 = arith.addf %248, %251 : vector<1x32xf32>
    %253 = vector.extract_strided_slice %203 {offsets = [12, 0], sizes = [1, 64], strides = [1, 1]} : vector<16x128xf32> to vector<1x64xf32>
    %c768 = arith.constant 768 : index
    %c0_97 = arith.constant 0 : index
    %254 = vector.load %arg17[%c768, %c0_97] : memref<1024x32xf32, #tpu.memory_space<vmem>>, vector<64x32xf32>
    %cst_98 = arith.constant dense<0.000000e+00> : vector<1x32xf32>
    %255 = tpu.matmul %253, %254, %cst_98 {dimension_numbers = #tpu.dot_dimension_numbers<[1], [0], [0], [1], [0, 0, 1, 1], [], []>} : vector<1x64xf32>, vector<64x32xf32>, vector<1x32xf32> -> vector<1x32xf32>
    %256 = arith.addf %252, %255 : vector<1x32xf32>
    %257 = vector.extract_strided_slice %203 {offsets = [13, 0], sizes = [1, 64], strides = [1, 1]} : vector<16x128xf32> to vector<1x64xf32>
    %c832 = arith.constant 832 : index
    %c0_99 = arith.constant 0 : index
    %258 = vector.load %arg17[%c832, %c0_99] : memref<1024x32xf32, #tpu.memory_space<vmem>>, vector<64x32xf32>
    %cst_100 = arith.constant dense<0.000000e+00> : vector<1x32xf32>
    %259 = tpu.matmul %257, %258, %cst_100 {dimension_numbers = #tpu.dot_dimension_numbers<[1], [0], [0], [1], [0, 0, 1, 1], [], []>} : vector<1x64xf32>, vector<64x32xf32>, vector<1x32xf32> -> vector<1x32xf32>
    %260 = arith.addf %256, %259 : vector<1x32xf32>
    %261 = vector.extract_strided_slice %203 {offsets = [14, 0], sizes = [1, 64], strides = [1, 1]} : vector<16x128xf32> to vector<1x64xf32>
    %c896 = arith.constant 896 : index
    %c0_101 = arith.constant 0 : index
    %262 = vector.load %arg17[%c896, %c0_101] : memref<1024x32xf32, #tpu.memory_space<vmem>>, vector<64x32xf32>
    %cst_102 = arith.constant dense<0.000000e+00> : vector<1x32xf32>
    %263 = tpu.matmul %261, %262, %cst_102 {dimension_numbers = #tpu.dot_dimension_numbers<[1], [0], [0], [1], [0, 0, 1, 1], [], []>} : vector<1x64xf32>, vector<64x32xf32>, vector<1x32xf32> -> vector<1x32xf32>
    %264 = arith.addf %260, %263 : vector<1x32xf32>
    %265 = vector.extract_strided_slice %203 {offsets = [15, 0], sizes = [1, 64], strides = [1, 1]} : vector<16x128xf32> to vector<1x64xf32>
    %c960 = arith.constant 960 : index
    %c0_103 = arith.constant 0 : index
    %266 = vector.load %arg17[%c960, %c0_103] : memref<1024x32xf32, #tpu.memory_space<vmem>>, vector<64x32xf32>
    %cst_104 = arith.constant dense<0.000000e+00> : vector<1x32xf32>
    %267 = tpu.matmul %265, %266, %cst_104 {dimension_numbers = #tpu.dot_dimension_numbers<[1], [0], [0], [1], [0, 0, 1, 1], [], []>} : vector<1x64xf32>, vector<64x32xf32>, vector<1x32xf32> -> vector<1x32xf32>
    %268 = arith.addf %264, %267 : vector<1x32xf32>
    %c0_105 = arith.constant 0 : index
    %c0_106 = arith.constant 0 : index
    %269 = vector.load %arg18[%c0_105, %c0_106] : memref<1x32xf32, #tpu.memory_space<vmem>>, vector<1x32xf32>
    %270 = vector.extract_strided_slice %203 {offsets = [0, 64], sizes = [1, 64], strides = [1, 1]} : vector<16x128xf32> to vector<1x64xf32>
    %c0_107 = arith.constant 0 : index
    %c0_108 = arith.constant 0 : index
    %271 = vector.load %arg17[%c0_107, %c0_108] : memref<1024x32xf32, #tpu.memory_space<vmem>>, vector<64x32xf32>
    %cst_109 = arith.constant dense<0.000000e+00> : vector<1x32xf32>
    %272 = tpu.matmul %270, %271, %cst_109 {dimension_numbers = #tpu.dot_dimension_numbers<[1], [0], [0], [1], [0, 0, 1, 1], [], []>} : vector<1x64xf32>, vector<64x32xf32>, vector<1x32xf32> -> vector<1x32xf32>
    %273 = arith.addf %269, %272 : vector<1x32xf32>
    %274 = vector.extract_strided_slice %203 {offsets = [1, 64], sizes = [1, 64], strides = [1, 1]} : vector<16x128xf32> to vector<1x64xf32>
    %c64_110 = arith.constant 64 : index
    %c0_111 = arith.constant 0 : index
    %275 = vector.load %arg17[%c64_110, %c0_111] : memref<1024x32xf32, #tpu.memory_space<vmem>>, vector<64x32xf32>
    %cst_112 = arith.constant dense<0.000000e+00> : vector<1x32xf32>
    %276 = tpu.matmul %274, %275, %cst_112 {dimension_numbers = #tpu.dot_dimension_numbers<[1], [0], [0], [1], [0, 0, 1, 1], [], []>} : vector<1x64xf32>, vector<64x32xf32>, vector<1x32xf32> -> vector<1x32xf32>
    %277 = arith.addf %273, %276 : vector<1x32xf32>
    %278 = vector.extract_strided_slice %203 {offsets = [2, 64], sizes = [1, 64], strides = [1, 1]} : vector<16x128xf32> to vector<1x64xf32>
    %c128_113 = arith.constant 128 : index
    %c0_114 = arith.constant 0 : index
    %279 = vector.load %arg17[%c128_113, %c0_114] : memref<1024x32xf32, #tpu.memory_space<vmem>>, vector<64x32xf32>
    %cst_115 = arith.constant dense<0.000000e+00> : vector<1x32xf32>
    %280 = tpu.matmul %278, %279, %cst_115 {dimension_numbers = #tpu.dot_dimension_numbers<[1], [0], [0], [1], [0, 0, 1, 1], [], []>} : vector<1x64xf32>, vector<64x32xf32>, vector<1x32xf32> -> vector<1x32xf32>
    %281 = arith.addf %277, %280 : vector<1x32xf32>
    %282 = vector.extract_strided_slice %203 {offsets = [3, 64], sizes = [1, 64], strides = [1, 1]} : vector<16x128xf32> to vector<1x64xf32>
    %c192_116 = arith.constant 192 : index
    %c0_117 = arith.constant 0 : index
    %283 = vector.load %arg17[%c192_116, %c0_117] : memref<1024x32xf32, #tpu.memory_space<vmem>>, vector<64x32xf32>
    %cst_118 = arith.constant dense<0.000000e+00> : vector<1x32xf32>
    %284 = tpu.matmul %282, %283, %cst_118 {dimension_numbers = #tpu.dot_dimension_numbers<[1], [0], [0], [1], [0, 0, 1, 1], [], []>} : vector<1x64xf32>, vector<64x32xf32>, vector<1x32xf32> -> vector<1x32xf32>
    %285 = arith.addf %281, %284 : vector<1x32xf32>
    %286 = vector.extract_strided_slice %203 {offsets = [4, 64], sizes = [1, 64], strides = [1, 1]} : vector<16x128xf32> to vector<1x64xf32>
    %c256_119 = arith.constant 256 : index
    %c0_120 = arith.constant 0 : index
    %287 = vector.load %arg17[%c256_119, %c0_120] : memref<1024x32xf32, #tpu.memory_space<vmem>>, vector<64x32xf32>
    %cst_121 = arith.constant dense<0.000000e+00> : vector<1x32xf32>
    %288 = tpu.matmul %286, %287, %cst_121 {dimension_numbers = #tpu.dot_dimension_numbers<[1], [0], [0], [1], [0, 0, 1, 1], [], []>} : vector<1x64xf32>, vector<64x32xf32>, vector<1x32xf32> -> vector<1x32xf32>
    %289 = arith.addf %285, %288 : vector<1x32xf32>
    %290 = vector.extract_strided_slice %203 {offsets = [5, 64], sizes = [1, 64], strides = [1, 1]} : vector<16x128xf32> to vector<1x64xf32>
    %c320_122 = arith.constant 320 : index
    %c0_123 = arith.constant 0 : index
    %291 = vector.load %arg17[%c320_122, %c0_123] : memref<1024x32xf32, #tpu.memory_space<vmem>>, vector<64x32xf32>
    %cst_124 = arith.constant dense<0.000000e+00> : vector<1x32xf32>
    %292 = tpu.matmul %290, %291, %cst_124 {dimension_numbers = #tpu.dot_dimension_numbers<[1], [0], [0], [1], [0, 0, 1, 1], [], []>} : vector<1x64xf32>, vector<64x32xf32>, vector<1x32xf32> -> vector<1x32xf32>
    %293 = arith.addf %289, %292 : vector<1x32xf32>
    %294 = vector.extract_strided_slice %203 {offsets = [6, 64], sizes = [1, 64], strides = [1, 1]} : vector<16x128xf32> to vector<1x64xf32>
    %c384_125 = arith.constant 384 : index
    %c0_126 = arith.constant 0 : index
    %295 = vector.load %arg17[%c384_125, %c0_126] : memref<1024x32xf32, #tpu.memory_space<vmem>>, vector<64x32xf32>
    %cst_127 = arith.constant dense<0.000000e+00> : vector<1x32xf32>
    %296 = tpu.matmul %294, %295, %cst_127 {dimension_numbers = #tpu.dot_dimension_numbers<[1], [0], [0], [1], [0, 0, 1, 1], [], []>} : vector<1x64xf32>, vector<64x32xf32>, vector<1x32xf32> -> vector<1x32xf32>
    %297 = arith.addf %293, %296 : vector<1x32xf32>
    %298 = vector.extract_strided_slice %203 {offsets = [7, 64], sizes = [1, 64], strides = [1, 1]} : vector<16x128xf32> to vector<1x64xf32>
    %c448_128 = arith.constant 448 : index
    %c0_129 = arith.constant 0 : index
    %299 = vector.load %arg17[%c448_128, %c0_129] : memref<1024x32xf32, #tpu.memory_space<vmem>>, vector<64x32xf32>
    %cst_130 = arith.constant dense<0.000000e+00> : vector<1x32xf32>
    %300 = tpu.matmul %298, %299, %cst_130 {dimension_numbers = #tpu.dot_dimension_numbers<[1], [0], [0], [1], [0, 0, 1, 1], [], []>} : vector<1x64xf32>, vector<64x32xf32>, vector<1x32xf32> -> vector<1x32xf32>
    %301 = arith.addf %297, %300 : vector<1x32xf32>
    %302 = vector.extract_strided_slice %203 {offsets = [8, 64], sizes = [1, 64], strides = [1, 1]} : vector<16x128xf32> to vector<1x64xf32>
    %c512_131 = arith.constant 512 : index
    %c0_132 = arith.constant 0 : index
    %303 = vector.load %arg17[%c512_131, %c0_132] : memref<1024x32xf32, #tpu.memory_space<vmem>>, vector<64x32xf32>
    %cst_133 = arith.constant dense<0.000000e+00> : vector<1x32xf32>
    %304 = tpu.matmul %302, %303, %cst_133 {dimension_numbers = #tpu.dot_dimension_numbers<[1], [0], [0], [1], [0, 0, 1, 1], [], []>} : vector<1x64xf32>, vector<64x32xf32>, vector<1x32xf32> -> vector<1x32xf32>
    %305 = arith.addf %301, %304 : vector<1x32xf32>
    %306 = vector.extract_strided_slice %203 {offsets = [9, 64], sizes = [1, 64], strides = [1, 1]} : vector<16x128xf32> to vector<1x64xf32>
    %c576_134 = arith.constant 576 : index
    %c0_135 = arith.constant 0 : index
    %307 = vector.load %arg17[%c576_134, %c0_135] : memref<1024x32xf32, #tpu.memory_space<vmem>>, vector<64x32xf32>
    %cst_136 = arith.constant dense<0.000000e+00> : vector<1x32xf32>
    %308 = tpu.matmul %306, %307, %cst_136 {dimension_numbers = #tpu.dot_dimension_numbers<[1], [0], [0], [1], [0, 0, 1, 1], [], []>} : vector<1x64xf32>, vector<64x32xf32>, vector<1x32xf32> -> vector<1x32xf32>
    %309 = arith.addf %305, %308 : vector<1x32xf32>
    %310 = vector.extract_strided_slice %203 {offsets = [10, 64], sizes = [1, 64], strides = [1, 1]} : vector<16x128xf32> to vector<1x64xf32>
    %c640_137 = arith.constant 640 : index
    %c0_138 = arith.constant 0 : index
    %311 = vector.load %arg17[%c640_137, %c0_138] : memref<1024x32xf32, #tpu.memory_space<vmem>>, vector<64x32xf32>
    %cst_139 = arith.constant dense<0.000000e+00> : vector<1x32xf32>
    %312 = tpu.matmul %310, %311, %cst_139 {dimension_numbers = #tpu.dot_dimension_numbers<[1], [0], [0], [1], [0, 0, 1, 1], [], []>} : vector<1x64xf32>, vector<64x32xf32>, vector<1x32xf32> -> vector<1x32xf32>
    %313 = arith.addf %309, %312 : vector<1x32xf32>
    %314 = vector.extract_strided_slice %203 {offsets = [11, 64], sizes = [1, 64], strides = [1, 1]} : vector<16x128xf32> to vector<1x64xf32>
    %c704_140 = arith.constant 704 : index
    %c0_141 = arith.constant 0 : index
    %315 = vector.load %arg17[%c704_140, %c0_141] : memref<1024x32xf32, #tpu.memory_space<vmem>>, vector<64x32xf32>
    %cst_142 = arith.constant dense<0.000000e+00> : vector<1x32xf32>
    %316 = tpu.matmul %314, %315, %cst_142 {dimension_numbers = #tpu.dot_dimension_numbers<[1], [0], [0], [1], [0, 0, 1, 1], [], []>} : vector<1x64xf32>, vector<64x32xf32>, vector<1x32xf32> -> vector<1x32xf32>
    %317 = arith.addf %313, %316 : vector<1x32xf32>
    %318 = vector.extract_strided_slice %203 {offsets = [12, 64], sizes = [1, 64], strides = [1, 1]} : vector<16x128xf32> to vector<1x64xf32>
    %c768_143 = arith.constant 768 : index
    %c0_144 = arith.constant 0 : index
    %319 = vector.load %arg17[%c768_143, %c0_144] : memref<1024x32xf32, #tpu.memory_space<vmem>>, vector<64x32xf32>
    %cst_145 = arith.constant dense<0.000000e+00> : vector<1x32xf32>
    %320 = tpu.matmul %318, %319, %cst_145 {dimension_numbers = #tpu.dot_dimension_numbers<[1], [0], [0], [1], [0, 0, 1, 1], [], []>} : vector<1x64xf32>, vector<64x32xf32>, vector<1x32xf32> -> vector<1x32xf32>
    %321 = arith.addf %317, %320 : vector<1x32xf32>
    %322 = vector.extract_strided_slice %203 {offsets = [13, 64], sizes = [1, 64], strides = [1, 1]} : vector<16x128xf32> to vector<1x64xf32>
    %c832_146 = arith.constant 832 : index
    %c0_147 = arith.constant 0 : index
    %323 = vector.load %arg17[%c832_146, %c0_147] : memref<1024x32xf32, #tpu.memory_space<vmem>>, vector<64x32xf32>
    %cst_148 = arith.constant dense<0.000000e+00> : vector<1x32xf32>
    %324 = tpu.matmul %322, %323, %cst_148 {dimension_numbers = #tpu.dot_dimension_numbers<[1], [0], [0], [1], [0, 0, 1, 1], [], []>} : vector<1x64xf32>, vector<64x32xf32>, vector<1x32xf32> -> vector<1x32xf32>
    %325 = arith.addf %321, %324 : vector<1x32xf32>
    %326 = vector.extract_strided_slice %203 {offsets = [14, 64], sizes = [1, 64], strides = [1, 1]} : vector<16x128xf32> to vector<1x64xf32>
    %c896_149 = arith.constant 896 : index
    %c0_150 = arith.constant 0 : index
    %327 = vector.load %arg17[%c896_149, %c0_150] : memref<1024x32xf32, #tpu.memory_space<vmem>>, vector<64x32xf32>
    %cst_151 = arith.constant dense<0.000000e+00> : vector<1x32xf32>
    %328 = tpu.matmul %326, %327, %cst_151 {dimension_numbers = #tpu.dot_dimension_numbers<[1], [0], [0], [1], [0, 0, 1, 1], [], []>} : vector<1x64xf32>, vector<64x32xf32>, vector<1x32xf32> -> vector<1x32xf32>
    %329 = arith.addf %325, %328 : vector<1x32xf32>
    %330 = vector.extract_strided_slice %203 {offsets = [15, 64], sizes = [1, 64], strides = [1, 1]} : vector<16x128xf32> to vector<1x64xf32>
    %c960_152 = arith.constant 960 : index
    %c0_153 = arith.constant 0 : index
    %331 = vector.load %arg17[%c960_152, %c0_153] : memref<1024x32xf32, #tpu.memory_space<vmem>>, vector<64x32xf32>
    %cst_154 = arith.constant dense<0.000000e+00> : vector<1x32xf32>
    %332 = tpu.matmul %330, %331, %cst_154 {dimension_numbers = #tpu.dot_dimension_numbers<[1], [0], [0], [1], [0, 0, 1, 1], [], []>} : vector<1x64xf32>, vector<64x32xf32>, vector<1x32xf32> -> vector<1x32xf32>
    %333 = arith.addf %329, %332 : vector<1x32xf32>
    %334 = tpu.concatenate %268, %333 in 0 : vector<1x32xf32>, vector<1x32xf32> -> vector<2x32xf32>
    %cst_155 = arith.constant 0.000000e+00 : f32
    %335 = vector.broadcast %cst_155 : f32 to vector<2x32xf32>
    %336 = arith.maximumf %334, %335 : vector<2x32xf32>
    %c0_156 = arith.constant 0 : index
    %c0_157 = arith.constant 0 : index
    %337 = vector.load %arg19[%c0_156, %c0_157] : memref<32x6xf32, #tpu.memory_space<vmem>>, vector<32x6xf32>
    %cst_158 = arith.constant dense<0.000000e+00> : vector<2x6xf32>
    %338 = tpu.matmul %336, %337, %cst_158 {dimension_numbers = #tpu.dot_dimension_numbers<[1], [0], [0], [1], [0, 0, 1, 1], [], []>} : vector<2x32xf32>, vector<32x6xf32>, vector<2x6xf32> -> vector<2x6xf32>
    %c0_159 = arith.constant 0 : index
    %c0_160 = arith.constant 0 : index
    %339 = vector.load %arg20[%c0_159, %c0_160] : memref<1x6xf32, #tpu.memory_space<vmem>>, vector<1x6xf32>
    %340 = vector.broadcast %339 : vector<1x6xf32> to vector<2x6xf32>
    %341 = arith.addf %338, %340 : vector<2x6xf32>
    %c0_161 = arith.constant 0 : index
    %c0_162 = arith.constant 0 : index
    %342 = vector.load %arg21[%c0_161, %c0_162] : memref<2x6xf32, #tpu.memory_space<vmem>>, vector<2x6xf32>
    tpu.vector_store %arg21[%c0_161, %c0_162], %341 {strides = array<i32>} : memref<2x6xf32, #tpu.memory_space<vmem>>, vector<2x6xf32>,
    return
  }
}

</mosaic_0001>

<llo_original>
// kernel: cnn_forward.1
$region0: #{cnn_forward.1}
  #allocation0 [shape = 'u32[]', space=smem, size = 0x4, offset = 0x4, fixed_abs, tag = 'smem constant byte address 0x4 - core index']
  #allocation1 [shape = 'u32[144,128]{1,0:T(1,128)}', space=vmem, size = 0x12000, scoped, tag = 'internal scratch']
  %s0 = inlined_call_operand.vmem [shape: f32[8,686], index: 0, kind: input, shape index: {}]
  %s1 = inlined_call_operand.vmem [shape: f32[8,72], index: 1, kind: input, shape index: {}]
  %s2 = inlined_call_operand.vmem [shape: f32[8,1], index: 2, kind: input, shape index: {}]
  %s3 = inlined_call_operand.vmem [shape: f32[8,1], index: 3, kind: input, shape index: {}]
  %s4 = inlined_call_operand.vmem [shape: f32[8,72], index: 4, kind: input, shape index: {}]
  %s5 = inlined_call_operand.vmem [shape: f32[8,1], index: 5, kind: input, shape index: {}]
  %s6 = inlined_call_operand.vmem [shape: f32[8,1], index: 6, kind: input, shape index: {}]
  %s7 = inlined_call_operand.vmem [shape: f32[16,72], index: 7, kind: input, shape index: {}]
  %s8 = inlined_call_operand.vmem [shape: f32[16,1], index: 8, kind: input, shape index: {}]
  %s9 = inlined_call_operand.vmem [shape: f32[16,1], index: 9, kind: input, shape index: {}]
  %s10 = inlined_call_operand.vmem [shape: f32[16,144], index: 10, kind: input, shape index: {}]
  %s11 = inlined_call_operand.vmem [shape: f32[16,1], index: 11, kind: input, shape index: {}]
  %s12 = inlined_call_operand.vmem [shape: f32[16,1], index: 12, kind: input, shape index: {}]
  %s13 = inlined_call_operand.vmem [shape: f32[1,648], index: 13, kind: input, shape index: {}]
  %s14 = inlined_call_operand.vmem [shape: f32[1,200], index: 14, kind: input, shape index: {}]
  %s15 = inlined_call_operand.vmem [shape: s32[1,200], index: 15, kind: input, shape index: {}]
  %s16 = inlined_call_operand.vmem [shape: s32[1,128], index: 16, kind: input, shape index: {}]
  %s17 = inlined_call_operand.vmem [shape: f32[1024,32], index: 17, kind: input, shape index: {}]
  %s18 = inlined_call_operand.vmem [shape: f32[1,32], index: 18, kind: input, shape index: {}]
  %s19 = inlined_call_operand.vmem [shape: f32[32,6], index: 19, kind: input, shape index: {}]
  %s20 = inlined_call_operand.vmem [shape: f32[1,6], index: 20, kind: input, shape index: {}]
  %s21 = inlined_call_operand.hbm [shape: f32[2,6], index: 21, kind: output, shape index: {}]
  %s22 = sld [smem:[#allocation0]]
  $region94: #{cnn_forward.1} parent=0
    _
  %s24 = ssub.s32 1, %s22
  %s25 = scalar_select 0, %s24, %s22
  $region1: #{cnn_forward.1} parent=0
    #allocation2 [shape = 'u8[1024]{0}', space=vmem, size = 0x400, scoped, tag = 'output window, operand 0, single buffered']
    #allocation3 [shape = 's32[1]{0}', space=sflag, size = 0x4, scoped, tag = 'scoped memory for cnn_forward.1']
    %26 = vsyncpa [#allocation3], 0
    // Predicated region
    $region2: #{cnn_forward.1} parent=1 // pred_check
      _
    $region3: #{cnn_forward.1} parent=1 // pred_check_branch
      %28 = sbr.rel (0) target = $region5
    $region4: #{cnn_forward.1} parent=1 // pred_region
      _
    $region5: #{cnn_forward.1} parent=1 // pred_fallthru
      _
    // Predicated region
    $region6: #{cnn_forward.1} parent=1 // pred_check
      _
    $region7: #{cnn_forward.1} parent=1 // pred_check_branch
      %30 = sbr.rel (0) target = $region9
    $region8: #{cnn_forward.1} parent=1 // pred_region
      _
    $region9: #{cnn_forward.1} parent=1 // pred_fallthru
      _
    // Predicated region
    $region10: #{cnn_forward.1} parent=1 // pred_check
      _
    $region11: #{cnn_forward.1} parent=1 // pred_check_branch
      %32 = sbr.rel (0) target = $region13
    $region12: #{cnn_forward.1} parent=1 // pred_region
      _
    $region13: #{cnn_forward.1} parent=1 // pred_fallthru
      _
    // Predicated region
    $region14: #{cnn_forward.1} parent=1 // pred_check
      _
    $region15: #{cnn_forward.1} parent=1 // pred_check_branch
      %34 = sbr.rel (0) target = $region17
    $region16: #{cnn_forward.1} parent=1 // pred_region
      _
    $region17: #{cnn_forward.1} parent=1 // pred_fallthru
      _
    // Predicated region
    $region18: #{cnn_forward.1} parent=1 // pred_check
      _
    $region19: #{cnn_forward.1} parent=1 // pred_check_branch
      %36 = sbr.rel (0) target = $region21
    $region20: #{cnn_forward.1} parent=1 // pred_region
      _
    $region21: #{cnn_forward.1} parent=1 // pred_fallthru
      _
    // Predicated region
    $region22: #{cnn_forward.1} parent=1 // pred_check
      _
    $region23: #{cnn_forward.1} parent=1 // pred_check_branch
      %38 = sbr.rel (0) target = $region25
    $region24: #{cnn_forward.1} parent=1 // pred_region
      _
    $region25: #{cnn_forward.1} parent=1 // pred_fallthru
      _
    // Predicated region
    $region26: #{cnn_forward.1} parent=1 // pred_check
      _
    $region27: #{cnn_forward.1} parent=1 // pred_check_branch
      %40 = sbr.rel (0) target = $region29
    $region28: #{cnn_forward.1} parent=1 // pred_region
      _
    $region29: #{cnn_forward.1} parent=1 // pred_fallthru
      _
    // Predicated region
    $region30: #{cnn_forward.1} parent=1 // pred_check
      _
    $region31: #{cnn_forward.1} parent=1 // pred_check_branch
      %42 = sbr.rel (0) target = $region33
    $region32: #{cnn_forward.1} parent=1 // pred_region
      _
    $region33: #{cnn_forward.1} parent=1 // pred_fallthru
      _
    // Predicated region
    $region34: #{cnn_forward.1} parent=1 // pred_check
      _
    $region35: #{cnn_forward.1} parent=1 // pred_check_branch
      %44 = sbr.rel (0) target = $region37
    $region36: #{cnn_forward.1} parent=1 // pred_region
      _
    $region37: #{cnn_forward.1} parent=1 // pred_fallthru
      _
    // Predicated region
    $region38: #{cnn_forward.1} parent=1 // pred_check
      _
    $region39: #{cnn_forward.1} parent=1 // pred_check_branch
      %46 = sbr.rel (0) target = $region41
    $region40: #{cnn_forward.1} parent=1 // pred_region
      _
    $region41: #{cnn_forward.1} parent=1 // pred_fallthru
      _
    // Predicated region
    $region42: #{cnn_forward.1} parent=1 // pred_check
      _
    $region43: #{cnn_forward.1} parent=1 // pred_check_branch
      %48 = sbr.rel (0) target = $region45
    $region44: #{cnn_forward.1} parent=1 // pred_region
      _
    $region45: #{cnn_forward.1} parent=1 // pred_fallthru
      _
    // Predicated region
    $region46: #{cnn_forward.1} parent=1 // pred_check
      _
    $region47: #{cnn_forward.1} parent=1 // pred_check_branch
      %50 = sbr.rel (0) target = $region49
    $region48: #{cnn_forward.1} parent=1 // pred_region
      _
    $region49: #{cnn_forward.1} parent=1 // pred_fallthru
      _
    // Predicated region
    $region50: #{cnn_forward.1} parent=1 // pred_check
      _
    $region51: #{cnn_forward.1} parent=1 // pred_check_branch
      %52 = sbr.rel (0) target = $region53
    $region52: #{cnn_forward.1} parent=1 // pred_region
      _
    $region53: #{cnn_forward.1} parent=1 // pred_fallthru
      _
    // Predicated region
    $region54: #{cnn_forward.1} parent=1 // pred_check
      _
    $region55: #{cnn_forward.1} parent=1 // pred_check_branch
      %54 = sbr.rel (0) target = $region57
    $region56: #{cnn_forward.1} parent=1 // pred_region
      _
    $region57: #{cnn_forward.1} parent=1 // pred_fallthru
      _
    // Predicated region
    $region58: #{cnn_forward.1} parent=1 // pred_check
      _
    $region59: #{cnn_forward.1} parent=1 // pred_check_branch
      %56 = sbr.rel (0) target = $region61
    $region60: #{cnn_forward.1} parent=1 // pred_region
      _
    $region61: #{cnn_forward.1} parent=1 // pred_fallthru
      _
    // Predicated region
    $region62: #{cnn_forward.1} parent=1 // pred_check
      _
    $region63: #{cnn_forward.1} parent=1 // pred_check_branch
      %58 = sbr.rel (0) target = $region65
    $region64: #{cnn_forward.1} parent=1 // pred_region
      _
    $region65: #{cnn_forward.1} parent=1 // pred_fallthru
      _
    // Predicated region
    $region66: #{cnn_forward.1} parent=1 // pred_check
      _
    $region67: #{cnn_forward.1} parent=1 // pred_check_branch
      %60 = sbr.rel (0) target = $region69
    $region68: #{cnn_forward.1} parent=1 // pred_region
      _
    $region69: #{cnn_forward.1} parent=1 // pred_fallthru
      _
    // Predicated region
    $region70: #{cnn_forward.1} parent=1 // pred_check
      _
    $region71: #{cnn_forward.1} parent=1 // pred_check_branch
      %62 = sbr.rel (0) target = $region73
    $region72: #{cnn_forward.1} parent=1 // pred_region
      _
    $region73: #{cnn_forward.1} parent=1 // pred_fallthru
      _
    // Predicated region
    $region74: #{cnn_forward.1} parent=1 // pred_check
      _
    $region75: #{cnn_forward.1} parent=1 // pred_check_branch
      %64 = sbr.rel (0) target = $region77
    $region76: #{cnn_forward.1} parent=1 // pred_region
      _
    $region77: #{cnn_forward.1} parent=1 // pred_fallthru
      _
    // Predicated region
    $region78: #{cnn_forward.1} parent=1 // pred_check
      _
    $region79: #{cnn_forward.1} parent=1 // pred_check_branch
      %66 = sbr.rel (0) target = $region81
    $region80: #{cnn_forward.1} parent=1 // pred_region
      _
    $region81: #{cnn_forward.1} parent=1 // pred_fallthru
      _
    // Predicated region
    $region82: #{cnn_forward.1} parent=1 // pred_check
      _
    $region83: #{cnn_forward.1} parent=1 // pred_check_branch
      %68 = sbr.rel (0) target = $region85
    $region84: #{cnn_forward.1} parent=1 // pred_region
      _
    $region85: #{cnn_forward.1} parent=1 // pred_fallthru
      _
    %v69 = vld [vmem:[%s0] sm:$0xff]
    %v70 = vld [vmem:[%s0 + $0x8] sm:$0xff]
    %v71 = vld [vmem:[%s0 + $0x10] sm:$0xff]
    %v72 = vld [vmem:[%s0 + $0x18] sm:$0xff]
    %v73 = vld [vmem:[%s0 + $0x20] sm:$0xff]
    %v74 = vld [vmem:[%s0 + $0x28] sm:$0xff]
    %v75 = vld [vmem:[%s13] sm:$0x3f]
    %82 = vrot.lane.b32.xlu0 %v69, 127
    %v83 = vpop.permute.xlu0 %82
    %84 = vrot.lane.b32.xlu0 %v70, 127
    %v85 = vpop.permute.xlu0 %84
    %86 = vrot.lane.b32.xlu0 %v71, 127
    %v87 = vpop.permute.xlu0 %86
    %88 = vrot.lane.b32.xlu0 %v72, 127
    %v89 = vpop.permute.xlu0 %88
    %90 = vrot.lane.b32.xlu0 %v73, 127
    %v91 = vpop.permute.xlu0 %90
    %92 = vrot.lane.b32.xlu0 %v74, 127
    %v93 = vpop.permute.xlu0 %92
    %vm94 = vcmask 1039360
    %v95 = vsel %vm94, %v83, %v85
    %v96 = vsel %vm94, %v85, %v87
    %v97 = vsel %vm94, %v87, %v89
    %v98 = vsel %vm94, %v89, %v91
    %v99 = vsel %vm94, %v91, %v93
    %106 = vrot.lane.b32.xlu0 %v69, 126
    %v107 = vpop.permute.xlu0 %106
    %108 = vrot.lane.b32.xlu0 %v70, 126
    %v109 = vpop.permute.xlu0 %108
    %110 = vrot.lane.b32.xlu0 %v71, 126
    %v111 = vpop.permute.xlu0 %110
    %112 = vrot.lane.b32.xlu0 %v72, 126
    %v113 = vpop.permute.xlu0 %112
    %114 = vrot.lane.b32.xlu0 %v73, 126
    %v115 = vpop.permute.xlu0 %114
    %116 = vrot.lane.b32.xlu0 %v74, 126
    %v117 = vpop.permute.xlu0 %116
    %vm118 = vcmask 1031168
    %v119 = vsel %vm118, %v107, %v109
    %v120 = vsel %vm118, %v109, %v111
    %v121 = vsel %vm118, %v111, %v113
    %v122 = vsel %vm118, %v113, %v115
    %v123 = vsel %vm118, %v115, %v117
    %130 = vrot.lane.b32.xlu0 %v69, 110
    %v131 = vpop.permute.xlu0 %130
    %132 = vrot.lane.b32.xlu0 %v70, 110
    %v133 = vpop.permute.xlu0 %132
    %134 = vrot.lane.b32.xlu0 %v71, 110
    %v135 = vpop.permute.xlu0 %134
    %136 = vrot.lane.b32.xlu0 %v72, 110
    %v137 = vpop.permute.xlu0 %136
    %138 = vrot.lane.b32.xlu0 %v73, 110
    %v139 = vpop.permute.xlu0 %138
    %140 = vrot.lane.b32.xlu0 %v74, 110
    %v141 = vpop.permute.xlu0 %140
    %vm142 = vcmask 900096
    %v143 = vsel %vm142, %v131, %v133
    %v144 = vsel %vm142, %v133, %v135
    %v145 = vsel %vm142, %v135, %v137
    %v146 = vsel %vm142, %v137, %v139
    %v147 = vsel %vm142, %v139, %v141
    %154 = vrot.lane.b32.xlu0 %v69, 109
    %v155 = vpop.permute.xlu0 %154
    %156 = vrot.lane.b32.xlu0 %v70, 109
    %v157 = vpop.permute.xlu0 %156
    %158 = vrot.lane.b32.xlu0 %v71, 109
    %v159 = vpop.permute.xlu0 %158
    %160 = vrot.lane.b32.xlu0 %v72, 109
    %v161 = vpop.permute.xlu0 %160
    %162 = vrot.lane.b32.xlu0 %v73, 109
    %v163 = vpop.permute.xlu0 %162
    %164 = vrot.lane.b32.xlu0 %v74, 109
    %v165 = vpop.permute.xlu0 %164
    %vm166 = vcmask 891904
    %v167 = vsel %vm166, %v155, %v157
    %v168 = vsel %vm166, %v157, %v159
    %v169 = vsel %vm166, %v159, %v161
    %v170 = vsel %vm166, %v161, %v163
    %v171 = vsel %vm166, %v163, %v165
    %178 = vrot.lane.b32.xlu0 %v69, 108
    %v179 = vpop.permute.xlu0 %178
    %180 = vrot.lane.b32.xlu0 %v70, 108
    %v181 = vpop.permute.xlu0 %180
    %182 = vrot.lane.b32.xlu0 %v71, 108
    %v183 = vpop.permute.xlu0 %182
    %184 = vrot.lane.b32.xlu0 %v72, 108
    %v185 = vpop.permute.xlu0 %184
    %186 = vrot.lane.b32.xlu0 %v73, 108
    %v187 = vpop.permute.xlu0 %186
    %188 = vrot.lane.b32.xlu0 %v74, 108
    %v189 = vpop.permute.xlu0 %188
    %vm190 = vcmask 883712
    %v191 = vsel %vm190, %v179, %v181
    %v192 = vsel %vm190, %v181, %v183
    %v193 = vsel %vm190, %v183, %v185
    %v194 = vsel %vm190, %v185, %v187
    %v195 = vsel %vm190, %v187, %v189
    %202 = vrot.lane.b32.xlu0 %v69, 92
    %v203 = vpop.permute.xlu0 %202
    %204 = vrot.lane.b32.xlu0 %v70, 92
    %v205 = vpop.permute.xlu0 %204
    %206 = vrot.lane.b32.xlu0 %v71, 92
    %v207 = vpop.permute.xlu0 %206
    %208 = vrot.lane.b32.xlu0 %v72, 92
    %v209 = vpop.permute.xlu0 %208
    %210 = vrot.lane.b32.xlu0 %v73, 92
    %v211 = vpop.permute.xlu0 %210
    %212 = vrot.lane.b32.xlu0 %v74, 92
    %v213 = vpop.permute.xlu0 %212
    %vm214 = vcmask 752640
    %v215 = vsel %vm214, %v203, %v205
    %v216 = vsel %vm214, %v205, %v207
    %v217 = vsel %vm214, %v207, %v209
    %v218 = vsel %vm214, %v209, %v211
    %v219 = vsel %vm214, %v211, %v213
    %226 = vrot.lane.b32.xlu0 %v69, 91
    %v227 = vpop.permute.xlu0 %226
    %228 = vrot.lane.b32.xlu0 %v70, 91
    %v229 = vpop.permute.xlu0 %228
    %230 = vrot.lane.b32.xlu0 %v71, 91
    %v231 = vpop.permute.xlu0 %230
    %232 = vrot.lane.b32.xlu0 %v72, 91
    %v233 = vpop.permute.xlu0 %232
    %234 = vrot.lane.b32.xlu0 %v73, 91
    %v235 = vpop.permute.xlu0 %234
    %236 = vrot.lane.b32.xlu0 %v74, 91
    %v237 = vpop.permute.xlu0 %236
    %vm238 = vcmask 744448
    %v239 = vsel %vm238, %v227, %v229
    %v240 = vsel %vm238, %v229, %v231
    %v241 = vsel %vm238, %v231, %v233
    %v242 = vsel %vm238, %v233, %v235
    %v243 = vsel %vm238, %v235, %v237
    %250 = vrot.lane.b32.xlu0 %v69, 90
    %v251 = vpop.permute.xlu0 %250
    %252 = vrot.lane.b32.xlu0 %v70, 90
    %v253 = vpop.permute.xlu0 %252
    %254 = vrot.lane.b32.xlu0 %v71, 90
    %v255 = vpop.permute.xlu0 %254
    %256 = vrot.lane.b32.xlu0 %v72, 90
    %v257 = vpop.permute.xlu0 %256
    %258 = vrot.lane.b32.xlu0 %v73, 90
    %v259 = vpop.permute.xlu0 %258
    %260 = vrot.lane.b32.xlu0 %v74, 90
    %v261 = vpop.permute.xlu0 %260
    %vm262 = vcmask 736256
    %v263 = vsel %vm262, %v251, %v253
    %v264 = vsel %vm262, %v253, %v255
    %v265 = vsel %vm262, %v255, %v257
    %v266 = vsel %vm262, %v257, %v259
    %v267 = vsel %vm262, %v259, %v261
    %v274 = vld [vmem:[%s1] sm:$0xff]
    %vm275 = vcmask 588800
    %v277 = vsel %vm275, %v274, 0
    %279 = vmatprep.subr.mxu0 0.0
    %280 = vmatpush1.msra.mxu0 0.0
    %281 = vmatprep.subr.mxu0 0.0
    %282 = vmatpush1.msra.mxu0 0.0
    %283 = vmatprep.subr.mxu0 0.0
    %284 = vmatpush1.msra.mxu0 0.0
    %285 = vmatprep.subr.mxu0 0.0
    %286 = vmatpush1.msra.mxu0 0.0
    %287 = vmatprep.subr.mxu0 0.0
    %288 = vmatpush1.msra.mxu0 0.0
    %289 = vmatprep.subr.mxu0 0.0
    %290 = vmatpush1.msra.mxu0 0.0
    %291 = vmatprep.subr.mxu0 0.0
    %292 = vmatpush1.msra.mxu0 0.0
    %293 = vmatprep.subr.mxu0 %v264
    %294 = vmatpush1.msra.mxu0 %v263
    %295 = vmatprep.subr.mxu0 %v240
    %296 = vmatpush1.msra.mxu0 %v239
    %297 = vmatprep.subr.mxu0 %v216
    %298 = vmatpush1.msra.mxu0 %v215
    %299 = vmatprep.subr.mxu0 %v192
    %300 = vmatpush1.msra.mxu0 %v191
    %301 = vmatprep.subr.mxu0 %v168
    %302 = vmatpush1.msra.mxu0 %v167
    %303 = vmatprep.subr.mxu0 %v144
    %304 = vmatpush1.msra.mxu0 %v143
    %305 = vmatprep.subr.mxu0 %v120
    %306 = vmatpush1.msra.mxu0 %v119
    %307 = vmatprep.subr.mxu0 %v96
    %308 = vmatpush1.msra.mxu0 %v95
    %309 = vmatprep.subr.mxu0 %v70
    %310 = vmatpush1.msra.mxu0 %v69
    %311 = vmatprep.subr.mxu0 0.0
    %312 = vmatpush2.msra.mxu0 0.0
    %313 = vmatprep.subr.mxu0 0.0
    %314 = vmatpush2.msra.mxu0 0.0
    %315 = vmatprep.subr.mxu0 0.0
    %316 = vmatpush2.msra.mxu0 0.0
    %317 = vmatprep.subr.mxu0 0.0
    %318 = vmatpush2.msra.mxu0 0.0
    %319 = vmatprep.subr.mxu0 0.0
    %320 = vmatpush2.msra.mxu0 0.0
    %321 = vmatprep.subr.mxu0 0.0
    %322 = vmatpush2.msra.mxu0 0.0
    %323 = vmatprep.subr.mxu0 0.0
    %324 = vmatpush2.msra.mxu0 0.0
    %325 = vmatprep.subr.mxu0 0.0
    %326 = vmatpush2.msra.mxu0 0.0
    %327 = vmatprep.subr.mxu0 0.0
    %328 = vmatpush2.msra.mxu0 0.0
    %329 = vmatprep.subr.mxu0 0.0
    %330 = vmatpush2.msra.mxu0 0.0
    %331 = vmatprep.subr.mxu0 0.0
    %332 = vmatpush2.msra.mxu0 0.0
    %333 = vmatprep.subr.mxu0 0.0
    %334 = vmatpush2.msra.mxu0 0.0
    %335 = vmatprep.subr.mxu0 0.0
    %336 = vmatpush2.msra.mxu0 0.0
    %337 = vmatprep.subr.mxu0 0.0
    %338 = vmatpush2.msra.mxu0 0.0
    %339 = vmatprep.subr.mxu0 0.0
    %340 = vmatpush2.msra.mxu0 0.0
    %341 = vmatprep.subr.mxu0 0.0
    %342 = vmatpush2.msra.mxu0 0.0
    %343 = vmatprep.mubr.f32.mxu0 0.0
    %344 = vmatmul.mubr.f32.gmra.mxu0 %v277
    %v345 = vpop.f32.mrf.mxu0
    %v346 = vadd.f32 0.0, %v345
    %v347 = vpop.f32.mrf.mxu0
    %v348 = vadd.f32 0.0, %v347
    %349 = vdwg.mxu0
    %350 = vmatprep.subr.mxu0 0.0
    %351 = vmatpush1.msra.mxu0 0.0
    %352 = vmatprep.subr.mxu0 0.0
    %353 = vmatpush1.msra.mxu0 0.0
    %354 = vmatprep.subr.mxu0 0.0
    %355 = vmatpush1.msra.mxu0 0.0
    %356 = vmatprep.subr.mxu0 0.0
    %357 = vmatpush1.msra.mxu0 0.0
    %358 = vmatprep.subr.mxu0 0.0
    %359 = vmatpush1.msra.mxu0 0.0
    %360 = vmatprep.subr.mxu0 0.0
    %361 = vmatpush1.msra.mxu0 0.0
    %362 = vmatprep.subr.mxu0 0.0
    %363 = vmatpush1.msra.mxu0 0.0
    %364 = vmatprep.subr.mxu0 %v266
    %365 = vmatpush1.msra.mxu0 %v265
    %366 = vmatprep.subr.mxu0 %v242
    %367 = vmatpush1.msra.mxu0 %v241
    %368 = vmatprep.subr.mxu0 %v218
    %369 = vmatpush1.msra.mxu0 %v217
    %370 = vmatprep.subr.mxu0 %v194
    %371 = vmatpush1.msra.mxu0 %v193
    %372 = vmatprep.subr.mxu0 %v170
    %373 = vmatpush1.msra.mxu0 %v169
    %374 = vmatprep.subr.mxu0 %v146
    %375 = vmatpush1.msra.mxu0 %v145
    %376 = vmatprep.subr.mxu0 %v122
    %377 = vmatpush1.msra.mxu0 %v121
    %378 = vmatprep.subr.mxu0 %v98
    %379 = vmatpush1.msra.mxu0 %v97
    %380 = vmatprep.subr.mxu0 %v72
    %381 = vmatpush1.msra.mxu0 %v71
    %382 = vmatprep.subr.mxu0 0.0
    %383 = vmatpush2.msra.mxu0 0.0
    %384 = vmatprep.subr.mxu0 0.0
    %385 = vmatpush2.msra.mxu0 0.0
    %386 = vmatprep.subr.mxu0 0.0
    %387 = vmatpush2.msra.mxu0 0.0
    %388 = vmatprep.subr.mxu0 0.0
    %389 = vmatpush2.msra.mxu0 0.0
    %390 = vmatprep.subr.mxu0 0.0
    %391 = vmatpush2.msra.mxu0 0.0
    %392 = vmatprep.subr.mxu0 0.0
    %393 = vmatpush2.msra.mxu0 0.0
    %394 = vmatprep.subr.mxu0 0.0
    %395 = vmatpush2.msra.mxu0 0.0
    %396 = vmatprep.subr.mxu0 0.0
    %397 = vmatpush2.msra.mxu0 0.0
    %398 = vmatprep.subr.mxu0 0.0
    %399 = vmatpush2.msra.mxu0 0.0
    %400 = vmatprep.subr.mxu0 0.0
    %401 = vmatpush2.msra.mxu0 0.0
    %402 = vmatprep.subr.mxu0 0.0
    %403 = vmatpush2.msra.mxu0 0.0
    %404 = vmatprep.subr.mxu0 0.0
    %405 = vmatpush2.msra.mxu0 0.0
    %406 = vmatprep.subr.mxu0 0.0
    %407 = vmatpush2.msra.mxu0 0.0
    %408 = vmatprep.subr.mxu0 0.0
    %409 = vmatpush2.msra.mxu0 0.0
    %410 = vmatprep.subr.mxu0 0.0
    %411 = vmatpush2.msra.mxu0 0.0
    %412 = vmatprep.subr.mxu0 0.0
    %413 = vmatpush2.msra.mxu0 0.0
    %414 = vmatprep.mubr.f32.mxu0 0.0
    %415 = vmatmul.mubr.f32.gmra.mxu0 %v277
    %v416 = vpop.f32.mrf.mxu0
    %v417 = vadd.f32 0.0, %v416
    %v418 = vpop.f32.mrf.mxu0
    %v419 = vadd.f32 0.0, %v418
    %420 = vdwg.mxu0
    %421 = vmatprep.subr.mxu0 0.0
    %422 = vmatpush1.msra.mxu0 0.0
    %423 = vmatprep.subr.mxu0 0.0
    %424 = vmatpush1.msra.mxu0 0.0
    %425 = vmatprep.subr.mxu0 0.0
    %426 = vmatpush1.msra.mxu0 0.0
    %427 = vmatprep.subr.mxu0 0.0
    %428 = vmatpush1.msra.mxu0 0.0
    %429 = vmatprep.subr.mxu0 0.0
    %430 = vmatpush1.msra.mxu0 0.0
    %431 = vmatprep.subr.mxu0 0.0
    %432 = vmatpush1.msra.mxu0 0.0
    %433 = vmatprep.subr.mxu0 0.0
    %434 = vmatpush1.msra.mxu0 0.0
    %435 = vmatprep.subr.mxu0 %v261
    %436 = vmatpush1.msra.mxu0 %v267
    %437 = vmatprep.subr.mxu0 %v237
    %438 = vmatpush1.msra.mxu0 %v243
    %439 = vmatprep.subr.mxu0 %v213
    %440 = vmatpush1.msra.mxu0 %v219
    %441 = vmatprep.subr.mxu0 %v189
    %442 = vmatpush1.msra.mxu0 %v195
    %443 = vmatprep.subr.mxu0 %v165
    %444 = vmatpush1.msra.mxu0 %v171
    %445 = vmatprep.subr.mxu0 %v141
    %446 = vmatpush1.msra.mxu0 %v147
    %447 = vmatprep.subr.mxu0 %v117
    %448 = vmatpush1.msra.mxu0 %v123
    %449 = vmatprep.subr.mxu0 %v93
    %450 = vmatpush1.msra.mxu0 %v99
    %451 = vmatprep.subr.mxu0 %v74
    %452 = vmatpush1.msra.mxu0 %v73
    %453 = vmatprep.subr.mxu0 0.0
    %454 = vmatpush2.msra.mxu0 0.0
    %455 = vmatprep.subr.mxu0 0.0
    %456 = vmatpush2.msra.mxu0 0.0
    %457 = vmatprep.subr.mxu0 0.0
    %458 = vmatpush2.msra.mxu0 0.0
    %459 = vmatprep.subr.mxu0 0.0
    %460 = vmatpush2.msra.mxu0 0.0
    %461 = vmatprep.subr.mxu0 0.0
    %462 = vmatpush2.msra.mxu0 0.0
    %463 = vmatprep.subr.mxu0 0.0
    %464 = vmatpush2.msra.mxu0 0.0
    %465 = vmatprep.subr.mxu0 0.0
    %466 = vmatpush2.msra.mxu0 0.0
    %467 = vmatprep.subr.mxu0 0.0
    %468 = vmatpush2.msra.mxu0 0.0
    %469 = vmatprep.subr.mxu0 0.0
    %470 = vmatpush2.msra.mxu0 0.0
    %471 = vmatprep.subr.mxu0 0.0
    %472 = vmatpush2.msra.mxu0 0.0
    %473 = vmatprep.subr.mxu0 0.0
    %474 = vmatpush2.msra.mxu0 0.0
    %475 = vmatprep.subr.mxu0 0.0
    %476 = vmatpush2.msra.mxu0 0.0
    %477 = vmatprep.subr.mxu0 0.0
    %478 = vmatpush2.msra.mxu0 0.0
    %479 = vmatprep.subr.mxu0 0.0
    %480 = vmatpush2.msra.mxu0 0.0
    %481 = vmatprep.subr.mxu0 0.0
    %482 = vmatpush2.msra.mxu0 0.0
    %483 = vmatprep.subr.mxu0 0.0
    %484 = vmatpush2.msra.mxu0 0.0
    %485 = vmatprep.mubr.f32.mxu0 0.0
    %486 = vmatmul.mubr.f32.gmra.mxu0 %v277
    %v487 = vpop.f32.mrf.mxu0
    %v488 = vadd.f32 0.0, %v487
    %v489 = vpop.f32.mrf.mxu0
    %v490 = vadd.f32 0.0, %v489
    %491 = vdwg.mxu0
    %v493 = vlaneseq
    %v494 = vshrl.u32 %v493, 7
    %v495 = vsub.s32 0, %v494
    %v496 = vrot.slane %v75, %v495
    %v497 = vlaneseq
    %v498 = vshrl.u32 %v497, 7
    %v499 = vsub.s32 1, %v498
    %v500 = vrot.slane %v75, %v499
    %v501 = vlaneseq
    %v502 = vshrl.u32 %v501, 7
    %v503 = vsub.s32 2, %v502
    %v504 = vrot.slane %v75, %v503
    %v505 = vlaneseq
    %v506 = vshrl.u32 %v505, 7
    %v507 = vsub.s32 3, %v506
    %v508 = vrot.slane %v75, %v507
    %v509 = vlaneseq
    %v510 = vshrl.u32 %v509, 7
    %v511 = vsub.s32 4, %v510
    %v512 = vrot.slane %v75, %v511
    %v513 = vlaneseq
    %v514 = vshrl.u32 %v513, 7
    %v515 = vsub.s32 5, %v514
    %v516 = vrot.slane %v75, %v515
    %v523 = vmul.f32 %v346, %v496
    %v524 = vmul.f32 %v348, %v500
    %v525 = vmul.f32 %v417, %v504
    %v526 = vmul.f32 %v419, %v508
    %v527 = vmul.f32 %v488, %v512
    %v528 = vmul.f32 %v490, %v516
    %v529 = vadd.f32 %v523, %v524
    %v530 = vadd.f32 %v529, %v525
    %v531 = vadd.f32 %v530, %v526
    %v532 = vadd.f32 %v531, %v527
    %vm533 = vcmask 64512
    %v534 = vsel %vm533, %v528, 0.0
    %v535 = vadd.f32 %v532, %v534
    %536 = vadd.xlane.f32.xlu0 %v535
    %v537 = vpop.xlane.xlu0 %536
    %v538 = vmul.f32 %v537, 0.001953125
    %v539 = vmul.f32 %v523, %v346
    %v540 = vmul.f32 %v524, %v348
    %v541 = vmul.f32 %v525, %v417
    %v542 = vmul.f32 %v526, %v419
    %v543 = vmul.f32 %v527, %v488
    %v544 = vmul.f32 %v528, %v490
    %v545 = vadd.f32 %v539, %v540
    %v546 = vadd.f32 %v545, %v541
    %v547 = vadd.f32 %v546, %v542
    %v548 = vadd.f32 %v547, %v543
    %v549 = vsel %vm533, %v544, 0.0
    %v550 = vadd.f32 %v548, %v549
    %551 = vadd.xlane.f32.xlu0 %v550
    %v552 = vpop.xlane.xlu0 %551
    %v553 = vmul.f32 %v552, 0.001953125
    %v554 = vmul.f32 %v538, %v538
    %v555 = vsub.f32 %v553, %v554
    %v556 = vmax.f32 %v555, 0.0
    %v557 = vld [vmem:[%s2] sm:$0xff]
    %v558 = vadd.f32 %v556, 1e-05
    %v559 = vrsqrt.pop %v558
    %v560 = vmul.f32 %v557, %v559
    %v561 = vld [vmem:[%s3] sm:$0xff]
    %v562 = vmul.f32 %v538, %v560
    %v563 = vsub.f32 %v561, %v562
    %565 = vset.pattern.permute.xlu0 0
    %566 = vperm.xlu0 %565, %v560
    %v567 = vpop.permute.xlu0 %566
    %v569 = vmul.f32 %v346, %v567
    %v570 = vmul.f32 %v348, %v567
    %v571 = vmul.f32 %v417, %v567
    %v572 = vmul.f32 %v419, %v567
    %v573 = vmul.f32 %v488, %v567
    %v574 = vmul.f32 %v490, %v567
    %576 = vset.pattern.permute.xlu0 0
    %577 = vperm.xlu0 %576, %v563
    %v578 = vpop.permute.xlu0 %577
    %v580 = vadd.f32 %v569, %v578
    %v581 = vadd.f32 %v570, %v578
    %v582 = vadd.f32 %v571, %v578
    %v583 = vadd.f32 %v572, %v578
    %v584 = vadd.f32 %v573, %v578
    %v585 = vadd.f32 %v574, %v578
    %v586 = vmax.f32 %v580, 0.0
    %v587 = vmax.f32 %v581, 0.0
    %v588 = vmax.f32 %v582, 0.0
    %v589 = vmax.f32 %v583, 0.0
    %v590 = vmax.f32 %v584, 0.0
    %v591 = vmax.f32 %v585, 0.0
    %v592 = vmul.f32 %v586, %v496
    %v593 = vmul.f32 %v587, %v500
    %v594 = vmul.f32 %v588, %v504
    %v595 = vmul.f32 %v589, %v508
    %v596 = vmul.f32 %v590, %v512
    %v597 = vmul.f32 %v591, %v516
    %604 = vrot.lane.b32.xlu0 %v592, 19
    %v605 = vpop.permute.xlu0 %604
    %606 = vrot.lane.b32.xlu0 %v593, 19
    %v607 = vpop.permute.xlu0 %606
    %608 = vrot.lane.b32.xlu0 %v594, 19
    %v609 = vpop.permute.xlu0 %608
    %610 = vrot.lane.b32.xlu0 %v595, 19
    %v611 = vpop.permute.xlu0 %610
    %612 = vrot.lane.b32.xlu0 %v596, 19
    %v613 = vpop.permute.xlu0 %612
    %614 = vrot.lane.b32.xlu0 %v597, 19
    %v615 = vpop.permute.xlu0 %614
    %vm616 = vcmask 154624
    %v617 = vsel %vm616, %v605, %v607
    %v618 = vsel %vm616, %v607, %v609
    %v619 = vsel %vm616, %v609, %v611
    %v620 = vsel %vm616, %v611, %v613
    %v621 = vsel %vm616, %v613, %v615
    %v628 = vsel %vm616, 0.0, %v605
    %vm629 = vcmask 220160
    %v630 = vsel %vm629, %v621, 0.0
    %633 = vrot.lane.b32.xlu0 %v628, 127
    %v634 = vpop.permute.xlu0 %633
    %635 = vrot.lane.b32.xlu0 %v617, 127
    %v636 = vpop.permute.xlu0 %635
    %637 = vrot.lane.b32.xlu0 %v618, 127
    %v638 = vpop.permute.xlu0 %637
    %639 = vrot.lane.b32.xlu0 %v619, 127
    %v640 = vpop.permute.xlu0 %639
    %641 = vrot.lane.b32.xlu0 %v620, 127
    %v642 = vpop.permute.xlu0 %641
    %643 = vrot.lane.b32.xlu0 %v630, 127
    %v644 = vpop.permute.xlu0 %643
    %v645 = vsel %vm94, %v634, %v636
    %v646 = vsel %vm94, %v636, %v638
    %v647 = vsel %vm94, %v638, %v640
    %v648 = vsel %vm94, %v640, %v642
    %v649 = vsel %vm94, %v642, %v644
    %656 = vrot.lane.b32.xlu0 %v628, 126
    %v657 = vpop.permute.xlu0 %656
    %658 = vrot.lane.b32.xlu0 %v617, 126
    %v659 = vpop.permute.xlu0 %658
    %660 = vrot.lane.b32.xlu0 %v618, 126
    %v661 = vpop.permute.xlu0 %660
    %662 = vrot.lane.b32.xlu0 %v619, 126
    %v663 = vpop.permute.xlu0 %662
    %664 = vrot.lane.b32.xlu0 %v620, 126
    %v665 = vpop.permute.xlu0 %664
    %666 = vrot.lane.b32.xlu0 %v630, 126
    %v667 = vpop.permute.xlu0 %666
    %v668 = vsel %vm118, %v657, %v659
    %v669 = vsel %vm118, %v659, %v661
    %v670 = vsel %vm118, %v661, %v663
    %v671 = vsel %vm118, %v663, %v665
    %v672 = vsel %vm118, %v665, %v667
    %679 = vrot.lane.b32.xlu0 %v628, 110
    %v680 = vpop.permute.xlu0 %679
    %681 = vrot.lane.b32.xlu0 %v617, 110
    %v682 = vpop.permute.xlu0 %681
    %683 = vrot.lane.b32.xlu0 %v618, 110
    %v684 = vpop.permute.xlu0 %683
    %685 = vrot.lane.b32.xlu0 %v619, 110
    %v686 = vpop.permute.xlu0 %685
    %687 = vrot.lane.b32.xlu0 %v620, 110
    %v688 = vpop.permute.xlu0 %687
    %689 = vrot.lane.b32.xlu0 %v630, 110
    %v690 = vpop.permute.xlu0 %689
    %v691 = vsel %vm142, %v680, %v682
    %v692 = vsel %vm142, %v682, %v684
    %v693 = vsel %vm142, %v684, %v686
    %v694 = vsel %vm142, %v686, %v688
    %v695 = vsel %vm142, %v688, %v690
    %702 = vrot.lane.b32.xlu0 %v628, 109
    %v703 = vpop.permute.xlu0 %702
    %704 = vrot.lane.b32.xlu0 %v617, 109
    %v705 = vpop.permute.xlu0 %704
    %706 = vrot.lane.b32.xlu0 %v618, 109
    %v707 = vpop.permute.xlu0 %706
    %708 = vrot.lane.b32.xlu0 %v619, 109
    %v709 = vpop.permute.xlu0 %708
    %710 = vrot.lane.b32.xlu0 %v620, 109
    %v711 = vpop.permute.xlu0 %710
    %712 = vrot.lane.b32.xlu0 %v630, 109
    %v713 = vpop.permute.xlu0 %712
    %v714 = vsel %vm166, %v703, %v705
    %v715 = vsel %vm166, %v705, %v707
    %v716 = vsel %vm166, %v707, %v709
    %v717 = vsel %vm166, %v709, %v711
    %v718 = vsel %vm166, %v711, %v713
    %725 = vrot.lane.b32.xlu0 %v628, 108
    %v726 = vpop.permute.xlu0 %725
    %727 = vrot.lane.b32.xlu0 %v617, 108
    %v728 = vpop.permute.xlu0 %727
    %729 = vrot.lane.b32.xlu0 %v618, 108
    %v730 = vpop.permute.xlu0 %729
    %731 = vrot.lane.b32.xlu0 %v619, 108
    %v732 = vpop.permute.xlu0 %731
    %733 = vrot.lane.b32.xlu0 %v620, 108
    %v734 = vpop.permute.xlu0 %733
    %735 = vrot.lane.b32.xlu0 %v630, 108
    %v736 = vpop.permute.xlu0 %735
    %v737 = vsel %vm190, %v726, %v728
    %v738 = vsel %vm190, %v728, %v730
    %v739 = vsel %vm190, %v730, %v732
    %v740 = vsel %vm190, %v732, %v734
    %v741 = vsel %vm190, %v734, %v736
    %748 = vrot.lane.b32.xlu0 %v628, 92
    %v749 = vpop.permute.xlu0 %748
    %750 = vrot.lane.b32.xlu0 %v617, 92
    %v751 = vpop.permute.xlu0 %750
    %752 = vrot.lane.b32.xlu0 %v618, 92
    %v753 = vpop.permute.xlu0 %752
    %754 = vrot.lane.b32.xlu0 %v619, 92
    %v755 = vpop.permute.xlu0 %754
    %756 = vrot.lane.b32.xlu0 %v620, 92
    %v757 = vpop.permute.xlu0 %756
    %758 = vrot.lane.b32.xlu0 %v630, 92
    %v759 = vpop.permute.xlu0 %758
    %v760 = vsel %vm214, %v749, %v751
    %v761 = vsel %vm214, %v751, %v753
    %v762 = vsel %vm214, %v753, %v755
    %v763 = vsel %vm214, %v755, %v757
    %v764 = vsel %vm214, %v757, %v759
    %771 = vrot.lane.b32.xlu0 %v628, 91
    %v772 = vpop.permute.xlu0 %771
    %773 = vrot.lane.b32.xlu0 %v617, 91
    %v774 = vpop.permute.xlu0 %773
    %775 = vrot.lane.b32.xlu0 %v618, 91
    %v776 = vpop.permute.xlu0 %775
    %777 = vrot.lane.b32.xlu0 %v619, 91
    %v778 = vpop.permute.xlu0 %777
    %779 = vrot.lane.b32.xlu0 %v620, 91
    %v780 = vpop.permute.xlu0 %779
    %781 = vrot.lane.b32.xlu0 %v630, 91
    %v782 = vpop.permute.xlu0 %781
    %v783 = vsel %vm238, %v772, %v774
    %v784 = vsel %vm238, %v774, %v776
    %v785 = vsel %vm238, %v776, %v778
    %v786 = vsel %vm238, %v778, %v780
    %v787 = vsel %vm238, %v780, %v782
    %794 = vrot.lane.b32.xlu0 %v628, 90
    %v795 = vpop.permute.xlu0 %794
    %796 = vrot.lane.b32.xlu0 %v617, 90
    %v797 = vpop.permute.xlu0 %796
    %798 = vrot.lane.b32.xlu0 %v618, 90
    %v799 = vpop.permute.xlu0 %798
    %800 = vrot.lane.b32.xlu0 %v619, 90
    %v801 = vpop.permute.xlu0 %800
    %802 = vrot.lane.b32.xlu0 %v620, 90
    %v803 = vpop.permute.xlu0 %802
    %804 = vrot.lane.b32.xlu0 %v630, 90
    %v805 = vpop.permute.xlu0 %804
    %v806 = vsel %vm262, %v795, %v797
    %v807 = vsel %vm262, %v797, %v799
    %v808 = vsel %vm262, %v799, %v801
    %v809 = vsel %vm262, %v801, %v803
    %v810 = vsel %vm262, %v803, %v805
    %v817 = vld [vmem:[%s4] sm:$0xff]
    %v819 = vsel %vm275, %v817, 0
    %821 = vmatprep.subr.mxu0 0.0
    %822 = vmatpush1.msra.mxu0 0.0
    %823 = vmatprep.subr.mxu0 0.0
    %824 = vmatpush1.msra.mxu0 0.0
    %825 = vmatprep.subr.mxu0 0.0
    %826 = vmatpush1.msra.mxu0 0.0
    %827 = vmatprep.subr.mxu0 0.0
    %828 = vmatpush1.msra.mxu0 0.0
    %829 = vmatprep.subr.mxu0 0.0
    %830 = vmatpush1.msra.mxu0 0.0
    %831 = vmatprep.subr.mxu0 0.0
    %832 = vmatpush1.msra.mxu0 0.0
    %833 = vmatprep.subr.mxu0 0.0
    %834 = vmatpush1.msra.mxu0 0.0
    %835 = vmatprep.subr.mxu0 %v807
    %836 = vmatpush1.msra.mxu0 %v806
    %837 = vmatprep.subr.mxu0 %v784
    %838 = vmatpush1.msra.mxu0 %v783
    %839 = vmatprep.subr.mxu0 %v761
    %840 = vmatpush1.msra.mxu0 %v760
    %841 = vmatprep.subr.mxu0 %v738
    %842 = vmatpush1.msra.mxu0 %v737
    %843 = vmatprep.subr.mxu0 %v715
    %844 = vmatpush1.msra.mxu0 %v714
    %845 = vmatprep.subr.mxu0 %v692
    %846 = vmatpush1.msra.mxu0 %v691
    %847 = vmatprep.subr.mxu0 %v669
    %848 = vmatpush1.msra.mxu0 %v668
    %849 = vmatprep.subr.mxu0 %v646
    %850 = vmatpush1.msra.mxu0 %v645
    %851 = vmatprep.subr.mxu0 %v617
    %852 = vmatpush1.msra.mxu0 %v628
    %853 = vmatprep.subr.mxu0 0.0
    %854 = vmatpush2.msra.mxu0 0.0
    %855 = vmatprep.subr.mxu0 0.0
    %856 = vmatpush2.msra.mxu0 0.0
    %857 = vmatprep.subr.mxu0 0.0
    %858 = vmatpush2.msra.mxu0 0.0
    %859 = vmatprep.subr.mxu0 0.0
    %860 = vmatpush2.msra.mxu0 0.0
    %861 = vmatprep.subr.mxu0 0.0
    %862 = vmatpush2.msra.mxu0 0.0
    %863 = vmatprep.subr.mxu0 0.0
    %864 = vmatpush2.msra.mxu0 0.0
    %865 = vmatprep.subr.mxu0 0.0
    %866 = vmatpush2.msra.mxu0 0.0
    %867 = vmatprep.subr.mxu0 0.0
    %868 = vmatpush2.msra.mxu0 0.0
    %869 = vmatprep.subr.mxu0 0.0
    %870 = vmatpush2.msra.mxu0 0.0
    %871 = vmatprep.subr.mxu0 0.0
    %872 = vmatpush2.msra.mxu0 0.0
    %873 = vmatprep.subr.mxu0 0.0
    %874 = vmatpush2.msra.mxu0 0.0
    %875 = vmatprep.subr.mxu0 0.0
    %876 = vmatpush2.msra.mxu0 0.0
    %877 = vmatprep.subr.mxu0 0.0
    %878 = vmatpush2.msra.mxu0 0.0
    %879 = vmatprep.subr.mxu0 0.0
    %880 = vmatpush2.msra.mxu0 0.0
    %881 = vmatprep.subr.mxu0 0.0
    %882 = vmatpush2.msra.mxu0 0.0
    %883 = vmatprep.subr.mxu0 0.0
    %884 = vmatpush2.msra.mxu0 0.0
    %885 = vmatprep.mubr.f32.mxu0 0.0
    %886 = vmatmul.mubr.f32.gmra.mxu0 %v819
    %v887 = vpop.f32.mrf.mxu0
    %v888 = vadd.f32 0.0, %v887
    %v889 = vpop.f32.mrf.mxu0
    %v890 = vadd.f32 0.0, %v889
    %891 = vdwg.mxu0
    %892 = vmatprep.subr.mxu0 0.0
    %893 = vmatpush1.msra.mxu0 0.0
    %894 = vmatprep.subr.mxu0 0.0
    %895 = vmatpush1.msra.mxu0 0.0
    %896 = vmatprep.subr.mxu0 0.0
    %897 = vmatpush1.msra.mxu0 0.0
    %898 = vmatprep.subr.mxu0 0.0
    %899 = vmatpush1.msra.mxu0 0.0
    %900 = vmatprep.subr.mxu0 0.0
    %901 = vmatpush1.msra.mxu0 0.0
    %902 = vmatprep.subr.mxu0 0.0
    %903 = vmatpush1.msra.mxu0 0.0
    %904 = vmatprep.subr.mxu0 0.0
    %905 = vmatpush1.msra.mxu0 0.0
    %906 = vmatprep.subr.mxu0 %v809
    %907 = vmatpush1.msra.mxu0 %v808
    %908 = vmatprep.subr.mxu0 %v786
    %909 = vmatpush1.msra.mxu0 %v785
    %910 = vmatprep.subr.mxu0 %v763
    %911 = vmatpush1.msra.mxu0 %v762
    %912 = vmatprep.subr.mxu0 %v740
    %913 = vmatpush1.msra.mxu0 %v739
    %914 = vmatprep.subr.mxu0 %v717
    %915 = vmatpush1.msra.mxu0 %v716
    %916 = vmatprep.subr.mxu0 %v694
    %917 = vmatpush1.msra.mxu0 %v693
    %918 = vmatprep.subr.mxu0 %v671
    %919 = vmatpush1.msra.mxu0 %v670
    %920 = vmatprep.subr.mxu0 %v648
    %921 = vmatpush1.msra.mxu0 %v647
    %922 = vmatprep.subr.mxu0 %v619
    %923 = vmatpush1.msra.mxu0 %v618
    %924 = vmatprep.subr.mxu0 0.0
    %925 = vmatpush2.msra.mxu0 0.0
    %926 = vmatprep.subr.mxu0 0.0
    %927 = vmatpush2.msra.mxu0 0.0
    %928 = vmatprep.subr.mxu0 0.0
    %929 = vmatpush2.msra.mxu0 0.0
    %930 = vmatprep.subr.mxu0 0.0
    %931 = vmatpush2.msra.mxu0 0.0
    %932 = vmatprep.subr.mxu0 0.0
    %933 = vmatpush2.msra.mxu0 0.0
    %934 = vmatprep.subr.mxu0 0.0
    %935 = vmatpush2.msra.mxu0 0.0
    %936 = vmatprep.subr.mxu0 0.0
    %937 = vmatpush2.msra.mxu0 0.0
    %938 = vmatprep.subr.mxu0 0.0
    %939 = vmatpush2.msra.mxu0 0.0
    %940 = vmatprep.subr.mxu0 0.0
    %941 = vmatpush2.msra.mxu0 0.0
    %942 = vmatprep.subr.mxu0 0.0
    %943 = vmatpush2.msra.mxu0 0.0
    %944 = vmatprep.subr.mxu0 0.0
    %945 = vmatpush2.msra.mxu0 0.0
    %946 = vmatprep.subr.mxu0 0.0
    %947 = vmatpush2.msra.mxu0 0.0
    %948 = vmatprep.subr.mxu0 0.0
    %949 = vmatpush2.msra.mxu0 0.0
    %950 = vmatprep.subr.mxu0 0.0
    %951 = vmatpush2.msra.mxu0 0.0
    %952 = vmatprep.subr.mxu0 0.0
    %953 = vmatpush2.msra.mxu0 0.0
    %954 = vmatprep.subr.mxu0 0.0
    %955 = vmatpush2.msra.mxu0 0.0
    %956 = vmatprep.mubr.f32.mxu0 0.0
    %957 = vmatmul.mubr.f32.gmra.mxu0 %v819
    %v958 = vpop.f32.mrf.mxu0
    %v959 = vadd.f32 0.0, %v958
    %v960 = vpop.f32.mrf.mxu0
    %v961 = vadd.f32 0.0, %v960
    %962 = vdwg.mxu0
    %963 = vmatprep.subr.mxu0 0.0
    %964 = vmatpush1.msra.mxu0 0.0
    %965 = vmatprep.subr.mxu0 0.0
    %966 = vmatpush1.msra.mxu0 0.0
    %967 = vmatprep.subr.mxu0 0.0
    %968 = vmatpush1.msra.mxu0 0.0
    %969 = vmatprep.subr.mxu0 0.0
    %970 = vmatpush1.msra.mxu0 0.0
    %971 = vmatprep.subr.mxu0 0.0
    %972 = vmatpush1.msra.mxu0 0.0
    %973 = vmatprep.subr.mxu0 0.0
    %974 = vmatpush1.msra.mxu0 0.0
    %975 = vmatprep.subr.mxu0 0.0
    %976 = vmatpush1.msra.mxu0 0.0
    %977 = vmatprep.subr.mxu0 %v805
    %978 = vmatpush1.msra.mxu0 %v810
    %979 = vmatprep.subr.mxu0 %v782
    %980 = vmatpush1.msra.mxu0 %v787
    %981 = vmatprep.subr.mxu0 %v759
    %982 = vmatpush1.msra.mxu0 %v764
    %983 = vmatprep.subr.mxu0 %v736
    %984 = vmatpush1.msra.mxu0 %v741
    %985 = vmatprep.subr.mxu0 %v713
    %986 = vmatpush1.msra.mxu0 %v718
    %987 = vmatprep.subr.mxu0 %v690
    %988 = vmatpush1.msra.mxu0 %v695
    %989 = vmatprep.subr.mxu0 %v667
    %990 = vmatpush1.msra.mxu0 %v672
    %991 = vmatprep.subr.mxu0 %v644
    %992 = vmatpush1.msra.mxu0 %v649
    %993 = vmatprep.subr.mxu0 %v630
    %994 = vmatpush1.msra.mxu0 %v620
    %995 = vmatprep.subr.mxu0 0.0
    %996 = vmatpush2.msra.mxu0 0.0
    %997 = vmatprep.subr.mxu0 0.0
    %998 = vmatpush2.msra.mxu0 0.0
    %999 = vmatprep.subr.mxu0 0.0
    %1000 = vmatpush2.msra.mxu0 0.0
    %1001 = vmatprep.subr.mxu0 0.0
    %1002 = vmatpush2.msra.mxu0 0.0
    %1003 = vmatprep.subr.mxu0 0.0
    %1004 = vmatpush2.msra.mxu0 0.0
    %1005 = vmatprep.subr.mxu0 0.0
    %1006 = vmatpush2.msra.mxu0 0.0
    %1007 = vmatprep.subr.mxu0 0.0
    %1008 = vmatpush2.msra.mxu0 0.0
    %1009 = vmatprep.subr.mxu0 0.0
    %1010 = vmatpush2.msra.mxu0 0.0
    %1011 = vmatprep.subr.mxu0 0.0
    %1012 = vmatpush2.msra.mxu0 0.0
    %1013 = vmatprep.subr.mxu0 0.0
    %1014 = vmatpush2.msra.mxu0 0.0
    %1015 = vmatprep.subr.mxu0 0.0
    %1016 = vmatpush2.msra.mxu0 0.0
    %1017 = vmatprep.subr.mxu0 0.0
    %1018 = vmatpush2.msra.mxu0 0.0
    %1019 = vmatprep.subr.mxu0 0.0
    %1020 = vmatpush2.msra.mxu0 0.0
    %1021 = vmatprep.subr.mxu0 0.0
    %1022 = vmatpush2.msra.mxu0 0.0
    %1023 = vmatprep.subr.mxu0 0.0
    %1024 = vmatpush2.msra.mxu0 0.0
    %1025 = vmatprep.subr.mxu0 0.0
    %1026 = vmatpush2.msra.mxu0 0.0
    %1027 = vmatprep.mubr.f32.mxu0 0.0
    %1028 = vmatmul.mubr.f32.gmra.mxu0 %v819
    %v1029 = vpop.f32.mrf.mxu0
    %v1030 = vadd.f32 0.0, %v1029
    %v1031 = vpop.f32.mrf.mxu0
    %v1032 = vadd.f32 0.0, %v1031
    %1033 = vdwg.mxu0
    %v1034 = vmul.f32 %v888, %v496
    %v1035 = vmul.f32 %v890, %v500
    %v1036 = vmul.f32 %v959, %v504
    %v1037 = vmul.f32 %v961, %v508
    %v1038 = vmul.f32 %v1030, %v512
    %v1039 = vmul.f32 %v1032, %v516
    %v1040 = vadd.f32 %v1034, %v1035
    %v1041 = vadd.f32 %v1040, %v1036
    %v1042 = vadd.f32 %v1041, %v1037
    %v1043 = vadd.f32 %v1042, %v1038
    %v1044 = vsel %vm533, %v1039, 0.0
    %v1045 = vadd.f32 %v1043, %v1044
    %1046 = vadd.xlane.f32.xlu0 %v1045
    %v1047 = vpop.xlane.xlu0 %1046
    %v1048 = vmul.f32 %v1047, 0.001953125
    %v1049 = vmul.f32 %v1034, %v888
    %v1050 = vmul.f32 %v1035, %v890
    %v1051 = vmul.f32 %v1036, %v959
    %v1052 = vmul.f32 %v1037, %v961
    %v1053 = vmul.f32 %v1038, %v1030
    %v1054 = vmul.f32 %v1039, %v1032
    %v1055 = vadd.f32 %v1049, %v1050
    %v1056 = vadd.f32 %v1055, %v1051
    %v1057 = vadd.f32 %v1056, %v1052
    %v1058 = vadd.f32 %v1057, %v1053
    %v1059 = vsel %vm533, %v1054, 0.0
    %v1060 = vadd.f32 %v1058, %v1059
    %1061 = vadd.xlane.f32.xlu0 %v1060
    %v1062 = vpop.xlane.xlu0 %1061
    %v1063 = vmul.f32 %v1062, 0.001953125
    %v1064 = vmul.f32 %v1048, %v1048
    %v1065 = vsub.f32 %v1063, %v1064
    %v1066 = vmax.f32 %v1065, 0.0
    %v1067 = vld [vmem:[%s5] sm:$0xff]
    %v1068 = vadd.f32 %v1066, 1e-05
    %v1069 = vrsqrt.pop %v1068
    %v1070 = vmul.f32 %v1067, %v1069
    %v1071 = vld [vmem:[%s6] sm:$0xff]
    %v1072 = vmul.f32 %v1048, %v1070
    %v1073 = vsub.f32 %v1071, %v1072
    %1075 = vset.pattern.permute.xlu0 0
    %1076 = vperm.xlu0 %1075, %v1070
    %v1077 = vpop.permute.xlu0 %1076
    %v1079 = vmul.f32 %v888, %v1077
    %v1080 = vmul.f32 %v890, %v1077
    %v1081 = vmul.f32 %v959, %v1077
    %v1082 = vmul.f32 %v961, %v1077
    %v1083 = vmul.f32 %v1030, %v1077
    %v1084 = vmul.f32 %v1032, %v1077
    %1086 = vset.pattern.permute.xlu0 0
    %1087 = vperm.xlu0 %1086, %v1073
    %v1088 = vpop.permute.xlu0 %1087
    %v1090 = vadd.f32 %v1079, %v1088
    %v1091 = vadd.f32 %v1080, %v1088
    %v1092 = vadd.f32 %v1081, %v1088
    %v1093 = vadd.f32 %v1082, %v1088
    %v1094 = vadd.f32 %v1083, %v1088
    %v1095 = vadd.f32 %v1084, %v1088
    %v1096 = vmax.f32 %v1090, 0.0
    %v1097 = vmax.f32 %v1091, 0.0
    %v1098 = vmax.f32 %v1092, 0.0
    %v1099 = vmax.f32 %v1093, 0.0
    %v1100 = vmax.f32 %v1094, 0.0
    %v1101 = vmax.f32 %v1095, 0.0
    %v1102 = vmul.f32 %v1096, %v496
    %v1103 = vmul.f32 %v1097, %v500
    %v1104 = vmul.f32 %v1098, %v504
    %v1105 = vmul.f32 %v1099, %v508
    %v1106 = vmul.f32 %v1100, %v512
    %v1107 = vmul.f32 %v1101, %v516
    %v1108 = vld [vmem:[%s14] sm:$0x3]
    %v1109 = vsel %vm533, %v1107, 0.0
    %1116 = vrot.lane.b32.xlu0 %v1102, 127
    %v1117 = vpop.permute.xlu0 %1116
    %1118 = vrot.lane.b32.xlu0 %v1103, 127
    %v1119 = vpop.permute.xlu0 %1118
    %1120 = vrot.lane.b32.xlu0 %v1104, 127
    %v1121 = vpop.permute.xlu0 %1120
    %1122 = vrot.lane.b32.xlu0 %v1105, 127
    %v1123 = vpop.permute.xlu0 %1122
    %1124 = vrot.lane.b32.xlu0 %v1106, 127
    %v1125 = vpop.permute.xlu0 %1124
    %1126 = vrot.lane.b32.xlu0 %v1109, 127
    %v1127 = vpop.permute.xlu0 %1126
    %v1128 = vsel %vm94, %v1117, %v1119
    %v1129 = vsel %vm94, %v1119, %v1121
    %v1130 = vsel %vm94, %v1121, %v1123
    %v1131 = vsel %vm94, %v1123, %v1125
    %v1132 = vsel %vm94, %v1125, %v1127
    %v1139 = vmax.f32 %v1102, %v1128
    %v1140 = vmax.f32 %v1103, %v1129
    %v1141 = vmax.f32 %v1104, %v1130
    %v1142 = vmax.f32 %v1105, %v1131
    %v1143 = vmax.f32 %v1106, %v1132
    %v1144 = vmax.f32 %v1109, %v1127
    %1151 = vrot.lane.b32.xlu0 %v1139, 110
    %v1152 = vpop.permute.xlu0 %1151
    %1153 = vrot.lane.b32.xlu0 %v1140, 110
    %v1154 = vpop.permute.xlu0 %1153
    %1155 = vrot.lane.b32.xlu0 %v1141, 110
    %v1156 = vpop.permute.xlu0 %1155
    %1157 = vrot.lane.b32.xlu0 %v1142, 110
    %v1158 = vpop.permute.xlu0 %1157
    %1159 = vrot.lane.b32.xlu0 %v1143, 110
    %v1160 = vpop.permute.xlu0 %1159
    %1161 = vrot.lane.b32.xlu0 %v1144, 110
    %v1162 = vpop.permute.xlu0 %1161
    %v1163 = vsel %vm142, %v1152, %v1154
    %v1164 = vsel %vm142, %v1154, %v1156
    %v1165 = vsel %vm142, %v1156, %v1158
    %v1166 = vsel %vm142, %v1158, %v1160
    %v1167 = vsel %vm142, %v1160, %v1162
    %v1174 = vmax.f32 %v1139, %v1163
    %v1175 = vmax.f32 %v1140, %v1164
    %v1176 = vmax.f32 %v1141, %v1165
    %v1177 = vmax.f32 %v1142, %v1166
    %v1178 = vmax.f32 %v1143, %v1167
    %v1179 = vmax.f32 %v1144, %v1162
    %v1180 = vlaneseq
    %v1181 = vshrl.u32 %v1180, 7
    %v1182 = vadd.s32 %v1181, 8
    %v1183 = vadd.s32 %v1181, 16
    %v1184 = vadd.s32 %v1181, 24
    %v1185 = vadd.s32 %v1181, 32
    %v1186 = vadd.s32 %v1181, 40
    %v1187 = vadd.s32 %v1181, 48
    %v1188 = vadd.s32 %v1181, 56
    %v1189 = vadd.s32 %v1181, 64
    %v1190 = vadd.s32 %v1181, 72
    %v1191 = vadd.s32 %v1181, 80
    %v1192 = vadd.s32 %v1181, 88
    %v1193 = vadd.s32 %v1181, 96
    %v1194 = vadd.s32 %v1181, 104
    %v1195 = vadd.s32 %v1181, 112
    %v1196 = vadd.s32 %v1181, 120
    %v1197 = vadd.s32 %v1181, 128
    %v1198 = vadd.s32 %v1181, 136
    %v1199 = vadd.s32 %v1181, 144
    %v1200 = vadd.s32 %v1181, 152
    %v1201 = vadd.s32 %v1181, 160
    %v1202 = vadd.s32 %v1181, 168
    %v1203 = vadd.s32 %v1181, 176
    %v1204 = vadd.s32 %v1181, 184
    %v1205 = vadd.s32 %v1181, 192
    %v1206 = vadd.s32 %v1181, 200
    %v1207 = vadd.s32 %v1181, 208
    %v1208 = vadd.s32 %v1181, 216
    %v1209 = vadd.s32 %v1181, 224
    %v1210 = vadd.s32 %v1181, 232
    %v1211 = vadd.s32 %v1181, 240
    %v1212 = vadd.s32 %v1181, 248
    %v1213 = vadd.s32 %v1181, 256
    %v1214 = vadd.s32 %v1181, 264
    %v1215 = vadd.s32 %v1181, 272
    %v1216 = vadd.s32 %v1181, 280
    %v1217 = vadd.s32 %v1181, 288
    %v1218 = vadd.s32 %v1181, 296
    %v1219 = vadd.s32 %v1181, 304
    %v1220 = vadd.s32 %v1181, 312
    %v1221 = vadd.s32 %v1181, 320
    %v1222 = vadd.s32 %v1181, 328
    %v1223 = vadd.s32 %v1181, 336
    %v1224 = vadd.s32 %v1181, 344
    %v1225 = vadd.s32 %v1181, 352
    %v1226 = vadd.s32 %v1181, 360
    %v1227 = vadd.s32 %v1181, 368
    %v1228 = vadd.s32 %v1181, 376
    %v1229 = vadd.s32 %v1181, 384
    %v1230 = vadd.s32 %v1181, 392
    %v1231 = vadd.s32 %v1181, 400
    %v1232 = vadd.s32 %v1181, 408
    %v1233 = vadd.s32 %v1181, 416
    %v1234 = vadd.s32 %v1181, 424
    %v1235 = vadd.s32 %v1181, 432
    %v1236 = vadd.s32 %v1181, 440
    %v1237 = vadd.s32 %v1181, 448
    %v1238 = vadd.s32 %v1181, 456
    %v1239 = vadd.s32 %v1181, 464
    %v1240 = vadd.s32 %v1181, 472
    %v1241 = vadd.s32 %v1181, 480
    %v1242 = vadd.s32 %v1181, 488
    %v1243 = vadd.s32 %v1181, 496
    %v1244 = vadd.s32 %v1181, 504
    %v1245 = vadd.s32 %v1181, 512
    %v1246 = vadd.s32 %v1181, 520
    %v1247 = vadd.s32 %v1181, 528
    %v1248 = vadd.s32 %v1181, 536
    %v1249 = vadd.s32 %v1181, 544
    %v1250 = vadd.s32 %v1181, 552
    %v1251 = vadd.s32 %v1181, 560
    %v1252 = vadd.s32 %v1181, 568
    %v1253 = vadd.s32 %v1181, 576
    %v1254 = vadd.s32 %v1181, 584
    %v1255 = vadd.s32 %v1181, 592
    %v1256 = vadd.s32 %v1181, 600
    %v1257 = vadd.s32 %v1181, 608
    %v1258 = vadd.s32 %v1181, 616
    %v1259 = vadd.s32 %v1181, 624
    %v1260 = vadd.s32 %v1181, 632
    %v1261 = vadd.s32 %v1181, 640
    %v1262 = vld [vmem:[%s15] sm:$0x3]
    %v1263 = vlaneseq
    %v1264 = vshrl.u32 %v1263, 7
    %v1265 = vsub.s32 0, %v1264
    %v1266 = vrot.slane %v1262, %v1265
    %v1267 = vlaneseq
    %v1268 = vshrl.u32 %v1267, 7
    %v1269 = vsub.s32 1, %v1268
    %v1270 = vrot.slane %v1262, %v1269
    %vm1271 = vcmp.eq.s32.totalorder %v1181, %v1266
    %vm1272 = vcmp.eq.s32.totalorder %v1181, %v1270
    %vm1273 = vcmp.eq.s32.totalorder %v1182, %v1266
    %vm1274 = vcmp.eq.s32.totalorder %v1182, %v1270
    %vm1275 = vcmp.eq.s32.totalorder %v1183, %v1266
    %vm1276 = vcmp.eq.s32.totalorder %v1183, %v1270
    %vm1277 = vcmp.eq.s32.totalorder %v1184, %v1266
    %vm1278 = vcmp.eq.s32.totalorder %v1184, %v1270
    %vm1279 = vcmp.eq.s32.totalorder %v1185, %v1266
    %vm1280 = vcmp.eq.s32.totalorder %v1185, %v1270
    %vm1281 = vcmp.eq.s32.totalorder %v1186, %v1266
    %vm1282 = vcmp.eq.s32.totalorder %v1186, %v1270
    %vm1283 = vcmp.eq.s32.totalorder %v1187, %v1266
    %vm1284 = vcmp.eq.s32.totalorder %v1187, %v1270
    %vm1285 = vcmp.eq.s32.totalorder %v1188, %v1266
    %vm1286 = vcmp.eq.s32.totalorder %v1188, %v1270
    %vm1287 = vcmp.eq.s32.totalorder %v1189, %v1266
    %vm1288 = vcmp.eq.s32.totalorder %v1189, %v1270
    %vm1289 = vcmp.eq.s32.totalorder %v1190, %v1266
    %vm1290 = vcmp.eq.s32.totalorder %v1190, %v1270
    %vm1291 = vcmp.eq.s32.totalorder %v1191, %v1266
    %vm1292 = vcmp.eq.s32.totalorder %v1191, %v1270
    %vm1293 = vcmp.eq.s32.totalorder %v1192, %v1266
    %vm1294 = vcmp.eq.s32.totalorder %v1192, %v1270
    %vm1295 = vcmp.eq.s32.totalorder %v1193, %v1266
    %vm1296 = vcmp.eq.s32.totalorder %v1193, %v1270
    %vm1297 = vcmp.eq.s32.totalorder %v1194, %v1266
    %vm1298 = vcmp.eq.s32.totalorder %v1194, %v1270
    %vm1299 = vcmp.eq.s32.totalorder %v1195, %v1266
    %vm1300 = vcmp.eq.s32.totalorder %v1195, %v1270
    %vm1301 = vcmp.eq.s32.totalorder %v1196, %v1266
    %vm1302 = vcmp.eq.s32.totalorder %v1196, %v1270
    %vm1303 = vcmp.eq.s32.totalorder %v1197, %v1266
    %vm1304 = vcmp.eq.s32.totalorder %v1197, %v1270
    %vm1305 = vcmp.eq.s32.totalorder %v1198, %v1266
    %vm1306 = vcmp.eq.s32.totalorder %v1198, %v1270
    %vm1307 = vcmp.eq.s32.totalorder %v1199, %v1266
    %vm1308 = vcmp.eq.s32.totalorder %v1199, %v1270
    %vm1309 = vcmp.eq.s32.totalorder %v1200, %v1266
    %vm1310 = vcmp.eq.s32.totalorder %v1200, %v1270
    %vm1311 = vcmp.eq.s32.totalorder %v1201, %v1266
    %vm1312 = vcmp.eq.s32.totalorder %v1201, %v1270
    %vm1313 = vcmp.eq.s32.totalorder %v1202, %v1266
    %vm1314 = vcmp.eq.s32.totalorder %v1202, %v1270
    %vm1315 = vcmp.eq.s32.totalorder %v1203, %v1266
    %vm1316 = vcmp.eq.s32.totalorder %v1203, %v1270
    %vm1317 = vcmp.eq.s32.totalorder %v1204, %v1266
    %vm1318 = vcmp.eq.s32.totalorder %v1204, %v1270
    %vm1319 = vcmp.eq.s32.totalorder %v1205, %v1266
    %vm1320 = vcmp.eq.s32.totalorder %v1205, %v1270
    %vm1321 = vcmp.eq.s32.totalorder %v1206, %v1266
    %vm1322 = vcmp.eq.s32.totalorder %v1206, %v1270
    %vm1323 = vcmp.eq.s32.totalorder %v1207, %v1266
    %vm1324 = vcmp.eq.s32.totalorder %v1207, %v1270
    %vm1325 = vcmp.eq.s32.totalorder %v1208, %v1266
    %vm1326 = vcmp.eq.s32.totalorder %v1208, %v1270
    %vm1327 = vcmp.eq.s32.totalorder %v1209, %v1266
    %vm1328 = vcmp.eq.s32.totalorder %v1209, %v1270
    %vm1329 = vcmp.eq.s32.totalorder %v1210, %v1266
    %vm1330 = vcmp.eq.s32.totalorder %v1210, %v1270
    %vm1331 = vcmp.eq.s32.totalorder %v1211, %v1266
    %vm1332 = vcmp.eq.s32.totalorder %v1211, %v1270
    %vm1333 = vcmp.eq.s32.totalorder %v1212, %v1266
    %vm1334 = vcmp.eq.s32.totalorder %v1212, %v1270
    %vm1335 = vcmp.eq.s32.totalorder %v1213, %v1266
    %vm1336 = vcmp.eq.s32.totalorder %v1213, %v1270
    %vm1337 = vcmp.eq.s32.totalorder %v1214, %v1266
    %vm1338 = vcmp.eq.s32.totalorder %v1214, %v1270
    %vm1339 = vcmp.eq.s32.totalorder %v1215, %v1266
    %vm1340 = vcmp.eq.s32.totalorder %v1215, %v1270
    %vm1341 = vcmp.eq.s32.totalorder %v1216, %v1266
    %vm1342 = vcmp.eq.s32.totalorder %v1216, %v1270
    %vm1343 = vcmp.eq.s32.totalorder %v1217, %v1266
    %vm1344 = vcmp.eq.s32.totalorder %v1217, %v1270
    %vm1345 = vcmp.eq.s32.totalorder %v1218, %v1266
    %vm1346 = vcmp.eq.s32.totalorder %v1218, %v1270
    %vm1347 = vcmp.eq.s32.totalorder %v1219, %v1266
    %vm1348 = vcmp.eq.s32.totalorder %v1219, %v1270
    %vm1349 = vcmp.eq.s32.totalorder %v1220, %v1266
    %vm1350 = vcmp.eq.s32.totalorder %v1220, %v1270
    %vm1351 = vcmp.eq.s32.totalorder %v1221, %v1266
    %vm1352 = vcmp.eq.s32.totalorder %v1221, %v1270
    %vm1353 = vcmp.eq.s32.totalorder %v1222, %v1266
    %vm1354 = vcmp.eq.s32.totalorder %v1222, %v1270
    %vm1355 = vcmp.eq.s32.totalorder %v1223, %v1266
    %vm1356 = vcmp.eq.s32.totalorder %v1223, %v1270
    %vm1357 = vcmp.eq.s32.totalorder %v1224, %v1266
    %vm1358 = vcmp.eq.s32.totalorder %v1224, %v1270
    %vm1359 = vcmp.eq.s32.totalorder %v1225, %v1266
    %vm1360 = vcmp.eq.s32.totalorder %v1225, %v1270
    %vm1361 = vcmp.eq.s32.totalorder %v1226, %v1266
    %vm1362 = vcmp.eq.s32.totalorder %v1226, %v1270
    %vm1363 = vcmp.eq.s32.totalorder %v1227, %v1266
    %vm1364 = vcmp.eq.s32.totalorder %v1227, %v1270
    %vm1365 = vcmp.eq.s32.totalorder %v1228, %v1266
    %vm1366 = vcmp.eq.s32.totalorder %v1228, %v1270
    %vm1367 = vcmp.eq.s32.totalorder %v1229, %v1266
    %vm1368 = vcmp.eq.s32.totalorder %v1229, %v1270
    %vm1369 = vcmp.eq.s32.totalorder %v1230, %v1266
    %vm1370 = vcmp.eq.s32.totalorder %v1230, %v1270
    %vm1371 = vcmp.eq.s32.totalorder %v1231, %v1266
    %vm1372 = vcmp.eq.s32.totalorder %v1231, %v1270
    %vm1373 = vcmp.eq.s32.totalorder %v1232, %v1266
    %vm1374 = vcmp.eq.s32.totalorder %v1232, %v1270
    %vm1375 = vcmp.eq.s32.totalorder %v1233, %v1266
    %vm1376 = vcmp.eq.s32.totalorder %v1233, %v1270
    %vm1377 = vcmp.eq.s32.totalorder %v1234, %v1266
    %vm1378 = vcmp.eq.s32.totalorder %v1234, %v1270
    %vm1379 = vcmp.eq.s32.totalorder %v1235, %v1266
    %vm1380 = vcmp.eq.s32.totalorder %v1235, %v1270
    %vm1381 = vcmp.eq.s32.totalorder %v1236, %v1266
    %vm1382 = vcmp.eq.s32.totalorder %v1236, %v1270
    %vm1383 = vcmp.eq.s32.totalorder %v1237, %v1266
    %vm1384 = vcmp.eq.s32.totalorder %v1237, %v1270
    %vm1385 = vcmp.eq.s32.totalorder %v1238, %v1266
    %vm1386 = vcmp.eq.s32.totalorder %v1238, %v1270
    %vm1387 = vcmp.eq.s32.totalorder %v1239, %v1266
    %vm1388 = vcmp.eq.s32.totalorder %v1239, %v1270
    %vm1389 = vcmp.eq.s32.totalorder %v1240, %v1266
    %vm1390 = vcmp.eq.s32.totalorder %v1240, %v1270
    %vm1391 = vcmp.eq.s32.totalorder %v1241, %v1266
    %vm1392 = vcmp.eq.s32.totalorder %v1241, %v1270
    %vm1393 = vcmp.eq.s32.totalorder %v1242, %v1266
    %vm1394 = vcmp.eq.s32.totalorder %v1242, %v1270
    %vm1395 = vcmp.eq.s32.totalorder %v1243, %v1266
    %vm1396 = vcmp.eq.s32.totalorder %v1243, %v1270
    %vm1397 = vcmp.eq.s32.totalorder %v1244, %v1266
    %vm1398 = vcmp.eq.s32.totalorder %v1244, %v1270
    %vm1399 = vcmp.eq.s32.totalorder %v1245, %v1266
    %vm1400 = vcmp.eq.s32.totalorder %v1245, %v1270
    %vm1401 = vcmp.eq.s32.totalorder %v1246, %v1266
    %vm1402 = vcmp.eq.s32.totalorder %v1246, %v1270
    %vm1403 = vcmp.eq.s32.totalorder %v1247, %v1266
    %vm1404 = vcmp.eq.s32.totalorder %v1247, %v1270
    %vm1405 = vcmp.eq.s32.totalorder %v1248, %v1266
    %vm1406 = vcmp.eq.s32.totalorder %v1248, %v1270
    %vm1407 = vcmp.eq.s32.totalorder %v1249, %v1266
    %vm1408 = vcmp.eq.s32.totalorder %v1249, %v1270
    %vm1409 = vcmp.eq.s32.totalorder %v1250, %v1266
    %vm1410 = vcmp.eq.s32.totalorder %v1250, %v1270
    %vm1411 = vcmp.eq.s32.totalorder %v1251, %v1266
    %vm1412 = vcmp.eq.s32.totalorder %v1251, %v1270
    %vm1413 = vcmp.eq.s32.totalorder %v1252, %v1266
    %vm1414 = vcmp.eq.s32.totalorder %v1252, %v1270
    %vm1415 = vcmp.eq.s32.totalorder %v1253, %v1266
    %vm1416 = vcmp.eq.s32.totalorder %v1253, %v1270
    %vm1417 = vcmp.eq.s32.totalorder %v1254, %v1266
    %vm1418 = vcmp.eq.s32.totalorder %v1254, %v1270
    %vm1419 = vcmp.eq.s32.totalorder %v1255, %v1266
    %vm1420 = vcmp.eq.s32.totalorder %v1255, %v1270
    %vm1421 = vcmp.eq.s32.totalorder %v1256, %v1266
    %vm1422 = vcmp.eq.s32.totalorder %v1256, %v1270
    %vm1423 = vcmp.eq.s32.totalorder %v1257, %v1266
    %vm1424 = vcmp.eq.s32.totalorder %v1257, %v1270
    %vm1425 = vcmp.eq.s32.totalorder %v1258, %v1266
    %vm1426 = vcmp.eq.s32.totalorder %v1258, %v1270
    %vm1427 = vcmp.eq.s32.totalorder %v1259, %v1266
    %vm1428 = vcmp.eq.s32.totalorder %v1259, %v1270
    %vm1429 = vcmp.eq.s32.totalorder %v1260, %v1266
    %vm1430 = vcmp.eq.s32.totalorder %v1260, %v1270
    %vm1431 = vcmp.eq.s32.totalorder %v1261, %v1266
    %vm1432 = vcmp.eq.s32.totalorder %v1261, %v1270
    %v1433 = vsel %vm1271, 1, 0
    %v1434 = vsel %vm1272, 1, 0
    %v1435 = vsel %vm1273, 1, 0
    %v1436 = vsel %vm1274, 1, 0
    %v1437 = vsel %vm1275, 1, 0
    %v1438 = vsel %vm1276, 1, 0
    %v1439 = vsel %vm1277, 1, 0
    %v1440 = vsel %vm1278, 1, 0
    %v1441 = vsel %vm1279, 1, 0
    %v1442 = vsel %vm1280, 1, 0
    %v1443 = vsel %vm1281, 1, 0
    %v1444 = vsel %vm1282, 1, 0
    %v1445 = vsel %vm1283, 1, 0
    %v1446 = vsel %vm1284, 1, 0
    %v1447 = vsel %vm1285, 1, 0
    %v1448 = vsel %vm1286, 1, 0
    %v1449 = vsel %vm1287, 1, 0
    %v1450 = vsel %vm1288, 1, 0
    %v1451 = vsel %vm1289, 1, 0
    %v1452 = vsel %vm1290, 1, 0
    %v1453 = vsel %vm1291, 1, 0
    %v1454 = vsel %vm1292, 1, 0
    %v1455 = vsel %vm1293, 1, 0
    %v1456 = vsel %vm1294, 1, 0
    %v1457 = vsel %vm1295, 1, 0
    %v1458 = vsel %vm1296, 1, 0
    %v1459 = vsel %vm1297, 1, 0
    %v1460 = vsel %vm1298, 1, 0
    %v1461 = vsel %vm1299, 1, 0
    %v1462 = vsel %vm1300, 1, 0
    %v1463 = vsel %vm1301, 1, 0
    %v1464 = vsel %vm1302, 1, 0
    %v1465 = vsel %vm1303, 1, 0
    %v1466 = vsel %vm1304, 1, 0
    %v1467 = vsel %vm1305, 1, 0
    %v1468 = vsel %vm1306, 1, 0
    %v1469 = vsel %vm1307, 1, 0
    %v1470 = vsel %vm1308, 1, 0
    %v1471 = vsel %vm1309, 1, 0
    %v1472 = vsel %vm1310, 1, 0
    %v1473 = vsel %vm1311, 1, 0
    %v1474 = vsel %vm1312, 1, 0
    %v1475 = vsel %vm1313, 1, 0
    %v1476 = vsel %vm1314, 1, 0
    %v1477 = vsel %vm1315, 1, 0
    %v1478 = vsel %vm1316, 1, 0
    %v1479 = vsel %vm1317, 1, 0
    %v1480 = vsel %vm1318, 1, 0
    %v1481 = vsel %vm1319, 1, 0
    %v1482 = vsel %vm1320, 1, 0
    %v1483 = vsel %vm1321, 1, 0
    %v1484 = vsel %vm1322, 1, 0
    %v1485 = vsel %vm1323, 1, 0
    %v1486 = vsel %vm1324, 1, 0
    %v1487 = vsel %vm1325, 1, 0
    %v1488 = vsel %vm1326, 1, 0
    %v1489 = vsel %vm1327, 1, 0
    %v1490 = vsel %vm1328, 1, 0
    %v1491 = vsel %vm1329, 1, 0
    %v1492 = vsel %vm1330, 1, 0
    %v1493 = vsel %vm1331, 1, 0
    %v1494 = vsel %vm1332, 1, 0
    %v1495 = vsel %vm1333, 1, 0
    %v1496 = vsel %vm1334, 1, 0
    %v1497 = vsel %vm1335, 1, 0
    %v1498 = vsel %vm1336, 1, 0
    %v1499 = vsel %vm1337, 1, 0
    %v1500 = vsel %vm1338, 1, 0
    %v1501 = vsel %vm1339, 1, 0
    %v1502 = vsel %vm1340, 1, 0
    %v1503 = vsel %vm1341, 1, 0
    %v1504 = vsel %vm1342, 1, 0
    %v1505 = vsel %vm1343, 1, 0
    %v1506 = vsel %vm1344, 1, 0
    %v1507 = vsel %vm1345, 1, 0
    %v1508 = vsel %vm1346, 1, 0
    %v1509 = vsel %vm1347, 1, 0
    %v1510 = vsel %vm1348, 1, 0
    %v1511 = vsel %vm1349, 1, 0
    %v1512 = vsel %vm1350, 1, 0
    %v1513 = vsel %vm1351, 1, 0
    %v1514 = vsel %vm1352, 1, 0
    %v1515 = vsel %vm1353, 1, 0
    %v1516 = vsel %vm1354, 1, 0
    %v1517 = vsel %vm1355, 1, 0
    %v1518 = vsel %vm1356, 1, 0
    %v1519 = vsel %vm1357, 1, 0
    %v1520 = vsel %vm1358, 1, 0
    %v1521 = vsel %vm1359, 1, 0
    %v1522 = vsel %vm1360, 1, 0
    %v1523 = vsel %vm1361, 1, 0
    %v1524 = vsel %vm1362, 1, 0
    %v1525 = vsel %vm1363, 1, 0
    %v1526 = vsel %vm1364, 1, 0
    %v1527 = vsel %vm1365, 1, 0
    %v1528 = vsel %vm1366, 1, 0
    %v1529 = vsel %vm1367, 1, 0
    %v1530 = vsel %vm1368, 1, 0
    %v1531 = vsel %vm1369, 1, 0
    %v1532 = vsel %vm1370, 1, 0
    %v1533 = vsel %vm1371, 1, 0
    %v1534 = vsel %vm1372, 1, 0
    %v1535 = vsel %vm1373, 1, 0
    %v1536 = vsel %vm1374, 1, 0
    %v1537 = vsel %vm1375, 1, 0
    %v1538 = vsel %vm1376, 1, 0
    %v1539 = vsel %vm1377, 1, 0
    %v1540 = vsel %vm1378, 1, 0
    %v1541 = vsel %vm1379, 1, 0
    %v1542 = vsel %vm1380, 1, 0
    %v1543 = vsel %vm1381, 1, 0
    %v1544 = vsel %vm1382, 1, 0
    %v1545 = vsel %vm1383, 1, 0
    %v1546 = vsel %vm1384, 1, 0
    %v1547 = vsel %vm1385, 1, 0
    %v1548 = vsel %vm1386, 1, 0
    %v1549 = vsel %vm1387, 1, 0
    %v1550 = vsel %vm1388, 1, 0
    %v1551 = vsel %vm1389, 1, 0
    %v1552 = vsel %vm1390, 1, 0
    %v1553 = vsel %vm1391, 1, 0
    %v1554 = vsel %vm1392, 1, 0
    %v1555 = vsel %vm1393, 1, 0
    %v1556 = vsel %vm1394, 1, 0
    %v1557 = vsel %vm1395, 1, 0
    %v1558 = vsel %vm1396, 1, 0
    %v1559 = vsel %vm1397, 1, 0
    %v1560 = vsel %vm1398, 1, 0
    %v1561 = vsel %vm1399, 1, 0
    %v1562 = vsel %vm1400, 1, 0
    %v1563 = vsel %vm1401, 1, 0
    %v1564 = vsel %vm1402, 1, 0
    %v1565 = vsel %vm1403, 1, 0
    %v1566 = vsel %vm1404, 1, 0
    %v1567 = vsel %vm1405, 1, 0
    %v1568 = vsel %vm1406, 1, 0
    %v1569 = vsel %vm1407, 1, 0
    %v1570 = vsel %vm1408, 1, 0
    %v1571 = vsel %vm1409, 1, 0
    %v1572 = vsel %vm1410, 1, 0
    %v1573 = vsel %vm1411, 1, 0
    %v1574 = vsel %vm1412, 1, 0
    %v1575 = vsel %vm1413, 1, 0
    %v1576 = vsel %vm1414, 1, 0
    %v1577 = vsel %vm1415, 1, 0
    %v1578 = vsel %vm1416, 1, 0
    %v1579 = vsel %vm1417, 1, 0
    %v1580 = vsel %vm1418, 1, 0
    %v1581 = vsel %vm1419, 1, 0
    %v1582 = vsel %vm1420, 1, 0
    %v1583 = vsel %vm1421, 1, 0
    %v1584 = vsel %vm1422, 1, 0
    %v1585 = vsel %vm1423, 1, 0
    %v1586 = vsel %vm1424, 1, 0
    %v1587 = vsel %vm1425, 1, 0
    %v1588 = vsel %vm1426, 1, 0
    %v1589 = vsel %vm1427, 1, 0
    %v1590 = vsel %vm1428, 1, 0
    %v1591 = vsel %vm1429, 1, 0
    %v1592 = vsel %vm1430, 1, 0
    %v1593 = vsel %vm1431, 1, 0
    %v1594 = vsel %vm1432, 1, 0
    %v1595 = vcvt.s32.f32 %v1433
    %v1596 = vcvt.s32.f32 %v1434
    %v1597 = vcvt.s32.f32 %v1435
    %v1598 = vcvt.s32.f32 %v1436
    %v1599 = vcvt.s32.f32 %v1437
    %v1600 = vcvt.s32.f32 %v1438
    %v1601 = vcvt.s32.f32 %v1439
    %v1602 = vcvt.s32.f32 %v1440
    %v1603 = vcvt.s32.f32 %v1441
    %v1604 = vcvt.s32.f32 %v1442
    %v1605 = vcvt.s32.f32 %v1443
    %v1606 = vcvt.s32.f32 %v1444
    %v1607 = vcvt.s32.f32 %v1445
    %v1608 = vcvt.s32.f32 %v1446
    %v1609 = vcvt.s32.f32 %v1447
    %v1610 = vcvt.s32.f32 %v1448
    %v1611 = vcvt.s32.f32 %v1449
    %v1612 = vcvt.s32.f32 %v1450
    %v1613 = vcvt.s32.f32 %v1451
    %v1614 = vcvt.s32.f32 %v1452
    %v1615 = vcvt.s32.f32 %v1453
    %v1616 = vcvt.s32.f32 %v1454
    %v1617 = vcvt.s32.f32 %v1455
    %v1618 = vcvt.s32.f32 %v1456
    %v1619 = vcvt.s32.f32 %v1457
    %v1620 = vcvt.s32.f32 %v1458
    %v1621 = vcvt.s32.f32 %v1459
    %v1622 = vcvt.s32.f32 %v1460
    %v1623 = vcvt.s32.f32 %v1461
    %v1624 = vcvt.s32.f32 %v1462
    %v1625 = vcvt.s32.f32 %v1463
    %v1626 = vcvt.s32.f32 %v1464
    %v1627 = vcvt.s32.f32 %v1465
    %v1628 = vcvt.s32.f32 %v1466
    %v1629 = vcvt.s32.f32 %v1467
    %v1630 = vcvt.s32.f32 %v1468
    %v1631 = vcvt.s32.f32 %v1469
    %v1632 = vcvt.s32.f32 %v1470
    %v1633 = vcvt.s32.f32 %v1471
    %v1634 = vcvt.s32.f32 %v1472
    %v1635 = vcvt.s32.f32 %v1473
    %v1636 = vcvt.s32.f32 %v1474
    %v1637 = vcvt.s32.f32 %v1475
    %v1638 = vcvt.s32.f32 %v1476
    %v1639 = vcvt.s32.f32 %v1477
    %v1640 = vcvt.s32.f32 %v1478
    %v1641 = vcvt.s32.f32 %v1479
    %v1642 = vcvt.s32.f32 %v1480
    %v1643 = vcvt.s32.f32 %v1481
    %v1644 = vcvt.s32.f32 %v1482
    %v1645 = vcvt.s32.f32 %v1483
    %v1646 = vcvt.s32.f32 %v1484
    %v1647 = vcvt.s32.f32 %v1485
    %v1648 = vcvt.s32.f32 %v1486
    %v1649 = vcvt.s32.f32 %v1487
    %v1650 = vcvt.s32.f32 %v1488
    %v1651 = vcvt.s32.f32 %v1489
    %v1652 = vcvt.s32.f32 %v1490
    %v1653 = vcvt.s32.f32 %v1491
    %v1654 = vcvt.s32.f32 %v1492
    %v1655 = vcvt.s32.f32 %v1493
    %v1656 = vcvt.s32.f32 %v1494
    %v1657 = vcvt.s32.f32 %v1495
    %v1658 = vcvt.s32.f32 %v1496
    %v1659 = vcvt.s32.f32 %v1497
    %v1660 = vcvt.s32.f32 %v1498
    %v1661 = vcvt.s32.f32 %v1499
    %v1662 = vcvt.s32.f32 %v1500
    %v1663 = vcvt.s32.f32 %v1501
    %v1664 = vcvt.s32.f32 %v1502
    %v1665 = vcvt.s32.f32 %v1503
    %v1666 = vcvt.s32.f32 %v1504
    %v1667 = vcvt.s32.f32 %v1505
    %v1668 = vcvt.s32.f32 %v1506
    %v1669 = vcvt.s32.f32 %v1507
    %v1670 = vcvt.s32.f32 %v1508
    %v1671 = vcvt.s32.f32 %v1509
    %v1672 = vcvt.s32.f32 %v1510
    %v1673 = vcvt.s32.f32 %v1511
    %v1674 = vcvt.s32.f32 %v1512
    %v1675 = vcvt.s32.f32 %v1513
    %v1676 = vcvt.s32.f32 %v1514
    %v1677 = vcvt.s32.f32 %v1515
    %v1678 = vcvt.s32.f32 %v1516
    %v1679 = vcvt.s32.f32 %v1517
    %v1680 = vcvt.s32.f32 %v1518
    %v1681 = vcvt.s32.f32 %v1519
    %v1682 = vcvt.s32.f32 %v1520
    %v1683 = vcvt.s32.f32 %v1521
    %v1684 = vcvt.s32.f32 %v1522
    %v1685 = vcvt.s32.f32 %v1523
    %v1686 = vcvt.s32.f32 %v1524
    %v1687 = vcvt.s32.f32 %v1525
    %v1688 = vcvt.s32.f32 %v1526
    %v1689 = vcvt.s32.f32 %v1527
    %v1690 = vcvt.s32.f32 %v1528
    %v1691 = vcvt.s32.f32 %v1529
    %v1692 = vcvt.s32.f32 %v1530
    %v1693 = vcvt.s32.f32 %v1531
    %v1694 = vcvt.s32.f32 %v1532
    %v1695 = vcvt.s32.f32 %v1533
    %v1696 = vcvt.s32.f32 %v1534
    %v1697 = vcvt.s32.f32 %v1535
    %v1698 = vcvt.s32.f32 %v1536
    %v1699 = vcvt.s32.f32 %v1537
    %v1700 = vcvt.s32.f32 %v1538
    %v1701 = vcvt.s32.f32 %v1539
    %v1702 = vcvt.s32.f32 %v1540
    %v1703 = vcvt.s32.f32 %v1541
    %v1704 = vcvt.s32.f32 %v1542
    %v1705 = vcvt.s32.f32 %v1543
    %v1706 = vcvt.s32.f32 %v1544
    %v1707 = vcvt.s32.f32 %v1545
    %v1708 = vcvt.s32.f32 %v1546
    %v1709 = vcvt.s32.f32 %v1547
    %v1710 = vcvt.s32.f32 %v1548
    %v1711 = vcvt.s32.f32 %v1549
    %v1712 = vcvt.s32.f32 %v1550
    %v1713 = vcvt.s32.f32 %v1551
    %v1714 = vcvt.s32.f32 %v1552
    %v1715 = vcvt.s32.f32 %v1553
    %v1716 = vcvt.s32.f32 %v1554
    %v1717 = vcvt.s32.f32 %v1555
    %v1718 = vcvt.s32.f32 %v1556
    %v1719 = vcvt.s32.f32 %v1557
    %v1720 = vcvt.s32.f32 %v1558
    %v1721 = vcvt.s32.f32 %v1559
    %v1722 = vcvt.s32.f32 %v1560
    %v1723 = vcvt.s32.f32 %v1561
    %v1724 = vcvt.s32.f32 %v1562
    %v1725 = vcvt.s32.f32 %v1563
    %v1726 = vcvt.s32.f32 %v1564
    %v1727 = vcvt.s32.f32 %v1565
    %v1728 = vcvt.s32.f32 %v1566
    %v1729 = vcvt.s32.f32 %v1567
    %v1730 = vcvt.s32.f32 %v1568
    %v1731 = vcvt.s32.f32 %v1569
    %v1732 = vcvt.s32.f32 %v1570
    %v1733 = vcvt.s32.f32 %v1571
    %v1734 = vcvt.s32.f32 %v1572
    %v1735 = vcvt.s32.f32 %v1573
    %v1736 = vcvt.s32.f32 %v1574
    %v1737 = vcvt.s32.f32 %v1575
    %v1738 = vcvt.s32.f32 %v1576
    %v1739 = vcvt.s32.f32 %v1577
    %v1740 = vcvt.s32.f32 %v1578
    %v1741 = vcvt.s32.f32 %v1579
    %v1742 = vcvt.s32.f32 %v1580
    %v1743 = vcvt.s32.f32 %v1581
    %v1744 = vcvt.s32.f32 %v1582
    %v1745 = vcvt.s32.f32 %v1583
    %v1746 = vcvt.s32.f32 %v1584
    %v1747 = vcvt.s32.f32 %v1585
    %v1748 = vcvt.s32.f32 %v1586
    %v1749 = vcvt.s32.f32 %v1587
    %v1750 = vcvt.s32.f32 %v1588
    %v1751 = vcvt.s32.f32 %v1589
    %v1752 = vcvt.s32.f32 %v1590
    %v1753 = vcvt.s32.f32 %v1591
    %v1754 = vcvt.s32.f32 %v1592
    %v1755 = vcvt.s32.f32 %v1593
    %v1756 = vcvt.s32.f32 %v1594
    %v1758 = vsel %vm533, %v1179, 0
    %1760 = vmatprep.subr.mxu0 %v1626
    %1761 = vmatpush1.msra.mxu0 %v1625
    %1762 = vmatprep.subr.mxu0 %v1624
    %1763 = vmatpush1.msra.mxu0 %v1623
    %1764 = vmatprep.subr.mxu0 %v1622
    %1765 = vmatpush1.msra.mxu0 %v1621
    %1766 = vmatprep.subr.mxu0 %v1620
    %1767 = vmatpush1.msra.mxu0 %v1619
    %1768 = vmatprep.subr.mxu0 %v1618
    %1769 = vmatpush1.msra.mxu0 %v1617
    %1770 = vmatprep.subr.mxu0 %v1616
    %1771 = vmatpush1.msra.mxu0 %v1615
    %1772 = vmatprep.subr.mxu0 %v1614
    %1773 = vmatpush1.msra.mxu0 %v1613
    %1774 = vmatprep.subr.mxu0 %v1612
    %1775 = vmatpush1.msra.mxu0 %v1611
    %1776 = vmatprep.subr.mxu0 %v1610
    %1777 = vmatpush1.msra.mxu0 %v1609
    %1778 = vmatprep.subr.mxu0 %v1608
    %1779 = vmatpush1.msra.mxu0 %v1607
    %1780 = vmatprep.subr.mxu0 %v1606
    %1781 = vmatpush1.msra.mxu0 %v1605
    %1782 = vmatprep.subr.mxu0 %v1604
    %1783 = vmatpush1.msra.mxu0 %v1603
    %1784 = vmatprep.subr.mxu0 %v1602
    %1785 = vmatpush1.msra.mxu0 %v1601
    %1786 = vmatprep.subr.mxu0 %v1600
    %1787 = vmatpush1.msra.mxu0 %v1599
    %1788 = vmatprep.subr.mxu0 %v1598
    %1789 = vmatpush1.msra.mxu0 %v1597
    %1790 = vmatprep.subr.mxu0 %v1596
    %1791 = vmatpush1.msra.mxu0 %v1595
    %1792 = vmatprep.subr.mxu0 %v1658
    %1793 = vmatpush2.msra.mxu0 %v1657
    %1794 = vmatprep.subr.mxu0 %v1656
    %1795 = vmatpush2.msra.mxu0 %v1655
    %1796 = vmatprep.subr.mxu0 %v1654
    %1797 = vmatpush2.msra.mxu0 %v1653
    %1798 = vmatprep.subr.mxu0 %v1652
    %1799 = vmatpush2.msra.mxu0 %v1651
    %1800 = vmatprep.subr.mxu0 %v1650
    %1801 = vmatpush2.msra.mxu0 %v1649
    %1802 = vmatprep.subr.mxu0 %v1648
    %1803 = vmatpush2.msra.mxu0 %v1647
    %1804 = vmatprep.subr.mxu0 %v1646
    %1805 = vmatpush2.msra.mxu0 %v1645
    %1806 = vmatprep.subr.mxu0 %v1644
    %1807 = vmatpush2.msra.mxu0 %v1643
    %1808 = vmatprep.subr.mxu0 %v1642
    %1809 = vmatpush2.msra.mxu0 %v1641
    %1810 = vmatprep.subr.mxu0 %v1640
    %1811 = vmatpush2.msra.mxu0 %v1639
    %1812 = vmatprep.subr.mxu0 %v1638
    %1813 = vmatpush2.msra.mxu0 %v1637
    %1814 = vmatprep.subr.mxu0 %v1636
    %1815 = vmatpush2.msra.mxu0 %v1635
    %1816 = vmatprep.subr.mxu0 %v1634
    %1817 = vmatpush2.msra.mxu0 %v1633
    %1818 = vmatprep.subr.mxu0 %v1632
    %1819 = vmatpush2.msra.mxu0 %v1631
    %1820 = vmatprep.subr.mxu0 %v1630
    %1821 = vmatpush2.msra.mxu0 %v1629
    %1822 = vmatprep.subr.mxu0 %v1628
    %1823 = vmatpush2.msra.mxu0 %v1627
    %1824 = vmatprep.mubr.f32.mxu0 %v1175
    %1825 = vmatmul.mubr.f32.gmra.mxu0 %v1174
    %v1826 = vpop.f32.mrf.mxu0
    %v1827 = vadd.f32 0.0, %v1826
    %v1828 = vpop.f32.mrf.mxu0
    %v1829 = vadd.f32 0.0, %v1828
    %1830 = vdwg.mxu0
    %1831 = vmatprep.subr.mxu0 %v1690
    %1832 = vmatpush1.msra.mxu0 %v1689
    %1833 = vmatprep.subr.mxu0 %v1688
    %1834 = vmatpush1.msra.mxu0 %v1687
    %1835 = vmatprep.subr.mxu0 %v1686
    %1836 = vmatpush1.msra.mxu0 %v1685
    %1837 = vmatprep.subr.mxu0 %v1684
    %1838 = vmatpush1.msra.mxu0 %v1683
    %1839 = vmatprep.subr.mxu0 %v1682
    %1840 = vmatpush1.msra.mxu0 %v1681
    %1841 = vmatprep.subr.mxu0 %v1680
    %1842 = vmatpush1.msra.mxu0 %v1679
    %1843 = vmatprep.subr.mxu0 %v1678
    %1844 = vmatpush1.msra.mxu0 %v1677
    %1845 = vmatprep.subr.mxu0 %v1676
    %1846 = vmatpush1.msra.mxu0 %v1675
    %1847 = vmatprep.subr.mxu0 %v1674
    %1848 = vmatpush1.msra.mxu0 %v1673
    %1849 = vmatprep.subr.mxu0 %v1672
    %1850 = vmatpush1.msra.mxu0 %v1671
    %1851 = vmatprep.subr.mxu0 %v1670
    %1852 = vmatpush1.msra.mxu0 %v1669
    %1853 = vmatprep.subr.mxu0 %v1668
    %1854 = vmatpush1.msra.mxu0 %v1667
    %1855 = vmatprep.subr.mxu0 %v1666
    %1856 = vmatpush1.msra.mxu0 %v1665
    %1857 = vmatprep.subr.mxu0 %v1664
    %1858 = vmatpush1.msra.mxu0 %v1663
    %1859 = vmatprep.subr.mxu0 %v1662
    %1860 = vmatpush1.msra.mxu0 %v1661
    %1861 = vmatprep.subr.mxu0 %v1660
    %1862 = vmatpush1.msra.mxu0 %v1659
    %1863 = vmatprep.subr.mxu0 %v1722
    %1864 = vmatpush2.msra.mxu0 %v1721
    %1865 = vmatprep.subr.mxu0 %v1720
    %1866 = vmatpush2.msra.mxu0 %v1719
    %1867 = vmatprep.subr.mxu0 %v1718
    %1868 = vmatpush2.msra.mxu0 %v1717
    %1869 = vmatprep.subr.mxu0 %v1716
    %1870 = vmatpush2.msra.mxu0 %v1715
    %1871 = vmatprep.subr.mxu0 %v1714
    %1872 = vmatpush2.msra.mxu0 %v1713
    %1873 = vmatprep.subr.mxu0 %v1712
    %1874 = vmatpush2.msra.mxu0 %v1711
    %1875 = vmatprep.subr.mxu0 %v1710
    %1876 = vmatpush2.msra.mxu0 %v1709
    %1877 = vmatprep.subr.mxu0 %v1708
    %1878 = vmatpush2.msra.mxu0 %v1707
    %1879 = vmatprep.subr.mxu0 %v1706
    %1880 = vmatpush2.msra.mxu0 %v1705
    %1881 = vmatprep.subr.mxu0 %v1704
    %1882 = vmatpush2.msra.mxu0 %v1703
    %1883 = vmatprep.subr.mxu0 %v1702
    %1884 = vmatpush2.msra.mxu0 %v1701
    %1885 = vmatprep.subr.mxu0 %v1700
    %1886 = vmatpush2.msra.mxu0 %v1699
    %1887 = vmatprep.subr.mxu0 %v1698
    %1888 = vmatpush2.msra.mxu0 %v1697
    %1889 = vmatprep.subr.mxu0 %v1696
    %1890 = vmatpush2.msra.mxu0 %v1695
    %1891 = vmatprep.subr.mxu0 %v1694
    %1892 = vmatpush2.msra.mxu0 %v1693
    %1893 = vmatprep.subr.mxu0 %v1692
    %1894 = vmatpush2.msra.mxu0 %v1691
    %1895 = vmatprep.mubr.f32.mxu0 %v1177
    %1896 = vmatmul.mubr.f32.gmra.mxu0 %v1176
    %v1897 = vpop.f32.mrf.mxu0
    %v1898 = vadd.f32 %v1827, %v1897
    %v1899 = vpop.f32.mrf.mxu0
    %v1900 = vadd.f32 %v1829, %v1899
    %1901 = vdwg.mxu0
    %1902 = vmatprep.subr.mxu0 %v1754
    %1903 = vmatpush1.msra.mxu0 %v1753
    %1904 = vmatprep.subr.mxu0 %v1752
    %1905 = vmatpush1.msra.mxu0 %v1751
    %1906 = vmatprep.subr.mxu0 %v1750
    %1907 = vmatpush1.msra.mxu0 %v1749
    %1908 = vmatprep.subr.mxu0 %v1748
    %1909 = vmatpush1.msra.mxu0 %v1747
    %1910 = vmatprep.subr.mxu0 %v1746
    %1911 = vmatpush1.msra.mxu0 %v1745
    %1912 = vmatprep.subr.mxu0 %v1744
    %1913 = vmatpush1.msra.mxu0 %v1743
    %1914 = vmatprep.subr.mxu0 %v1742
    %1915 = vmatpush1.msra.mxu0 %v1741
    %1916 = vmatprep.subr.mxu0 %v1740
    %1917 = vmatpush1.msra.mxu0 %v1739
    %1918 = vmatprep.subr.mxu0 %v1738
    %1919 = vmatpush1.msra.mxu0 %v1737
    %1920 = vmatprep.subr.mxu0 %v1736
    %1921 = vmatpush1.msra.mxu0 %v1735
    %1922 = vmatprep.subr.mxu0 %v1734
    %1923 = vmatpush1.msra.mxu0 %v1733
    %1924 = vmatprep.subr.mxu0 %v1732
    %1925 = vmatpush1.msra.mxu0 %v1731
    %1926 = vmatprep.subr.mxu0 %v1730
    %1927 = vmatpush1.msra.mxu0 %v1729
    %1928 = vmatprep.subr.mxu0 %v1728
    %1929 = vmatpush1.msra.mxu0 %v1727
    %1930 = vmatprep.subr.mxu0 %v1726
    %1931 = vmatpush1.msra.mxu0 %v1725
    %1932 = vmatprep.subr.mxu0 %v1724
    %1933 = vmatpush1.msra.mxu0 %v1723
    %1934 = vmatprep.subr.mxu0 0.0
    %1935 = vmatpush2.msra.mxu0 0.0
    %1936 = vmatprep.subr.mxu0 0.0
    %1937 = vmatpush2.msra.mxu0 0.0
    %1938 = vmatprep.subr.mxu0 0.0
    %1939 = vmatpush2.msra.mxu0 0.0
    %1940 = vmatprep.subr.mxu0 0.0
    %1941 = vmatpush2.msra.mxu0 0.0
    %1942 = vmatprep.subr.mxu0 0.0
    %1943 = vmatpush2.msra.mxu0 0.0
    %1944 = vmatprep.subr.mxu0 0.0
    %1945 = vmatpush2.msra.mxu0 0.0
    %1946 = vmatprep.subr.mxu0 0.0
    %1947 = vmatpush2.msra.mxu0 0.0
    %1948 = vmatprep.subr.mxu0 0.0
    %1949 = vmatpush2.msra.mxu0 0.0
    %1950 = vmatprep.subr.mxu0 0.0
    %1951 = vmatpush2.msra.mxu0 0.0
    %1952 = vmatprep.subr.mxu0 0.0
    %1953 = vmatpush2.msra.mxu0 0.0
    %1954 = vmatprep.subr.mxu0 0.0
    %1955 = vmatpush2.msra.mxu0 0.0
    %1956 = vmatprep.subr.mxu0 0.0
    %1957 = vmatpush2.msra.mxu0 0.0
    %1958 = vmatprep.subr.mxu0 0.0
    %1959 = vmatpush2.msra.mxu0 0.0
    %1960 = vmatprep.subr.mxu0 0.0
    %1961 = vmatpush2.msra.mxu0 0.0
    %1962 = vmatprep.subr.mxu0 0.0
    %1963 = vmatpush2.msra.mxu0 0.0
    %1964 = vmatprep.subr.mxu0 %v1756
    %1965 = vmatpush2.msra.mxu0 %v1755
    %1966 = vmatprep.mubr.f32.mxu0 %v1758
    %1967 = vmatmul.mubr.f32.gmra.mxu0 %v1178
    %v1968 = vpop.f32.mrf.mxu0
    %v1969 = vadd.f32 %v1898, %v1968
    %v1970 = vpop.f32.mrf.mxu0
    %v1971 = vadd.f32 %v1900, %v1970
    %1972 = vdwg.mxu0
    %1975 = vrot.lane.b32.xlu0 %v1969, 11
    %v1976 = vpop.permute.xlu0 %1975
    %1977 = vrot.lane.b32.xlu0 %v1971, 11
    %v1978 = vpop.permute.xlu0 %1977
    %vm1979 = vcmask 89088
    %v1980 = vsel %vm1979, %v1976, %v1978
    %v1983 = vsel %vm1979, 0.0, %v1976
    %vm1984 = vcmask 678912
    %v1985 = vsel %vm1984, %v1980, 0.0
    %1988 = vrot.lane.b32.xlu0 %v1983, 127
    %v1989 = vpop.permute.xlu0 %1988
    %1990 = vrot.lane.b32.xlu0 %v1985, 127
    %v1991 = vpop.permute.xlu0 %1990
    %v1992 = vsel %vm94, %v1989, %v1991
    %1995 = vrot.lane.b32.xlu0 %v1983, 126
    %v1996 = vpop.permute.xlu0 %1995
    %1997 = vrot.lane.b32.xlu0 %v1985, 126
    %v1998 = vpop.permute.xlu0 %1997
    %v1999 = vsel %vm118, %v1996, %v1998
    %2002 = vrot.lane.b32.xlu0 %v1983, 118
    %v2003 = vpop.permute.xlu0 %2002
    %2004 = vrot.lane.b32.xlu0 %v1985, 118
    %v2005 = vpop.permute.xlu0 %2004
    %vm2006 = vcmask 965632
    %v2007 = vsel %vm2006, %v2003, %v2005
    %2010 = vrot.lane.b32.xlu0 %v1983, 117
    %v2011 = vpop.permute.xlu0 %2010
    %2012 = vrot.lane.b32.xlu0 %v1985, 117
    %v2013 = vpop.permute.xlu0 %2012
    %vm2014 = vcmask 957440
    %v2015 = vsel %vm2014, %v2011, %v2013
    %2018 = vrot.lane.b32.xlu0 %v1983, 116
    %v2019 = vpop.permute.xlu0 %2018
    %2020 = vrot.lane.b32.xlu0 %v1985, 116
    %v2021 = vpop.permute.xlu0 %2020
    %vm2022 = vcmask 949248
    %v2023 = vsel %vm2022, %v2019, %v2021
    %2026 = vrot.lane.b32.xlu0 %v1983, 108
    %v2027 = vpop.permute.xlu0 %2026
    %2028 = vrot.lane.b32.xlu0 %v1985, 108
    %v2029 = vpop.permute.xlu0 %2028
    %v2030 = vsel %vm190, %v2027, %v2029
    %2033 = vrot.lane.b32.xlu0 %v1983, 107
    %v2034 = vpop.permute.xlu0 %2033
    %2035 = vrot.lane.b32.xlu0 %v1985, 107
    %v2036 = vpop.permute.xlu0 %2035
    %vm2037 = vcmask 875520
    %v2038 = vsel %vm2037, %v2034, %v2036
    %2041 = vrot.lane.b32.xlu0 %v1983, 106
    %v2042 = vpop.permute.xlu0 %2041
    %2043 = vrot.lane.b32.xlu0 %v1985, 106
    %v2044 = vpop.permute.xlu0 %2043
    %vm2045 = vcmask 867328
    %v2046 = vsel %vm2045, %v2042, %v2044
    %v2049 = vld [vmem:[%s7] sm:$0xff]
    %v2050 = vld [vmem:[%s7 + $0x8] sm:$0xff]
    %v2052 = vsel %vm275, %v2049, 0
    %v2055 = vsel %vm275, %v2050, 0
    %2057 = vmatprep.subr.mxu0 0.0
    %2058 = vmatpush1.msra.mxu0 0.0
    %2059 = vmatprep.subr.mxu0 0.0
    %2060 = vmatpush1.msra.mxu0 0.0
    %2061 = vmatprep.subr.mxu0 0.0
    %2062 = vmatpush1.msra.mxu0 0.0
    %2063 = vmatprep.subr.mxu0 0.0
    %2064 = vmatpush1.msra.mxu0 0.0
    %2065 = vmatprep.subr.mxu0 0.0
    %2066 = vmatpush1.msra.mxu0 0.0
    %2067 = vmatprep.subr.mxu0 0.0
    %2068 = vmatpush1.msra.mxu0 0.0
    %2069 = vmatprep.subr.mxu0 0.0
    %2070 = vmatpush1.msra.mxu0 0.0
    %2071 = vmatprep.subr.mxu0 %v2044
    %2072 = vmatpush1.msra.mxu0 %v2046
    %2073 = vmatprep.subr.mxu0 %v2036
    %2074 = vmatpush1.msra.mxu0 %v2038
    %2075 = vmatprep.subr.mxu0 %v2029
    %2076 = vmatpush1.msra.mxu0 %v2030
    %2077 = vmatprep.subr.mxu0 %v2021
    %2078 = vmatpush1.msra.mxu0 %v2023
    %2079 = vmatprep.subr.mxu0 %v2013
    %2080 = vmatpush1.msra.mxu0 %v2015
    %2081 = vmatprep.subr.mxu0 %v2005
    %2082 = vmatpush1.msra.mxu0 %v2007
    %2083 = vmatprep.subr.mxu0 %v1998
    %2084 = vmatpush1.msra.mxu0 %v1999
    %2085 = vmatprep.subr.mxu0 %v1991
    %2086 = vmatpush1.msra.mxu0 %v1992
    %2087 = vmatprep.subr.mxu0 %v1985
    %2088 = vmatpush1.msra.mxu0 %v1983
    %2089 = vmatprep.subr.mxu0 0.0
    %2090 = vmatpush2.msra.mxu0 0.0
    %2091 = vmatprep.subr.mxu0 0.0
    %2092 = vmatpush2.msra.mxu0 0.0
    %2093 = vmatprep.subr.mxu0 0.0
    %2094 = vmatpush2.msra.mxu0 0.0
    %2095 = vmatprep.subr.mxu0 0.0
    %2096 = vmatpush2.msra.mxu0 0.0
    %2097 = vmatprep.subr.mxu0 0.0
    %2098 = vmatpush2.msra.mxu0 0.0
    %2099 = vmatprep.subr.mxu0 0.0
    %2100 = vmatpush2.msra.mxu0 0.0
    %2101 = vmatprep.subr.mxu0 0.0
    %2102 = vmatpush2.msra.mxu0 0.0
    %2103 = vmatprep.subr.mxu0 0.0
    %2104 = vmatpush2.msra.mxu0 0.0
    %2105 = vmatprep.subr.mxu0 0.0
    %2106 = vmatpush2.msra.mxu0 0.0
    %2107 = vmatprep.subr.mxu0 0.0
    %2108 = vmatpush2.msra.mxu0 0.0
    %2109 = vmatprep.subr.mxu0 0.0
    %2110 = vmatpush2.msra.mxu0 0.0
    %2111 = vmatprep.subr.mxu0 0.0
    %2112 = vmatpush2.msra.mxu0 0.0
    %2113 = vmatprep.subr.mxu0 0.0
    %2114 = vmatpush2.msra.mxu0 0.0
    %2115 = vmatprep.subr.mxu0 0.0
    %2116 = vmatpush2.msra.mxu0 0.0
    %2117 = vmatprep.subr.mxu0 0.0
    %2118 = vmatpush2.msra.mxu0 0.0
    %2119 = vmatprep.subr.mxu0 0.0
    %2120 = vmatpush2.msra.mxu0 0.0
    %2121 = vmatprep.mubr.f32.mxu0 0.0
    %2122 = vmatmul.mubr.f32.gmra.mxu0 %v2052
    %v2123 = vpop.f32.mrf.mxu0
    %v2124 = vadd.f32 0.0, %v2123
    %v2125 = vpop.f32.mrf.mxu0
    %v2126 = vadd.f32 0.0, %v2125
    %2127 = vmatprep.mubr.f32.mxu0 0.0
    %2128 = vmatmul.mubr.f32.gmra.mxu0 %v2055
    %v2129 = vpop.f32.mrf.mxu0
    %v2130 = vadd.f32 0.0, %v2129
    %v2131 = vpop.f32.mrf.mxu0
    %v2132 = vadd.f32 0.0, %v2131
    %2133 = vdwg.mxu0
    %v2135 = vlaneseq
    %v2136 = vshrl.u32 %v2135, 7
    %v2137 = vsub.s32 0, %v2136
    %v2138 = vrot.slane %v1108, %v2137
    %v2139 = vlaneseq
    %v2140 = vshrl.u32 %v2139, 7
    %v2141 = vsub.s32 1, %v2140
    %v2142 = vrot.slane %v1108, %v2141
    %v2145 = vmul.f32 %v2124, %v2138
    %v2146 = vmul.f32 %v2126, %v2142
    %v2147 = vmul.f32 %v2130, %v2138
    %v2148 = vmul.f32 %v2132, %v2142
    %v2149 = vsel %vm275, %v2146, 0.0
    %v2150 = vadd.f32 %v2145, %v2149
    %2151 = vadd.xlane.f32.xlu0 %v2150
    %v2152 = vpop.xlane.xlu0 %2151
    %v2153 = vsel %vm275, %v2148, 0.0
    %v2154 = vadd.f32 %v2147, %v2153
    %2155 = vadd.xlane.f32.xlu0 %v2154
    %v2156 = vpop.xlane.xlu0 %2155
    %v2157 = vmul.f32 %v2152, 0.0078125
    %v2158 = vmul.f32 %v2156, 0.0078125
    %v2159 = vmul.f32 %v2145, %v2124
    %v2160 = vmul.f32 %v2146, %v2126
    %v2161 = vmul.f32 %v2147, %v2130
    %v2162 = vmul.f32 %v2148, %v2132
    %v2163 = vsel %vm275, %v2160, 0.0
    %v2164 = vadd.f32 %v2159, %v2163
    %2165 = vadd.xlane.f32.xlu0 %v2164
    %v2166 = vpop.xlane.xlu0 %2165
    %v2167 = vsel %vm275, %v2162, 0.0
    %v2168 = vadd.f32 %v2161, %v2167
    %2169 = vadd.xlane.f32.xlu0 %v2168
    %v2170 = vpop.xlane.xlu0 %2169
    %v2171 = vmul.f32 %v2166, 0.0078125
    %v2172 = vmul.f32 %v2170, 0.0078125
    %v2173 = vmul.f32 %v2157, %v2157
    %v2174 = vmul.f32 %v2158, %v2158
    %v2175 = vsub.f32 %v2171, %v2173
    %v2176 = vsub.f32 %v2172, %v2174
    %v2177 = vmax.f32 %v2175, 0.0
    %v2178 = vmax.f32 %v2176, 0.0
    %v2179 = vld [vmem:[%s8] sm:$0xff]
    %v2180 = vld [vmem:[%s8 + $0x8] sm:$0xff]
    %v2181 = vadd.f32 %v2177, 1e-05
    %v2182 = vadd.f32 %v2178, 1e-05
    %v2183 = vrsqrt.pop %v2181
    %v2184 = vrsqrt.pop %v2182
    %v2185 = vmul.f32 %v2179, %v2183
    %v2186 = vmul.f32 %v2180, %v2184
    %v2187 = vld [vmem:[%s9] sm:$0xff]
    %v2188 = vld [vmem:[%s9 + $0x8] sm:$0xff]
    %v2189 = vmul.f32 %v2157, %v2185
    %v2190 = vmul.f32 %v2158, %v2186
    %v2191 = vsub.f32 %v2187, %v2189
    %v2192 = vsub.f32 %v2188, %v2190
    %2194 = vset.pattern.permute.xlu0 0
    %2195 = vperm.xlu0 %2194, %v2185
    %v2196 = vpop.permute.xlu0 %2195
    %2199 = vset.pattern.permute.xlu0 0
    %2200 = vperm.xlu0 %2199, %v2186
    %v2201 = vpop.permute.xlu0 %2200
    %v2203 = vmul.f32 %v2124, %v2196
    %v2204 = vmul.f32 %v2126, %v2196
    %v2205 = vmul.f32 %v2130, %v2201
    %v2206 = vmul.f32 %v2132, %v2201
    %2208 = vset.pattern.permute.xlu0 0
    %2209 = vperm.xlu0 %2208, %v2191
    %v2210 = vpop.permute.xlu0 %2209
    %2213 = vset.pattern.permute.xlu0 0
    %2214 = vperm.xlu0 %2213, %v2192
    %v2215 = vpop.permute.xlu0 %2214
    %v2217 = vadd.f32 %v2203, %v2210
    %v2218 = vadd.f32 %v2204, %v2210
    %v2219 = vadd.f32 %v2205, %v2215
    %v2220 = vadd.f32 %v2206, %v2215
    %v2221 = vmax.f32 %v2217, 0.0
    %v2222 = vmax.f32 %v2218, 0.0
    %v2223 = vmax.f32 %v2219, 0.0
    %v2224 = vmax.f32 %v2220, 0.0
    %v2225 = vmul.f32 %v2221, %v2138
    %v2226 = vmul.f32 %v2222, %v2142
    %v2227 = vmul.f32 %v2223, %v2138
    %v2228 = vmul.f32 %v2224, %v2142
    %2233 = vrot.lane.b32.xlu0 %v2225, 11
    %v2234 = vpop.permute.xlu0 %2233
    %2235 = vrot.lane.b32.xlu0 %v2226, 11
    %v2236 = vpop.permute.xlu0 %2235
    %2237 = vrot.lane.b32.xlu0 %v2227, 11
    %v2238 = vpop.permute.xlu0 %2237
    %2239 = vrot.lane.b32.xlu0 %v2228, 11
    %v2240 = vpop.permute.xlu0 %2239
    %v2241 = vsel %vm1979, %v2234, %v2236
    %v2242 = vsel %vm1979, %v2238, %v2240
    %v2247 = vsel %vm1979, 0.0, %v2234
    %v2248 = vsel %vm1979, 0.0, %v2238
    %v2249 = vsel %vm1984, %v2241, 0.0
    %v2250 = vsel %vm1984, %v2242, 0.0
    %2255 = vrot.lane.b32.xlu0 %v2247, 127
    %v2256 = vpop.permute.xlu0 %2255
    %2257 = vrot.lane.b32.xlu0 %v2249, 127
    %v2258 = vpop.permute.xlu0 %2257
    %2259 = vrot.lane.b32.xlu0 %v2248, 127
    %v2260 = vpop.permute.xlu0 %2259
    %2261 = vrot.lane.b32.xlu0 %v2250, 127
    %v2262 = vpop.permute.xlu0 %2261
    %v2263 = vsel %vm94, %v2256, %v2258
    %v2264 = vsel %vm94, %v2260, %v2262
    %2269 = vrot.lane.b32.xlu0 %v2247, 126
    %v2270 = vpop.permute.xlu0 %2269
    %2271 = vrot.lane.b32.xlu0 %v2249, 126
    %v2272 = vpop.permute.xlu0 %2271
    %2273 = vrot.lane.b32.xlu0 %v2248, 126
    %v2274 = vpop.permute.xlu0 %2273
    %2275 = vrot.lane.b32.xlu0 %v2250, 126
    %v2276 = vpop.permute.xlu0 %2275
    %v2277 = vsel %vm118, %v2270, %v2272
    %v2278 = vsel %vm118, %v2274, %v2276
    %2283 = vrot.lane.b32.xlu0 %v2247, 118
    %v2284 = vpop.permute.xlu0 %2283
    %2285 = vrot.lane.b32.xlu0 %v2249, 118
    %v2286 = vpop.permute.xlu0 %2285
    %2287 = vrot.lane.b32.xlu0 %v2248, 118
    %v2288 = vpop.permute.xlu0 %2287
    %2289 = vrot.lane.b32.xlu0 %v2250, 118
    %v2290 = vpop.permute.xlu0 %2289
    %v2291 = vsel %vm2006, %v2284, %v2286
    %v2292 = vsel %vm2006, %v2288, %v2290
    %2297 = vrot.lane.b32.xlu0 %v2247, 117
    %v2298 = vpop.permute.xlu0 %2297
    %2299 = vrot.lane.b32.xlu0 %v2249, 117
    %v2300 = vpop.permute.xlu0 %2299
    %2301 = vrot.lane.b32.xlu0 %v2248, 117
    %v2302 = vpop.permute.xlu0 %2301
    %2303 = vrot.lane.b32.xlu0 %v2250, 117
    %v2304 = vpop.permute.xlu0 %2303
    %v2305 = vsel %vm2014, %v2298, %v2300
    %v2306 = vsel %vm2014, %v2302, %v2304
    %2311 = vrot.lane.b32.xlu0 %v2247, 116
    %v2312 = vpop.permute.xlu0 %2311
    %2313 = vrot.lane.b32.xlu0 %v2249, 116
    %v2314 = vpop.permute.xlu0 %2313
    %2315 = vrot.lane.b32.xlu0 %v2248, 116
    %v2316 = vpop.permute.xlu0 %2315
    %2317 = vrot.lane.b32.xlu0 %v2250, 116
    %v2318 = vpop.permute.xlu0 %2317
    %v2319 = vsel %vm2022, %v2312, %v2314
    %v2320 = vsel %vm2022, %v2316, %v2318
    %2325 = vrot.lane.b32.xlu0 %v2247, 108
    %v2326 = vpop.permute.xlu0 %2325
    %2327 = vrot.lane.b32.xlu0 %v2249, 108
    %v2328 = vpop.permute.xlu0 %2327
    %2329 = vrot.lane.b32.xlu0 %v2248, 108
    %v2330 = vpop.permute.xlu0 %2329
    %2331 = vrot.lane.b32.xlu0 %v2250, 108
    %v2332 = vpop.permute.xlu0 %2331
    %v2333 = vsel %vm190, %v2326, %v2328
    %v2334 = vsel %vm190, %v2330, %v2332
    %2339 = vrot.lane.b32.xlu0 %v2247, 107
    %v2340 = vpop.permute.xlu0 %2339
    %2341 = vrot.lane.b32.xlu0 %v2249, 107
    %v2342 = vpop.permute.xlu0 %2341
    %2343 = vrot.lane.b32.xlu0 %v2248, 107
    %v2344 = vpop.permute.xlu0 %2343
    %2345 = vrot.lane.b32.xlu0 %v2250, 107
    %v2346 = vpop.permute.xlu0 %2345
    %v2347 = vsel %vm2037, %v2340, %v2342
    %v2348 = vsel %vm2037, %v2344, %v2346
    %2353 = vrot.lane.b32.xlu0 %v2247, 106
    %v2354 = vpop.permute.xlu0 %2353
    %2355 = vrot.lane.b32.xlu0 %v2249, 106
    %v2356 = vpop.permute.xlu0 %2355
    %2357 = vrot.lane.b32.xlu0 %v2248, 106
    %v2358 = vpop.permute.xlu0 %2357
    %2359 = vrot.lane.b32.xlu0 %v2250, 106
    %v2360 = vpop.permute.xlu0 %2359
    %v2361 = vsel %vm2045, %v2354, %v2356
    %v2362 = vsel %vm2045, %v2358, %v2360
    %v2367 = vld [vmem:[%s10] sm:$0xff]
    %v2368 = vld [vmem:[%s10 + $0x8] sm:$0xff]
    %v2369 = vld [vmem:[%s10 + $0x10] sm:$0xff]
    %v2370 = vld [vmem:[%s10 + $0x18] sm:$0xff]
    %vm2371 = vcmask 130048
    %v2373 = vsel %vm2371, %v2368, 0
    %v2376 = vsel %vm2371, %v2370, 0
    %2378 = vmatprep.subr.mxu0 %v2346
    %2379 = vmatpush1.msra.mxu0 %v2348
    %2380 = vmatprep.subr.mxu0 %v2342
    %2381 = vmatpush1.msra.mxu0 %v2347
    %2382 = vmatprep.subr.mxu0 %v2332
    %2383 = vmatpush1.msra.mxu0 %v2334
    %2384 = vmatprep.subr.mxu0 %v2328
    %2385 = vmatpush1.msra.mxu0 %v2333
    %2386 = vmatprep.subr.mxu0 %v2318
    %2387 = vmatpush1.msra.mxu0 %v2320
    %2388 = vmatprep.subr.mxu0 %v2314
    %2389 = vmatpush1.msra.mxu0 %v2319
    %2390 = vmatprep.subr.mxu0 %v2304
    %2391 = vmatpush1.msra.mxu0 %v2306
    %2392 = vmatprep.subr.mxu0 %v2300
    %2393 = vmatpush1.msra.mxu0 %v2305
    %2394 = vmatprep.subr.mxu0 %v2290
    %2395 = vmatpush1.msra.mxu0 %v2292
    %2396 = vmatprep.subr.mxu0 %v2286
    %2397 = vmatpush1.msra.mxu0 %v2291
    %2398 = vmatprep.subr.mxu0 %v2276
    %2399 = vmatpush1.msra.mxu0 %v2278
    %2400 = vmatprep.subr.mxu0 %v2272
    %2401 = vmatpush1.msra.mxu0 %v2277
    %2402 = vmatprep.subr.mxu0 %v2262
    %2403 = vmatpush1.msra.mxu0 %v2264
    %2404 = vmatprep.subr.mxu0 %v2258
    %2405 = vmatpush1.msra.mxu0 %v2263
    %2406 = vmatprep.subr.mxu0 %v2250
    %2407 = vmatpush1.msra.mxu0 %v2248
    %2408 = vmatprep.subr.mxu0 %v2249
    %2409 = vmatpush1.msra.mxu0 %v2247
    %2410 = vmatprep.subr.mxu0 0.0
    %2411 = vmatpush2.msra.mxu0 0.0
    %2412 = vmatprep.subr.mxu0 0.0
    %2413 = vmatpush2.msra.mxu0 0.0
    %2414 = vmatprep.subr.mxu0 0.0
    %2415 = vmatpush2.msra.mxu0 0.0
    %2416 = vmatprep.subr.mxu0 0.0
    %2417 = vmatpush2.msra.mxu0 0.0
    %2418 = vmatprep.subr.mxu0 0.0
    %2419 = vmatpush2.msra.mxu0 0.0
    %2420 = vmatprep.subr.mxu0 0.0
    %2421 = vmatpush2.msra.mxu0 0.0
    %2422 = vmatprep.subr.mxu0 0.0
    %2423 = vmatpush2.msra.mxu0 0.0
    %2424 = vmatprep.subr.mxu0 0.0
    %2425 = vmatpush2.msra.mxu0 0.0
    %2426 = vmatprep.subr.mxu0 0.0
    %2427 = vmatpush2.msra.mxu0 0.0
    %2428 = vmatprep.subr.mxu0 0.0
    %2429 = vmatpush2.msra.mxu0 0.0
    %2430 = vmatprep.subr.mxu0 0.0
    %2431 = vmatpush2.msra.mxu0 0.0
    %2432 = vmatprep.subr.mxu0 0.0
    %2433 = vmatpush2.msra.mxu0 0.0
    %2434 = vmatprep.subr.mxu0 0.0
    %2435 = vmatpush2.msra.mxu0 0.0
    %2436 = vmatprep.subr.mxu0 0.0
    %2437 = vmatpush2.msra.mxu0 0.0
    %2438 = vmatprep.subr.mxu0 %v2360
    %2439 = vmatpush2.msra.mxu0 %v2362
    %2440 = vmatprep.subr.mxu0 %v2356
    %2441 = vmatpush2.msra.mxu0 %v2361
    %2442 = vmatprep.mubr.f32.mxu0 %v2373
    %2443 = vmatmul.mubr.f32.gmra.mxu0 %v2367
    %v2444 = vpop.f32.mrf.mxu0
    %v2445 = vadd.f32 0.0, %v2444
    %v2446 = vpop.f32.mrf.mxu0
    %v2447 = vadd.f32 0.0, %v2446
    %2448 = vmatprep.mubr.f32.mxu0 %v2376
    %2449 = vmatmul.mubr.f32.gmra.mxu0 %v2369
    %v2450 = vpop.f32.mrf.mxu0
    %v2451 = vadd.f32 0.0, %v2450
    %v2452 = vpop.f32.mrf.mxu0
    %v2453 = vadd.f32 0.0, %v2452
    %2454 = vdwg.mxu0
    %v2455 = vmul.f32 %v2445, %v2138
    %v2456 = vmul.f32 %v2447, %v2142
    %v2457 = vmul.f32 %v2451, %v2138
    %v2458 = vmul.f32 %v2453, %v2142
    %v2459 = vsel %vm275, %v2456, 0.0
    %v2460 = vadd.f32 %v2455, %v2459
    %2461 = vadd.xlane.f32.xlu0 %v2460
    %v2462 = vpop.xlane.xlu0 %2461
    %v2463 = vsel %vm275, %v2458, 0.0
    %v2464 = vadd.f32 %v2457, %v2463
    %2465 = vadd.xlane.f32.xlu0 %v2464
    %v2466 = vpop.xlane.xlu0 %2465
    %v2467 = vmul.f32 %v2462, 0.0078125
    %v2468 = vmul.f32 %v2466, 0.0078125
    %v2469 = vmul.f32 %v2455, %v2445
    %v2470 = vmul.f32 %v2456, %v2447
    %v2471 = vmul.f32 %v2457, %v2451
    %v2472 = vmul.f32 %v2458, %v2453
    %v2473 = vsel %vm275, %v2470, 0.0
    %v2474 = vadd.f32 %v2469, %v2473
    %2475 = vadd.xlane.f32.xlu0 %v2474
    %v2476 = vpop.xlane.xlu0 %2475
    %v2477 = vsel %vm275, %v2472, 0.0
    %v2478 = vadd.f32 %v2471, %v2477
    %2479 = vadd.xlane.f32.xlu0 %v2478
    %v2480 = vpop.xlane.xlu0 %2479
    %v2481 = vmul.f32 %v2476, 0.0078125
    %v2482 = vmul.f32 %v2480, 0.0078125
    %v2483 = vmul.f32 %v2467, %v2467
    %v2484 = vmul.f32 %v2468, %v2468
    %v2485 = vsub.f32 %v2481, %v2483
    %v2486 = vsub.f32 %v2482, %v2484
    %v2487 = vmax.f32 %v2485, 0.0
    %v2488 = vmax.f32 %v2486, 0.0
    %v2489 = vld [vmem:[%s11] sm:$0xff]
    %v2490 = vld [vmem:[%s11 + $0x8] sm:$0xff]
    %v2491 = vadd.f32 %v2487, 1e-05
    %v2492 = vadd.f32 %v2488, 1e-05
    %v2493 = vrsqrt.pop %v2491
    %v2494 = vrsqrt.pop %v2492
    %v2495 = vmul.f32 %v2489, %v2493
    %v2496 = vmul.f32 %v2490, %v2494
    %v2497 = vld [vmem:[%s12] sm:$0xff]
    %v2498 = vld [vmem:[%s12 + $0x8] sm:$0xff]
    %v2499 = vmul.f32 %v2467, %v2495
    %v2500 = vmul.f32 %v2468, %v2496
    %v2501 = vsub.f32 %v2497, %v2499
    %v2502 = vsub.f32 %v2498, %v2500
    %2504 = vset.pattern.permute.xlu0 0
    %2505 = vperm.xlu0 %2504, %v2495
    %v2506 = vpop.permute.xlu0 %2505
    %2509 = vset.pattern.permute.xlu0 0
    %2510 = vperm.xlu0 %2509, %v2496
    %v2511 = vpop.permute.xlu0 %2510
    %v2513 = vmul.f32 %v2445, %v2506
    %v2514 = vmul.f32 %v2447, %v2506
    %v2515 = vmul.f32 %v2451, %v2511
    %v2516 = vmul.f32 %v2453, %v2511
    %2518 = vset.pattern.permute.xlu0 0
    %2519 = vperm.xlu0 %2518, %v2501
    %v2520 = vpop.permute.xlu0 %2519
    %2523 = vset.pattern.permute.xlu0 0
    %2524 = vperm.xlu0 %2523, %v2502
    %v2525 = vpop.permute.xlu0 %2524
    %v2527 = vadd.f32 %v2513, %v2520
    %v2528 = vadd.f32 %v2514, %v2520
    %v2529 = vadd.f32 %v2515, %v2525
    %v2530 = vadd.f32 %v2516, %v2525
    %v2531 = vmax.f32 %v2527, 0.0
    %v2532 = vmax.f32 %v2528, 0.0
    %v2533 = vmax.f32 %v2529, 0.0
    %v2534 = vmax.f32 %v2530, 0.0
    %v2535 = vmul.f32 %v2531, %v2138
    %v2536 = vmul.f32 %v2532, %v2142
    %v2537 = vmul.f32 %v2533, %v2138
    %v2538 = vmul.f32 %v2534, %v2142
    %v2539 = vld [vmem:[%s16] sm:$0x1]
    %v2540 = vlaneseq
    %v2541 = vshrl.u32 %v2540, 7
    %v2542 = vsub.s32 0, %v2541
    %v2543 = vrot.slane %v2539, %v2542
    %vm2544 = vcmp.eq.s32.totalorder %v1181, %v2543
    %vm2545 = vcmp.eq.s32.totalorder %v1182, %v2543
    %vm2546 = vcmp.eq.s32.totalorder %v1183, %v2543
    %vm2547 = vcmp.eq.s32.totalorder %v1184, %v2543
    %vm2548 = vcmp.eq.s32.totalorder %v1185, %v2543
    %vm2549 = vcmp.eq.s32.totalorder %v1186, %v2543
    %vm2550 = vcmp.eq.s32.totalorder %v1187, %v2543
    %vm2551 = vcmp.eq.s32.totalorder %v1188, %v2543
    %vm2552 = vcmp.eq.s32.totalorder %v1189, %v2543
    %vm2553 = vcmp.eq.s32.totalorder %v1190, %v2543
    %vm2554 = vcmp.eq.s32.totalorder %v1191, %v2543
    %vm2555 = vcmp.eq.s32.totalorder %v1192, %v2543
    %vm2556 = vcmp.eq.s32.totalorder %v1193, %v2543
    %vm2557 = vcmp.eq.s32.totalorder %v1194, %v2543
    %vm2558 = vcmp.eq.s32.totalorder %v1195, %v2543
    %vm2559 = vcmp.eq.s32.totalorder %v1196, %v2543
    %vm2560 = vcmp.eq.s32.totalorder %v1197, %v2543
    %vm2561 = vcmp.eq.s32.totalorder %v1198, %v2543
    %vm2562 = vcmp.eq.s32.totalorder %v1199, %v2543
    %vm2563 = vcmp.eq.s32.totalorder %v1200, %v2543
    %vm2564 = vcmp.eq.s32.totalorder %v1201, %v2543
    %vm2565 = vcmp.eq.s32.totalorder %v1202, %v2543
    %vm2566 = vcmp.eq.s32.totalorder %v1203, %v2543
    %vm2567 = vcmp.eq.s32.totalorder %v1204, %v2543
    %vm2568 = vcmp.eq.s32.totalorder %v1205, %v2543
    %v2569 = vsel %vm2544, 1, 0
    %v2570 = vsel %vm2545, 1, 0
    %v2571 = vsel %vm2546, 1, 0
    %v2572 = vsel %vm2547, 1, 0
    %v2573 = vsel %vm2548, 1, 0
    %v2574 = vsel %vm2549, 1, 0
    %v2575 = vsel %vm2550, 1, 0
    %v2576 = vsel %vm2551, 1, 0
    %v2577 = vsel %vm2552, 1, 0
    %v2578 = vsel %vm2553, 1, 0
    %v2579 = vsel %vm2554, 1, 0
    %v2580 = vsel %vm2555, 1, 0
    %v2581 = vsel %vm2556, 1, 0
    %v2582 = vsel %vm2557, 1, 0
    %v2583 = vsel %vm2558, 1, 0
    %v2584 = vsel %vm2559, 1, 0
    %v2585 = vsel %vm2560, 1, 0
    %v2586 = vsel %vm2561, 1, 0
    %v2587 = vsel %vm2562, 1, 0
    %v2588 = vsel %vm2563, 1, 0
    %v2589 = vsel %vm2564, 1, 0
    %v2590 = vsel %vm2565, 1, 0
    %v2591 = vsel %vm2566, 1, 0
    %v2592 = vsel %vm2567, 1, 0
    %v2593 = vsel %vm2568, 1, 0
    %v2594 = vcvt.s32.f32 %v2569
    %v2595 = vcvt.s32.f32 %v2570
    %v2596 = vcvt.s32.f32 %v2571
    %v2597 = vcvt.s32.f32 %v2572
    %v2598 = vcvt.s32.f32 %v2573
    %v2599 = vcvt.s32.f32 %v2574
    %v2600 = vcvt.s32.f32 %v2575
    %v2601 = vcvt.s32.f32 %v2576
    %v2602 = vcvt.s32.f32 %v2577
    %v2603 = vcvt.s32.f32 %v2578
    %v2604 = vcvt.s32.f32 %v2579
    %v2605 = vcvt.s32.f32 %v2580
    %v2606 = vcvt.s32.f32 %v2581
    %v2607 = vcvt.s32.f32 %v2582
    %v2608 = vcvt.s32.f32 %v2583
    %v2609 = vcvt.s32.f32 %v2584
    %v2610 = vcvt.s32.f32 %v2585
    %v2611 = vcvt.s32.f32 %v2586
    %v2612 = vcvt.s32.f32 %v2587
    %v2613 = vcvt.s32.f32 %v2588
    %v2614 = vcvt.s32.f32 %v2589
    %v2615 = vcvt.s32.f32 %v2590
    %v2616 = vcvt.s32.f32 %v2591
    %v2617 = vcvt.s32.f32 %v2592
    %v2618 = vcvt.s32.f32 %v2593
    %v2620 = vsel %vm275, %v2536, 0
    %v2623 = vsel %vm275, %v2538, 0
    %2625 = vmatprep.subr.mxu0 0.0
    %2626 = vmatpush1.msra.mxu0 %v2609
    %2627 = vmatprep.subr.mxu0 0.0
    %2628 = vmatpush1.msra.mxu0 %v2608
    %2629 = vmatprep.subr.mxu0 0.0
    %2630 = vmatpush1.msra.mxu0 %v2607
    %2631 = vmatprep.subr.mxu0 0.0
    %2632 = vmatpush1.msra.mxu0 %v2606
    %2633 = vmatprep.subr.mxu0 0.0
    %2634 = vmatpush1.msra.mxu0 %v2605
    %2635 = vmatprep.subr.mxu0 0.0
    %2636 = vmatpush1.msra.mxu0 %v2604
    %2637 = vmatprep.subr.mxu0 0.0
    %2638 = vmatpush1.msra.mxu0 %v2603
    %2639 = vmatprep.subr.mxu0 0.0
    %2640 = vmatpush1.msra.mxu0 %v2602
    %2641 = vmatprep.subr.mxu0 0.0
    %2642 = vmatpush1.msra.mxu0 %v2601
    %2643 = vmatprep.subr.mxu0 0.0
    %2644 = vmatpush1.msra.mxu0 %v2600
    %2645 = vmatprep.subr.mxu0 0.0
    %2646 = vmatpush1.msra.mxu0 %v2599
    %2647 = vmatprep.subr.mxu0 0.0
    %2648 = vmatpush1.msra.mxu0 %v2598
    %2649 = vmatprep.subr.mxu0 0.0
    %2650 = vmatpush1.msra.mxu0 %v2597
    %2651 = vmatprep.subr.mxu0 0.0
    %2652 = vmatpush1.msra.mxu0 %v2596
    %2653 = vmatprep.subr.mxu0 0.0
    %2654 = vmatpush1.msra.mxu0 %v2595
    %2655 = vmatprep.subr.mxu0 0.0
    %2656 = vmatpush1.msra.mxu0 %v2594
    %2657 = vmatprep.subr.mxu0 0.0
    %2658 = vmatpush2.msra.mxu0 0.0
    %2659 = vmatprep.subr.mxu0 0.0
    %2660 = vmatpush2.msra.mxu0 0.0
    %2661 = vmatprep.subr.mxu0 0.0
    %2662 = vmatpush2.msra.mxu0 0.0
    %2663 = vmatprep.subr.mxu0 0.0
    %2664 = vmatpush2.msra.mxu0 0.0
    %2665 = vmatprep.subr.mxu0 0.0
    %2666 = vmatpush2.msra.mxu0 0.0
    %2667 = vmatprep.subr.mxu0 0.0
    %2668 = vmatpush2.msra.mxu0 0.0
    %2669 = vmatprep.subr.mxu0 0.0
    %2670 = vmatpush2.msra.mxu0 0.0
    %2671 = vmatprep.subr.mxu0 0.0
    %2672 = vmatpush2.msra.mxu0 %v2618
    %2673 = vmatprep.subr.mxu0 0.0
    %2674 = vmatpush2.msra.mxu0 %v2617
    %2675 = vmatprep.subr.mxu0 0.0
    %2676 = vmatpush2.msra.mxu0 %v2616
    %2677 = vmatprep.subr.mxu0 0.0
    %2678 = vmatpush2.msra.mxu0 %v2615
    %2679 = vmatprep.subr.mxu0 0.0
    %2680 = vmatpush2.msra.mxu0 %v2614
    %2681 = vmatprep.subr.mxu0 0.0
    %2682 = vmatpush2.msra.mxu0 %v2613
    %2683 = vmatprep.subr.mxu0 0.0
    %2684 = vmatpush2.msra.mxu0 %v2612
    %2685 = vmatprep.subr.mxu0 0.0
    %2686 = vmatpush2.msra.mxu0 %v2611
    %2687 = vmatprep.subr.mxu0 0.0
    %2688 = vmatpush2.msra.mxu0 %v2610
    %2689 = vmatprep.mubr.f32.mxu0 %v2620
    %2690 = vmatmul.mubr.f32.gmra.mxu0 %v2535
    %v2691 = vpop.f32.mrf.mxu0
    %v2692 = vadd.f32 0.0, %v2691
    %v2693 = vpop.f32.mrf.mxu0
    %2694 = vmatprep.mubr.f32.mxu0 %v2623
    %2695 = vmatmul.mubr.f32.gmra.mxu0 %v2537
    %v2696 = vpop.f32.mrf.mxu0
    %v2697 = vadd.f32 0.0, %v2696
    %v2698 = vpop.f32.mrf.mxu0
    %2699 = vdwg.mxu0
    %v2700 = vld [vmem:[%s18] sm:$0x1]
    %v2701 = vld [vmem:[%s17] sm:$0xff]
    %v2702 = vld [vmem:[%s17 + $0x8] sm:$0xff]
    %v2703 = vld [vmem:[%s17 + $0x10] sm:$0xff]
    %v2704 = vld [vmem:[%s17 + $0x18] sm:$0xff]
    %v2705 = vld [vmem:[%s17 + $0x20] sm:$0xff]
    %v2706 = vld [vmem:[%s17 + $0x28] sm:$0xff]
    %v2707 = vld [vmem:[%s17 + $0x30] sm:$0xff]
    %v2708 = vld [vmem:[%s17 + $0x38] sm:$0xff]
    %vm2709 = vcmask 523264
    %v2711 = vsel %vm2709, %v2692, 0
    %2713 = vmatprep.subr.mxu0 0.0
    %2714 = vmatpush1.msra.mxu0 0.0
    %2715 = vmatprep.subr.mxu0 0.0
    %2716 = vmatpush1.msra.mxu0 0.0
    %2717 = vmatprep.subr.mxu0 0.0
    %2718 = vmatpush1.msra.mxu0 0.0
    %2719 = vmatprep.subr.mxu0 0.0
    %2720 = vmatpush1.msra.mxu0 0.0
    %2721 = vmatprep.subr.mxu0 0.0
    %2722 = vmatpush1.msra.mxu0 0.0
    %2723 = vmatprep.subr.mxu0 0.0
    %2724 = vmatpush1.msra.mxu0 0.0
    %2725 = vmatprep.subr.mxu0 0.0
    %2726 = vmatpush1.msra.mxu0 0.0
    %2727 = vmatprep.subr.mxu0 0.0
    %2728 = vmatpush1.msra.mxu0 0.0
    %2729 = vmatprep.subr.mxu0 0.0
    %2730 = vmatpush1.msra.mxu0 %v2708
    %2731 = vmatprep.subr.mxu0 0.0
    %2732 = vmatpush1.msra.mxu0 %v2707
    %2733 = vmatprep.subr.mxu0 0.0
    %2734 = vmatpush1.msra.mxu0 %v2706
    %2735 = vmatprep.subr.mxu0 0.0
    %2736 = vmatpush1.msra.mxu0 %v2705
    %2737 = vmatprep.subr.mxu0 0.0
    %2738 = vmatpush1.msra.mxu0 %v2704
    %2739 = vmatprep.subr.mxu0 0.0
    %2740 = vmatpush1.msra.mxu0 %v2703
    %2741 = vmatprep.subr.mxu0 0.0
    %2742 = vmatpush1.msra.mxu0 %v2702
    %2743 = vmatprep.subr.mxu0 0.0
    %2744 = vmatpush1.msra.mxu0 %v2701
    %2745 = vmatprep.subr.mxu0 0.0
    %2746 = vmatpush2.msra.mxu0 0.0
    %2747 = vmatprep.subr.mxu0 0.0
    %2748 = vmatpush2.msra.mxu0 0.0
    %2749 = vmatprep.subr.mxu0 0.0
    %2750 = vmatpush2.msra.mxu0 0.0
    %2751 = vmatprep.subr.mxu0 0.0
    %2752 = vmatpush2.msra.mxu0 0.0
    %2753 = vmatprep.subr.mxu0 0.0
    %2754 = vmatpush2.msra.mxu0 0.0
    %2755 = vmatprep.subr.mxu0 0.0
    %2756 = vmatpush2.msra.mxu0 0.0
    %2757 = vmatprep.subr.mxu0 0.0
    %2758 = vmatpush2.msra.mxu0 0.0
    %2759 = vmatprep.subr.mxu0 0.0
    %2760 = vmatpush2.msra.mxu0 0.0
    %2761 = vmatprep.subr.mxu0 0.0
    %2762 = vmatpush2.msra.mxu0 0.0
    %2763 = vmatprep.subr.mxu0 0.0
    %2764 = vmatpush2.msra.mxu0 0.0
    %2765 = vmatprep.subr.mxu0 0.0
    %2766 = vmatpush2.msra.mxu0 0.0
    %2767 = vmatprep.subr.mxu0 0.0
    %2768 = vmatpush2.msra.mxu0 0.0
    %2769 = vmatprep.subr.mxu0 0.0
    %2770 = vmatpush2.msra.mxu0 0.0
    %2771 = vmatprep.subr.mxu0 0.0
    %2772 = vmatpush2.msra.mxu0 0.0
    %2773 = vmatprep.subr.mxu0 0.0
    %2774 = vmatpush2.msra.mxu0 0.0
    %2775 = vmatprep.subr.mxu0 0.0
    %2776 = vmatpush2.msra.mxu0 0.0
    %2777 = vmatprep.mubr.f32.mxu0 0.0
    %2778 = vmatmul.mubr.f32.gmra.mxu0 %v2711
    %v2779 = vpop.f32.mrf.mxu0
    %v2780 = vadd.f32 0.0, %v2779
    %v2781 = vpop.f32.mrf.mxu0
    %2782 = vdwg.mxu0
    %v2783 = vadd.f32 %v2700, %v2780
    %v2784 = vld [vmem:[%s17 + $0x40] sm:$0xff]
    %v2785 = vld [vmem:[%s17 + $0x48] sm:$0xff]
    %v2786 = vld [vmem:[%s17 + $0x50] sm:$0xff]
    %v2787 = vld [vmem:[%s17 + $0x58] sm:$0xff]
    %v2788 = vld [vmem:[%s17 + $0x60] sm:$0xff]
    %v2789 = vld [vmem:[%s17 + $0x68] sm:$0xff]
    %v2790 = vld [vmem:[%s17 + $0x70] sm:$0xff]
    %v2791 = vld [vmem:[%s17 + $0x78] sm:$0xff]
    %v2792 = vrot.slane %v2692, 1
    %v2793 = vsel %vm2709, %v2792, 0
    %2795 = vmatprep.subr.mxu0 0.0
    %2796 = vmatpush1.msra.mxu0 0.0
    %2797 = vmatprep.subr.mxu0 0.0
    %2798 = vmatpush1.msra.mxu0 0.0
    %2799 = vmatprep.subr.mxu0 0.0
    %2800 = vmatpush1.msra.mxu0 0.0
    %2801 = vmatprep.subr.mxu0 0.0
    %2802 = vmatpush1.msra.mxu0 0.0
    %2803 = vmatprep.subr.mxu0 0.0
    %2804 = vmatpush1.msra.mxu0 0.0
    %2805 = vmatprep.subr.mxu0 0.0
    %2806 = vmatpush1.msra.mxu0 0.0
    %2807 = vmatprep.subr.mxu0 0.0
    %2808 = vmatpush1.msra.mxu0 0.0
    %2809 = vmatprep.subr.mxu0 0.0
    %2810 = vmatpush1.msra.mxu0 0.0
    %2811 = vmatprep.subr.mxu0 0.0
    %2812 = vmatpush1.msra.mxu0 %v2791
    %2813 = vmatprep.subr.mxu0 0.0
    %2814 = vmatpush1.msra.mxu0 %v2790
    %2815 = vmatprep.subr.mxu0 0.0
    %2816 = vmatpush1.msra.mxu0 %v2789
    %2817 = vmatprep.subr.mxu0 0.0
    %2818 = vmatpush1.msra.mxu0 %v2788
    %2819 = vmatprep.subr.mxu0 0.0
    %2820 = vmatpush1.msra.mxu0 %v2787
    %2821 = vmatprep.subr.mxu0 0.0
    %2822 = vmatpush1.msra.mxu0 %v2786
    %2823 = vmatprep.subr.mxu0 0.0
    %2824 = vmatpush1.msra.mxu0 %v2785
    %2825 = vmatprep.subr.mxu0 0.0
    %2826 = vmatpush1.msra.mxu0 %v2784
    %2827 = vmatprep.subr.mxu0 0.0
    %2828 = vmatpush2.msra.mxu0 0.0
    %2829 = vmatprep.subr.mxu0 0.0
    %2830 = vmatpush2.msra.mxu0 0.0
    %2831 = vmatprep.subr.mxu0 0.0
    %2832 = vmatpush2.msra.mxu0 0.0
    %2833 = vmatprep.subr.mxu0 0.0
    %2834 = vmatpush2.msra.mxu0 0.0
    %2835 = vmatprep.subr.mxu0 0.0
    %2836 = vmatpush2.msra.mxu0 0.0
    %2837 = vmatprep.subr.mxu0 0.0
    %2838 = vmatpush2.msra.mxu0 0.0
    %2839 = vmatprep.subr.mxu0 0.0
    %2840 = vmatpush2.msra.mxu0 0.0
    %2841 = vmatprep.subr.mxu0 0.0
    %2842 = vmatpush2.msra.mxu0 0.0
    %2843 = vmatprep.subr.mxu0 0.0
    %2844 = vmatpush2.msra.mxu0 0.0
    %2845 = vmatprep.subr.mxu0 0.0
    %2846 = vmatpush2.msra.mxu0 0.0
    %2847 = vmatprep.subr.mxu0 0.0
    %2848 = vmatpush2.msra.mxu0 0.0
    %2849 = vmatprep.subr.mxu0 0.0
    %2850 = vmatpush2.msra.mxu0 0.0
    %2851 = vmatprep.subr.mxu0 0.0
    %2852 = vmatpush2.msra.mxu0 0.0
    %2853 = vmatprep.subr.mxu0 0.0
    %2854 = vmatpush2.msra.mxu0 0.0
    %2855 = vmatprep.subr.mxu0 0.0
    %2856 = vmatpush2.msra.mxu0 0.0
    %2857 = vmatprep.subr.mxu0 0.0
    %2858 = vmatpush2.msra.mxu0 0.0
    %2859 = vmatprep.mubr.f32.mxu0 0.0
    %2860 = vmatmul.mubr.f32.gmra.mxu0 %v2793
    %v2861 = vpop.f32.mrf.mxu0
    %v2862 = vadd.f32 0.0, %v2861
    %v2863 = vpop.f32.mrf.mxu0
    %2864 = vdwg.mxu0
    %v2865 = vadd.f32 %v2783, %v2862
    %v2866 = vld [vmem:[%s17 + $0x80] sm:$0xff]
    %v2867 = vld [vmem:[%s17 + $0x88] sm:$0xff]
    %v2868 = vld [vmem:[%s17 + $0x90] sm:$0xff]
    %v2869 = vld [vmem:[%s17 + $0x98] sm:$0xff]
    %v2870 = vld [vmem:[%s17 + $0xa0] sm:$0xff]
    %v2871 = vld [vmem:[%s17 + $0xa8] sm:$0xff]
    %v2872 = vld [vmem:[%s17 + $0xb0] sm:$0xff]
    %v2873 = vld [vmem:[%s17 + $0xb8] sm:$0xff]
    %v2874 = vrot.slane %v2692, 2
    %v2875 = vsel %vm2709, %v2874, 0
    %2877 = vmatprep.subr.mxu0 0.0
    %2878 = vmatpush1.msra.mxu0 0.0
    %2879 = vmatprep.subr.mxu0 0.0
    %2880 = vmatpush1.msra.mxu0 0.0
    %2881 = vmatprep.subr.mxu0 0.0
    %2882 = vmatpush1.msra.mxu0 0.0
    %2883 = vmatprep.subr.mxu0 0.0
    %2884 = vmatpush1.msra.mxu0 0.0
    %2885 = vmatprep.subr.mxu0 0.0
    %2886 = vmatpush1.msra.mxu0 0.0
    %2887 = vmatprep.subr.mxu0 0.0
    %2888 = vmatpush1.msra.mxu0 0.0
    %2889 = vmatprep.subr.mxu0 0.0
    %2890 = vmatpush1.msra.mxu0 0.0
    %2891 = vmatprep.subr.mxu0 0.0
    %2892 = vmatpush1.msra.mxu0 0.0
    %2893 = vmatprep.subr.mxu0 0.0
    %2894 = vmatpush1.msra.mxu0 %v2873
    %2895 = vmatprep.subr.mxu0 0.0
    %2896 = vmatpush1.msra.mxu0 %v2872
    %2897 = vmatprep.subr.mxu0 0.0
    %2898 = vmatpush1.msra.mxu0 %v2871
    %2899 = vmatprep.subr.mxu0 0.0
    %2900 = vmatpush1.msra.mxu0 %v2870
    %2901 = vmatprep.subr.mxu0 0.0
    %2902 = vmatpush1.msra.mxu0 %v2869
    %2903 = vmatprep.subr.mxu0 0.0
    %2904 = vmatpush1.msra.mxu0 %v2868
    %2905 = vmatprep.subr.mxu0 0.0
    %2906 = vmatpush1.msra.mxu0 %v2867
    %2907 = vmatprep.subr.mxu0 0.0
    %2908 = vmatpush1.msra.mxu0 %v2866
    %2909 = vmatprep.subr.mxu0 0.0
    %2910 = vmatpush2.msra.mxu0 0.0
    %2911 = vmatprep.subr.mxu0 0.0
    %2912 = vmatpush2.msra.mxu0 0.0
    %2913 = vmatprep.subr.mxu0 0.0
    %2914 = vmatpush2.msra.mxu0 0.0
    %2915 = vmatprep.subr.mxu0 0.0
    %2916 = vmatpush2.msra.mxu0 0.0
    %2917 = vmatprep.subr.mxu0 0.0
    %2918 = vmatpush2.msra.mxu0 0.0
    %2919 = vmatprep.subr.mxu0 0.0
    %2920 = vmatpush2.msra.mxu0 0.0
    %2921 = vmatprep.subr.mxu0 0.0
    %2922 = vmatpush2.msra.mxu0 0.0
    %2923 = vmatprep.subr.mxu0 0.0
    %2924 = vmatpush2.msra.mxu0 0.0
    %2925 = vmatprep.subr.mxu0 0.0
    %2926 = vmatpush2.msra.mxu0 0.0
    %2927 = vmatprep.subr.mxu0 0.0
    %2928 = vmatpush2.msra.mxu0 0.0
    %2929 = vmatprep.subr.mxu0 0.0
    %2930 = vmatpush2.msra.mxu0 0.0
    %2931 = vmatprep.subr.mxu0 0.0
    %2932 = vmatpush2.msra.mxu0 0.0
    %2933 = vmatprep.subr.mxu0 0.0
    %2934 = vmatpush2.msra.mxu0 0.0
    %2935 = vmatprep.subr.mxu0 0.0
    %2936 = vmatpush2.msra.mxu0 0.0
    %2937 = vmatprep.subr.mxu0 0.0
    %2938 = vmatpush2.msra.mxu0 0.0
    %2939 = vmatprep.subr.mxu0 0.0
    %2940 = vmatpush2.msra.mxu0 0.0
    %2941 = vmatprep.mubr.f32.mxu0 0.0
    %2942 = vmatmul.mubr.f32.gmra.mxu0 %v2875
    %v2943 = vpop.f32.mrf.mxu0
    %v2944 = vadd.f32 0.0, %v2943
    %v2945 = vpop.f32.mrf.mxu0
    %2946 = vdwg.mxu0
    %v2947 = vadd.f32 %v2865, %v2944
    %v2948 = vld [vmem:[%s17 + $0xc0] sm:$0xff]
    %v2949 = vld [vmem:[%s17 + $0xc8] sm:$0xff]
    %v2950 = vld [vmem:[%s17 + $0xd0] sm:$0xff]
    %v2951 = vld [vmem:[%s17 + $0xd8] sm:$0xff]
    %v2952 = vld [vmem:[%s17 + $0xe0] sm:$0xff]
    %v2953 = vld [vmem:[%s17 + $0xe8] sm:$0xff]
    %v2954 = vld [vmem:[%s17 + $0xf0] sm:$0xff]
    %v2955 = vld [vmem:[%s17 + $0xf8] sm:$0xff]
    %v2956 = vrot.slane %v2692, 3
    %v2957 = vsel %vm2709, %v2956, 0
    %2959 = vmatprep.subr.mxu0 0.0
    %2960 = vmatpush1.msra.mxu0 0.0
    %2961 = vmatprep.subr.mxu0 0.0
    %2962 = vmatpush1.msra.mxu0 0.0
    %2963 = vmatprep.subr.mxu0 0.0
    %2964 = vmatpush1.msra.mxu0 0.0
    %2965 = vmatprep.subr.mxu0 0.0
    %2966 = vmatpush1.msra.mxu0 0.0
    %2967 = vmatprep.subr.mxu0 0.0
    %2968 = vmatpush1.msra.mxu0 0.0
    %2969 = vmatprep.subr.mxu0 0.0
    %2970 = vmatpush1.msra.mxu0 0.0
    %2971 = vmatprep.subr.mxu0 0.0
    %2972 = vmatpush1.msra.mxu0 0.0
    %2973 = vmatprep.subr.mxu0 0.0
    %2974 = vmatpush1.msra.mxu0 0.0
    %2975 = vmatprep.subr.mxu0 0.0
    %2976 = vmatpush1.msra.mxu0 %v2955
    %2977 = vmatprep.subr.mxu0 0.0
    %2978 = vmatpush1.msra.mxu0 %v2954
    %2979 = vmatprep.subr.mxu0 0.0
    %2980 = vmatpush1.msra.mxu0 %v2953
    %2981 = vmatprep.subr.mxu0 0.0
    %2982 = vmatpush1.msra.mxu0 %v2952
    %2983 = vmatprep.subr.mxu0 0.0
    %2984 = vmatpush1.msra.mxu0 %v2951
    %2985 = vmatprep.subr.mxu0 0.0
    %2986 = vmatpush1.msra.mxu0 %v2950
    %2987 = vmatprep.subr.mxu0 0.0
    %2988 = vmatpush1.msra.mxu0 %v2949
    %2989 = vmatprep.subr.mxu0 0.0
    %2990 = vmatpush1.msra.mxu0 %v2948
    %2991 = vmatprep.subr.mxu0 0.0
    %2992 = vmatpush2.msra.mxu0 0.0
    %2993 = vmatprep.subr.mxu0 0.0
    %2994 = vmatpush2.msra.mxu0 0.0
    %2995 = vmatprep.subr.mxu0 0.0
    %2996 = vmatpush2.msra.mxu0 0.0
    %2997 = vmatprep.subr.mxu0 0.0
    %2998 = vmatpush2.msra.mxu0 0.0
    %2999 = vmatprep.subr.mxu0 0.0
    %3000 = vmatpush2.msra.mxu0 0.0
    %3001 = vmatprep.subr.mxu0 0.0
    %3002 = vmatpush2.msra.mxu0 0.0
    %3003 = vmatprep.subr.mxu0 0.0
    %3004 = vmatpush2.msra.mxu0 0.0
    %3005 = vmatprep.subr.mxu0 0.0
    %3006 = vmatpush2.msra.mxu0 0.0
    %3007 = vmatprep.subr.mxu0 0.0
    %3008 = vmatpush2.msra.mxu0 0.0
    %3009 = vmatprep.subr.mxu0 0.0
    %3010 = vmatpush2.msra.mxu0 0.0
    %3011 = vmatprep.subr.mxu0 0.0
    %3012 = vmatpush2.msra.mxu0 0.0
    %3013 = vmatprep.subr.mxu0 0.0
    %3014 = vmatpush2.msra.mxu0 0.0
    %3015 = vmatprep.subr.mxu0 0.0
    %3016 = vmatpush2.msra.mxu0 0.0
    %3017 = vmatprep.subr.mxu0 0.0
    %3018 = vmatpush2.msra.mxu0 0.0
    %3019 = vmatprep.subr.mxu0 0.0
    %3020 = vmatpush2.msra.mxu0 0.0
    %3021 = vmatprep.subr.mxu0 0.0
    %3022 = vmatpush2.msra.mxu0 0.0
    %3023 = vmatprep.mubr.f32.mxu0 0.0
    %3024 = vmatmul.mubr.f32.gmra.mxu0 %v2957
    %v3025 = vpop.f32.mrf.mxu0
    %v3026 = vadd.f32 0.0, %v3025
    %v3027 = vpop.f32.mrf.mxu0
    %3028 = vdwg.mxu0
    %v3029 = vadd.f32 %v2947, %v3026
    %v3030 = vld [vmem:[%s17 + $0x100] sm:$0xff]
    %v3031 = vld [vmem:[%s17 + $0x108] sm:$0xff]
    %v3032 = vld [vmem:[%s17 + $0x110] sm:$0xff]
    %v3033 = vld [vmem:[%s17 + $0x118] sm:$0xff]
    %v3034 = vld [vmem:[%s17 + $0x120] sm:$0xff]
    %v3035 = vld [vmem:[%s17 + $0x128] sm:$0xff]
    %v3036 = vld [vmem:[%s17 + $0x130] sm:$0xff]
    %v3037 = vld [vmem:[%s17 + $0x138] sm:$0xff]
    %v3038 = vrot.slane %v2692, 4
    %v3039 = vsel %vm2709, %v3038, 0
    %3041 = vmatprep.subr.mxu0 0.0
    %3042 = vmatpush1.msra.mxu0 0.0
    %3043 = vmatprep.subr.mxu0 0.0
    %3044 = vmatpush1.msra.mxu0 0.0
    %3045 = vmatprep.subr.mxu0 0.0
    %3046 = vmatpush1.msra.mxu0 0.0
    %3047 = vmatprep.subr.mxu0 0.0
    %3048 = vmatpush1.msra.mxu0 0.0
    %3049 = vmatprep.subr.mxu0 0.0
    %3050 = vmatpush1.msra.mxu0 0.0
    %3051 = vmatprep.subr.mxu0 0.0
    %3052 = vmatpush1.msra.mxu0 0.0
    %3053 = vmatprep.subr.mxu0 0.0
    %3054 = vmatpush1.msra.mxu0 0.0
    %3055 = vmatprep.subr.mxu0 0.0
    %3056 = vmatpush1.msra.mxu0 0.0
    %3057 = vmatprep.subr.mxu0 0.0
    %3058 = vmatpush1.msra.mxu0 %v3037
    %3059 = vmatprep.subr.mxu0 0.0
    %3060 = vmatpush1.msra.mxu0 %v3036
    %3061 = vmatprep.subr.mxu0 0.0
    %3062 = vmatpush1.msra.mxu0 %v3035
    %3063 = vmatprep.subr.mxu0 0.0
    %3064 = vmatpush1.msra.mxu0 %v3034
    %3065 = vmatprep.subr.mxu0 0.0
    %3066 = vmatpush1.msra.mxu0 %v3033
    %3067 = vmatprep.subr.mxu0 0.0
    %3068 = vmatpush1.msra.mxu0 %v3032
    %3069 = vmatprep.subr.mxu0 0.0
    %3070 = vmatpush1.msra.mxu0 %v3031
    %3071 = vmatprep.subr.mxu0 0.0
    %3072 = vmatpush1.msra.mxu0 %v3030
    %3073 = vmatprep.subr.mxu0 0.0
    %3074 = vmatpush2.msra.mxu0 0.0
    %3075 = vmatprep.subr.mxu0 0.0
    %3076 = vmatpush2.msra.mxu0 0.0
    %3077 = vmatprep.subr.mxu0 0.0
    %3078 = vmatpush2.msra.mxu0 0.0
    %3079 = vmatprep.subr.mxu0 0.0
    %3080 = vmatpush2.msra.mxu0 0.0
    %3081 = vmatprep.subr.mxu0 0.0
    %3082 = vmatpush2.msra.mxu0 0.0
    %3083 = vmatprep.subr.mxu0 0.0
    %3084 = vmatpush2.msra.mxu0 0.0
    %3085 = vmatprep.subr.mxu0 0.0
    %3086 = vmatpush2.msra.mxu0 0.0
    %3087 = vmatprep.subr.mxu0 0.0
    %3088 = vmatpush2.msra.mxu0 0.0
    %3089 = vmatprep.subr.mxu0 0.0
    %3090 = vmatpush2.msra.mxu0 0.0
    %3091 = vmatprep.subr.mxu0 0.0
    %3092 = vmatpush2.msra.mxu0 0.0
    %3093 = vmatprep.subr.mxu0 0.0
    %3094 = vmatpush2.msra.mxu0 0.0
    %3095 = vmatprep.subr.mxu0 0.0
    %3096 = vmatpush2.msra.mxu0 0.0
    %3097 = vmatprep.subr.mxu0 0.0
    %3098 = vmatpush2.msra.mxu0 0.0
    %3099 = vmatprep.subr.mxu0 0.0
    %3100 = vmatpush2.msra.mxu0 0.0
    %3101 = vmatprep.subr.mxu0 0.0
    %3102 = vmatpush2.msra.mxu0 0.0
    %3103 = vmatprep.subr.mxu0 0.0
    %3104 = vmatpush2.msra.mxu0 0.0
    %3105 = vmatprep.mubr.f32.mxu0 0.0
    %3106 = vmatmul.mubr.f32.gmra.mxu0 %v3039
    %v3107 = vpop.f32.mrf.mxu0
    %v3108 = vadd.f32 0.0, %v3107
    %v3109 = vpop.f32.mrf.mxu0
    %3110 = vdwg.mxu0
    %v3111 = vadd.f32 %v3029, %v3108
    %v3112 = vld [vmem:[%s17 + $0x140] sm:$0xff]
    %v3113 = vld [vmem:[%s17 + $0x148] sm:$0xff]
    %v3114 = vld [vmem:[%s17 + $0x150] sm:$0xff]
    %v3115 = vld [vmem:[%s17 + $0x158] sm:$0xff]
    %v3116 = vld [vmem:[%s17 + $0x160] sm:$0xff]
    %v3117 = vld [vmem:[%s17 + $0x168] sm:$0xff]
    %v3118 = vld [vmem:[%s17 + $0x170] sm:$0xff]
    %v3119 = vld [vmem:[%s17 + $0x178] sm:$0xff]
    %v3120 = vrot.slane %v2692, 5
    %v3121 = vsel %vm2709, %v3120, 0
    %3123 = vmatprep.subr.mxu0 0.0
    %3124 = vmatpush1.msra.mxu0 0.0
    %3125 = vmatprep.subr.mxu0 0.0
    %3126 = vmatpush1.msra.mxu0 0.0
    %3127 = vmatprep.subr.mxu0 0.0
    %3128 = vmatpush1.msra.mxu0 0.0
    %3129 = vmatprep.subr.mxu0 0.0
    %3130 = vmatpush1.msra.mxu0 0.0
    %3131 = vmatprep.subr.mxu0 0.0
    %3132 = vmatpush1.msra.mxu0 0.0
    %3133 = vmatprep.subr.mxu0 0.0
    %3134 = vmatpush1.msra.mxu0 0.0
    %3135 = vmatprep.subr.mxu0 0.0
    %3136 = vmatpush1.msra.mxu0 0.0
    %3137 = vmatprep.subr.mxu0 0.0
    %3138 = vmatpush1.msra.mxu0 0.0
    %3139 = vmatprep.subr.mxu0 0.0
    %3140 = vmatpush1.msra.mxu0 %v3119
    %3141 = vmatprep.subr.mxu0 0.0
    %3142 = vmatpush1.msra.mxu0 %v3118
    %3143 = vmatprep.subr.mxu0 0.0
    %3144 = vmatpush1.msra.mxu0 %v3117
    %3145 = vmatprep.subr.mxu0 0.0
    %3146 = vmatpush1.msra.mxu0 %v3116
    %3147 = vmatprep.subr.mxu0 0.0
    %3148 = vmatpush1.msra.mxu0 %v3115
    %3149 = vmatprep.subr.mxu0 0.0
    %3150 = vmatpush1.msra.mxu0 %v3114
    %3151 = vmatprep.subr.mxu0 0.0
    %3152 = vmatpush1.msra.mxu0 %v3113
    %3153 = vmatprep.subr.mxu0 0.0
    %3154 = vmatpush1.msra.mxu0 %v3112
    %3155 = vmatprep.subr.mxu0 0.0
    %3156 = vmatpush2.msra.mxu0 0.0
    %3157 = vmatprep.subr.mxu0 0.0
    %3158 = vmatpush2.msra.mxu0 0.0
    %3159 = vmatprep.subr.mxu0 0.0
    %3160 = vmatpush2.msra.mxu0 0.0
    %3161 = vmatprep.subr.mxu0 0.0
    %3162 = vmatpush2.msra.mxu0 0.0
    %3163 = vmatprep.subr.mxu0 0.0
    %3164 = vmatpush2.msra.mxu0 0.0
    %3165 = vmatprep.subr.mxu0 0.0
    %3166 = vmatpush2.msra.mxu0 0.0
    %3167 = vmatprep.subr.mxu0 0.0
    %3168 = vmatpush2.msra.mxu0 0.0
    %3169 = vmatprep.subr.mxu0 0.0
    %3170 = vmatpush2.msra.mxu0 0.0
    %3171 = vmatprep.subr.mxu0 0.0
    %3172 = vmatpush2.msra.mxu0 0.0
    %3173 = vmatprep.subr.mxu0 0.0
    %3174 = vmatpush2.msra.mxu0 0.0
    %3175 = vmatprep.subr.mxu0 0.0
    %3176 = vmatpush2.msra.mxu0 0.0
    %3177 = vmatprep.subr.mxu0 0.0
    %3178 = vmatpush2.msra.mxu0 0.0
    %3179 = vmatprep.subr.mxu0 0.0
    %3180 = vmatpush2.msra.mxu0 0.0
    %3181 = vmatprep.subr.mxu0 0.0
    %3182 = vmatpush2.msra.mxu0 0.0
    %3183 = vmatprep.subr.mxu0 0.0
    %3184 = vmatpush2.msra.mxu0 0.0
    %3185 = vmatprep.subr.mxu0 0.0
    %3186 = vmatpush2.msra.mxu0 0.0
    %3187 = vmatprep.mubr.f32.mxu0 0.0
    %3188 = vmatmul.mubr.f32.gmra.mxu0 %v3121
    %v3189 = vpop.f32.mrf.mxu0
    %v3190 = vadd.f32 0.0, %v3189
    %v3191 = vpop.f32.mrf.mxu0
    %3192 = vdwg.mxu0
    %v3193 = vadd.f32 %v3111, %v3190
    %v3194 = vld [vmem:[%s17 + $0x180] sm:$0xff]
    %v3195 = vld [vmem:[%s17 + $0x188] sm:$0xff]
    %v3196 = vld [vmem:[%s17 + $0x190] sm:$0xff]
    %v3197 = vld [vmem:[%s17 + $0x198] sm:$0xff]
    %v3198 = vld [vmem:[%s17 + $0x1a0] sm:$0xff]
    %v3199 = vld [vmem:[%s17 + $0x1a8] sm:$0xff]
    %v3200 = vld [vmem:[%s17 + $0x1b0] sm:$0xff]
    %v3201 = vld [vmem:[%s17 + $0x1b8] sm:$0xff]
    %v3202 = vrot.slane %v2692, 6
    %v3203 = vsel %vm2709, %v3202, 0
    %3205 = vmatprep.subr.mxu0 0.0
    %3206 = vmatpush1.msra.mxu0 0.0
    %3207 = vmatprep.subr.mxu0 0.0
    %3208 = vmatpush1.msra.mxu0 0.0
    %3209 = vmatprep.subr.mxu0 0.0
    %3210 = vmatpush1.msra.mxu0 0.0
    %3211 = vmatprep.subr.mxu0 0.0
    %3212 = vmatpush1.msra.mxu0 0.0
    %3213 = vmatprep.subr.mxu0 0.0
    %3214 = vmatpush1.msra.mxu0 0.0
    %3215 = vmatprep.subr.mxu0 0.0
    %3216 = vmatpush1.msra.mxu0 0.0
    %3217 = vmatprep.subr.mxu0 0.0
    %3218 = vmatpush1.msra.mxu0 0.0
    %3219 = vmatprep.subr.mxu0 0.0
    %3220 = vmatpush1.msra.mxu0 0.0
    %3221 = vmatprep.subr.mxu0 0.0
    %3222 = vmatpush1.msra.mxu0 %v3201
    %3223 = vmatprep.subr.mxu0 0.0
    %3224 = vmatpush1.msra.mxu0 %v3200
    %3225 = vmatprep.subr.mxu0 0.0
    %3226 = vmatpush1.msra.mxu0 %v3199
    %3227 = vmatprep.subr.mxu0 0.0
    %3228 = vmatpush1.msra.mxu0 %v3198
    %3229 = vmatprep.subr.mxu0 0.0
    %3230 = vmatpush1.msra.mxu0 %v3197
    %3231 = vmatprep.subr.mxu0 0.0
    %3232 = vmatpush1.msra.mxu0 %v3196
    %3233 = vmatprep.subr.mxu0 0.0
    %3234 = vmatpush1.msra.mxu0 %v3195
    %3235 = vmatprep.subr.mxu0 0.0
    %3236 = vmatpush1.msra.mxu0 %v3194
    %3237 = vmatprep.subr.mxu0 0.0
    %3238 = vmatpush2.msra.mxu0 0.0
    %3239 = vmatprep.subr.mxu0 0.0
    %3240 = vmatpush2.msra.mxu0 0.0
    %3241 = vmatprep.subr.mxu0 0.0
    %3242 = vmatpush2.msra.mxu0 0.0
    %3243 = vmatprep.subr.mxu0 0.0
    %3244 = vmatpush2.msra.mxu0 0.0
    %3245 = vmatprep.subr.mxu0 0.0
    %3246 = vmatpush2.msra.mxu0 0.0
    %3247 = vmatprep.subr.mxu0 0.0
    %3248 = vmatpush2.msra.mxu0 0.0
    %3249 = vmatprep.subr.mxu0 0.0
    %3250 = vmatpush2.msra.mxu0 0.0
    %3251 = vmatprep.subr.mxu0 0.0
    %3252 = vmatpush2.msra.mxu0 0.0
    %3253 = vmatprep.subr.mxu0 0.0
    %3254 = vmatpush2.msra.mxu0 0.0
    %3255 = vmatprep.subr.mxu0 0.0
    %3256 = vmatpush2.msra.mxu0 0.0
    %3257 = vmatprep.subr.mxu0 0.0
    %3258 = vmatpush2.msra.mxu0 0.0
    %3259 = vmatprep.subr.mxu0 0.0
    %3260 = vmatpush2.msra.mxu0 0.0
    %3261 = vmatprep.subr.mxu0 0.0
    %3262 = vmatpush2.msra.mxu0 0.0
    %3263 = vmatprep.subr.mxu0 0.0
    %3264 = vmatpush2.msra.mxu0 0.0
    %3265 = vmatprep.subr.mxu0 0.0
    %3266 = vmatpush2.msra.mxu0 0.0
    %3267 = vmatprep.subr.mxu0 0.0
    %3268 = vmatpush2.msra.mxu0 0.0
    %3269 = vmatprep.mubr.f32.mxu0 0.0
    %3270 = vmatmul.mubr.f32.gmra.mxu0 %v3203
    %v3271 = vpop.f32.mrf.mxu0
    %v3272 = vadd.f32 0.0, %v3271
    %v3273 = vpop.f32.mrf.mxu0
    %3274 = vdwg.mxu0
    %v3275 = vadd.f32 %v3193, %v3272
    %v3276 = vld [vmem:[%s17 + $0x1c0] sm:$0xff]
    %v3277 = vld [vmem:[%s17 + $0x1c8] sm:$0xff]
    %v3278 = vld [vmem:[%s17 + $0x1d0] sm:$0xff]
    %v3279 = vld [vmem:[%s17 + $0x1d8] sm:$0xff]
    %v3280 = vld [vmem:[%s17 + $0x1e0] sm:$0xff]
    %v3281 = vld [vmem:[%s17 + $0x1e8] sm:$0xff]
    %v3282 = vld [vmem:[%s17 + $0x1f0] sm:$0xff]
    %v3283 = vld [vmem:[%s17 + $0x1f8] sm:$0xff]
    %v3284 = vrot.slane %v2692, 7
    %v3285 = vsel %vm2709, %v3284, 0
    %3287 = vmatprep.subr.mxu0 0.0
    %3288 = vmatpush1.msra.mxu0 0.0
    %3289 = vmatprep.subr.mxu0 0.0
    %3290 = vmatpush1.msra.mxu0 0.0
    %3291 = vmatprep.subr.mxu0 0.0
    %3292 = vmatpush1.msra.mxu0 0.0
    %3293 = vmatprep.subr.mxu0 0.0
    %3294 = vmatpush1.msra.mxu0 0.0
    %3295 = vmatprep.subr.mxu0 0.0
    %3296 = vmatpush1.msra.mxu0 0.0
    %3297 = vmatprep.subr.mxu0 0.0
    %3298 = vmatpush1.msra.mxu0 0.0
    %3299 = vmatprep.subr.mxu0 0.0
    %3300 = vmatpush1.msra.mxu0 0.0
    %3301 = vmatprep.subr.mxu0 0.0
    %3302 = vmatpush1.msra.mxu0 0.0
    %3303 = vmatprep.subr.mxu0 0.0
    %3304 = vmatpush1.msra.mxu0 %v3283
    %3305 = vmatprep.subr.mxu0 0.0
    %3306 = vmatpush1.msra.mxu0 %v3282
    %3307 = vmatprep.subr.mxu0 0.0
    %3308 = vmatpush1.msra.mxu0 %v3281
    %3309 = vmatprep.subr.mxu0 0.0
    %3310 = vmatpush1.msra.mxu0 %v3280
    %3311 = vmatprep.subr.mxu0 0.0
    %3312 = vmatpush1.msra.mxu0 %v3279
    %3313 = vmatprep.subr.mxu0 0.0
    %3314 = vmatpush1.msra.mxu0 %v3278
    %3315 = vmatprep.subr.mxu0 0.0
    %3316 = vmatpush1.msra.mxu0 %v3277
    %3317 = vmatprep.subr.mxu0 0.0
    %3318 = vmatpush1.msra.mxu0 %v3276
    %3319 = vmatprep.subr.mxu0 0.0
    %3320 = vmatpush2.msra.mxu0 0.0
    %3321 = vmatprep.subr.mxu0 0.0
    %3322 = vmatpush2.msra.mxu0 0.0
    %3323 = vmatprep.subr.mxu0 0.0
    %3324 = vmatpush2.msra.mxu0 0.0
    %3325 = vmatprep.subr.mxu0 0.0
    %3326 = vmatpush2.msra.mxu0 0.0
    %3327 = vmatprep.subr.mxu0 0.0
    %3328 = vmatpush2.msra.mxu0 0.0
    %3329 = vmatprep.subr.mxu0 0.0
    %3330 = vmatpush2.msra.mxu0 0.0
    %3331 = vmatprep.subr.mxu0 0.0
    %3332 = vmatpush2.msra.mxu0 0.0
    %3333 = vmatprep.subr.mxu0 0.0
    %3334 = vmatpush2.msra.mxu0 0.0
    %3335 = vmatprep.subr.mxu0 0.0
    %3336 = vmatpush2.msra.mxu0 0.0
    %3337 = vmatprep.subr.mxu0 0.0
    %3338 = vmatpush2.msra.mxu0 0.0
    %3339 = vmatprep.subr.mxu0 0.0
    %3340 = vmatpush2.msra.mxu0 0.0
    %3341 = vmatprep.subr.mxu0 0.0
    %3342 = vmatpush2.msra.mxu0 0.0
    %3343 = vmatprep.subr.mxu0 0.0
    %3344 = vmatpush2.msra.mxu0 0.0
    %3345 = vmatprep.subr.mxu0 0.0
    %3346 = vmatpush2.msra.mxu0 0.0
    %3347 = vmatprep.subr.mxu0 0.0
    %3348 = vmatpush2.msra.mxu0 0.0
    %3349 = vmatprep.subr.mxu0 0.0
    %3350 = vmatpush2.msra.mxu0 0.0
    %3351 = vmatprep.mubr.f32.mxu0 0.0
    %3352 = vmatmul.mubr.f32.gmra.mxu0 %v3285
    %v3353 = vpop.f32.mrf.mxu0
    %v3354 = vadd.f32 0.0, %v3353
    %v3355 = vpop.f32.mrf.mxu0
    %3356 = vdwg.mxu0
    %v3357 = vadd.f32 %v3275, %v3354
    %v3358 = vld [vmem:[%s17 + $0x200] sm:$0xff]
    %v3359 = vld [vmem:[%s17 + $0x208] sm:$0xff]
    %v3360 = vld [vmem:[%s17 + $0x210] sm:$0xff]
    %v3361 = vld [vmem:[%s17 + $0x218] sm:$0xff]
    %v3362 = vld [vmem:[%s17 + $0x220] sm:$0xff]
    %v3363 = vld [vmem:[%s17 + $0x228] sm:$0xff]
    %v3364 = vld [vmem:[%s17 + $0x230] sm:$0xff]
    %v3365 = vld [vmem:[%s17 + $0x238] sm:$0xff]
    %v3367 = vsel %vm2709, %v2697, 0
    %3369 = vmatprep.subr.mxu0 0.0
    %3370 = vmatpush1.msra.mxu0 0.0
    %3371 = vmatprep.subr.mxu0 0.0
    %3372 = vmatpush1.msra.mxu0 0.0
    %3373 = vmatprep.subr.mxu0 0.0
    %3374 = vmatpush1.msra.mxu0 0.0
    %3375 = vmatprep.subr.mxu0 0.0
    %3376 = vmatpush1.msra.mxu0 0.0
    %3377 = vmatprep.subr.mxu0 0.0
    %3378 = vmatpush1.msra.mxu0 0.0
    %3379 = vmatprep.subr.mxu0 0.0
    %3380 = vmatpush1.msra.mxu0 0.0
    %3381 = vmatprep.subr.mxu0 0.0
    %3382 = vmatpush1.msra.mxu0 0.0
    %3383 = vmatprep.subr.mxu0 0.0
    %3384 = vmatpush1.msra.mxu0 0.0
    %3385 = vmatprep.subr.mxu0 0.0
    %3386 = vmatpush1.msra.mxu0 %v3365
    %3387 = vmatprep.subr.mxu0 0.0
    %3388 = vmatpush1.msra.mxu0 %v3364
    %3389 = vmatprep.subr.mxu0 0.0
    %3390 = vmatpush1.msra.mxu0 %v3363
    %3391 = vmatprep.subr.mxu0 0.0
    %3392 = vmatpush1.msra.mxu0 %v3362
    %3393 = vmatprep.subr.mxu0 0.0
    %3394 = vmatpush1.msra.mxu0 %v3361
    %3395 = vmatprep.subr.mxu0 0.0
    %3396 = vmatpush1.msra.mxu0 %v3360
    %3397 = vmatprep.subr.mxu0 0.0
    %3398 = vmatpush1.msra.mxu0 %v3359
    %3399 = vmatprep.subr.mxu0 0.0
    %3400 = vmatpush1.msra.mxu0 %v3358
    %3401 = vmatprep.subr.mxu0 0.0
    %3402 = vmatpush2.msra.mxu0 0.0
    %3403 = vmatprep.subr.mxu0 0.0
    %3404 = vmatpush2.msra.mxu0 0.0
    %3405 = vmatprep.subr.mxu0 0.0
    %3406 = vmatpush2.msra.mxu0 0.0
    %3407 = vmatprep.subr.mxu0 0.0
    %3408 = vmatpush2.msra.mxu0 0.0
    %3409 = vmatprep.subr.mxu0 0.0
    %3410 = vmatpush2.msra.mxu0 0.0
    %3411 = vmatprep.subr.mxu0 0.0
    %3412 = vmatpush2.msra.mxu0 0.0
    %3413 = vmatprep.subr.mxu0 0.0
    %3414 = vmatpush2.msra.mxu0 0.0
    %3415 = vmatprep.subr.mxu0 0.0
    %3416 = vmatpush2.msra.mxu0 0.0
    %3417 = vmatprep.subr.mxu0 0.0
    %3418 = vmatpush2.msra.mxu0 0.0
    %3419 = vmatprep.subr.mxu0 0.0
    %3420 = vmatpush2.msra.mxu0 0.0
    %3421 = vmatprep.subr.mxu0 0.0
    %3422 = vmatpush2.msra.mxu0 0.0
    %3423 = vmatprep.subr.mxu0 0.0
    %3424 = vmatpush2.msra.mxu0 0.0
    %3425 = vmatprep.subr.mxu0 0.0
    %3426 = vmatpush2.msra.mxu0 0.0
    %3427 = vmatprep.subr.mxu0 0.0
    %3428 = vmatpush2.msra.mxu0 0.0
    %3429 = vmatprep.subr.mxu0 0.0
    %3430 = vmatpush2.msra.mxu0 0.0
    %3431 = vmatprep.subr.mxu0 0.0
    %3432 = vmatpush2.msra.mxu0 0.0
    %3433 = vmatprep.mubr.f32.mxu0 0.0
    %3434 = vmatmul.mubr.f32.gmra.mxu0 %v3367
    %v3435 = vpop.f32.mrf.mxu0
    %v3436 = vadd.f32 0.0, %v3435
    %v3437 = vpop.f32.mrf.mxu0
    %3438 = vdwg.mxu0
    %v3439 = vadd.f32 %v3357, %v3436
    %v3440 = vld [vmem:[%s17 + $0x240] sm:$0xff]
    %v3441 = vld [vmem:[%s17 + $0x248] sm:$0xff]
    %v3442 = vld [vmem:[%s17 + $0x250] sm:$0xff]
    %v3443 = vld [vmem:[%s17 + $0x258] sm:$0xff]
    %v3444 = vld [vmem:[%s17 + $0x260] sm:$0xff]
    %v3445 = vld [vmem:[%s17 + $0x268] sm:$0xff]
    %v3446 = vld [vmem:[%s17 + $0x270] sm:$0xff]
    %v3447 = vld [vmem:[%s17 + $0x278] sm:$0xff]
    %v3448 = vrot.slane %v2697, 1
    %v3449 = vsel %vm2709, %v3448, 0
    %3451 = vmatprep.subr.mxu0 0.0
    %3452 = vmatpush1.msra.mxu0 0.0
    %3453 = vmatprep.subr.mxu0 0.0
    %3454 = vmatpush1.msra.mxu0 0.0
    %3455 = vmatprep.subr.mxu0 0.0
    %3456 = vmatpush1.msra.mxu0 0.0
    %3457 = vmatprep.subr.mxu0 0.0
    %3458 = vmatpush1.msra.mxu0 0.0
    %3459 = vmatprep.subr.mxu0 0.0
    %3460 = vmatpush1.msra.mxu0 0.0
    %3461 = vmatprep.subr.mxu0 0.0
    %3462 = vmatpush1.msra.mxu0 0.0
    %3463 = vmatprep.subr.mxu0 0.0
    %3464 = vmatpush1.msra.mxu0 0.0
    %3465 = vmatprep.subr.mxu0 0.0
    %3466 = vmatpush1.msra.mxu0 0.0
    %3467 = vmatprep.subr.mxu0 0.0
    %3468 = vmatpush1.msra.mxu0 %v3447
    %3469 = vmatprep.subr.mxu0 0.0
    %3470 = vmatpush1.msra.mxu0 %v3446
    %3471 = vmatprep.subr.mxu0 0.0
    %3472 = vmatpush1.msra.mxu0 %v3445
    %3473 = vmatprep.subr.mxu0 0.0
    %3474 = vmatpush1.msra.mxu0 %v3444
    %3475 = vmatprep.subr.mxu0 0.0
    %3476 = vmatpush1.msra.mxu0 %v3443
    %3477 = vmatprep.subr.mxu0 0.0
    %3478 = vmatpush1.msra.mxu0 %v3442
    %3479 = vmatprep.subr.mxu0 0.0
    %3480 = vmatpush1.msra.mxu0 %v3441
    %3481 = vmatprep.subr.mxu0 0.0
    %3482 = vmatpush1.msra.mxu0 %v3440
    %3483 = vmatprep.subr.mxu0 0.0
    %3484 = vmatpush2.msra.mxu0 0.0
    %3485 = vmatprep.subr.mxu0 0.0
    %3486 = vmatpush2.msra.mxu0 0.0
    %3487 = vmatprep.subr.mxu0 0.0
    %3488 = vmatpush2.msra.mxu0 0.0
    %3489 = vmatprep.subr.mxu0 0.0
    %3490 = vmatpush2.msra.mxu0 0.0
    %3491 = vmatprep.subr.mxu0 0.0
    %3492 = vmatpush2.msra.mxu0 0.0
    %3493 = vmatprep.subr.mxu0 0.0
    %3494 = vmatpush2.msra.mxu0 0.0
    %3495 = vmatprep.subr.mxu0 0.0
    %3496 = vmatpush2.msra.mxu0 0.0
    %3497 = vmatprep.subr.mxu0 0.0
    %3498 = vmatpush2.msra.mxu0 0.0
    %3499 = vmatprep.subr.mxu0 0.0
    %3500 = vmatpush2.msra.mxu0 0.0
    %3501 = vmatprep.subr.mxu0 0.0
    %3502 = vmatpush2.msra.mxu0 0.0
    %3503 = vmatprep.subr.mxu0 0.0
    %3504 = vmatpush2.msra.mxu0 0.0
    %3505 = vmatprep.subr.mxu0 0.0
    %3506 = vmatpush2.msra.mxu0 0.0
    %3507 = vmatprep.subr.mxu0 0.0
    %3508 = vmatpush2.msra.mxu0 0.0
    %3509 = vmatprep.subr.mxu0 0.0
    %3510 = vmatpush2.msra.mxu0 0.0
    %3511 = vmatprep.subr.mxu0 0.0
    %3512 = vmatpush2.msra.mxu0 0.0
    %3513 = vmatprep.subr.mxu0 0.0
    %3514 = vmatpush2.msra.mxu0 0.0
    %3515 = vmatprep.mubr.f32.mxu0 0.0
    %3516 = vmatmul.mubr.f32.gmra.mxu0 %v3449
    %v3517 = vpop.f32.mrf.mxu0
    %v3518 = vadd.f32 0.0, %v3517
    %v3519 = vpop.f32.mrf.mxu0
    %3520 = vdwg.mxu0
    %v3521 = vadd.f32 %v3439, %v3518
    %v3522 = vld [vmem:[%s17 + $0x280] sm:$0xff]
    %v3523 = vld [vmem:[%s17 + $0x288] sm:$0xff]
    %v3524 = vld [vmem:[%s17 + $0x290] sm:$0xff]
    %v3525 = vld [vmem:[%s17 + $0x298] sm:$0xff]
    %v3526 = vld [vmem:[%s17 + $0x2a0] sm:$0xff]
    %v3527 = vld [vmem:[%s17 + $0x2a8] sm:$0xff]
    %v3528 = vld [vmem:[%s17 + $0x2b0] sm:$0xff]
    %v3529 = vld [vmem:[%s17 + $0x2b8] sm:$0xff]
    %v3530 = vrot.slane %v2697, 2
    %v3531 = vsel %vm2709, %v3530, 0
    %3533 = vmatprep.subr.mxu0 0.0
    %3534 = vmatpush1.msra.mxu0 0.0
    %3535 = vmatprep.subr.mxu0 0.0
    %3536 = vmatpush1.msra.mxu0 0.0
    %3537 = vmatprep.subr.mxu0 0.0
    %3538 = vmatpush1.msra.mxu0 0.0
    %3539 = vmatprep.subr.mxu0 0.0
    %3540 = vmatpush1.msra.mxu0 0.0
    %3541 = vmatprep.subr.mxu0 0.0
    %3542 = vmatpush1.msra.mxu0 0.0
    %3543 = vmatprep.subr.mxu0 0.0
    %3544 = vmatpush1.msra.mxu0 0.0
    %3545 = vmatprep.subr.mxu0 0.0
    %3546 = vmatpush1.msra.mxu0 0.0
    %3547 = vmatprep.subr.mxu0 0.0
    %3548 = vmatpush1.msra.mxu0 0.0
    %3549 = vmatprep.subr.mxu0 0.0
    %3550 = vmatpush1.msra.mxu0 %v3529
    %3551 = vmatprep.subr.mxu0 0.0
    %3552 = vmatpush1.msra.mxu0 %v3528
    %3553 = vmatprep.subr.mxu0 0.0
    %3554 = vmatpush1.msra.mxu0 %v3527
    %3555 = vmatprep.subr.mxu0 0.0
    %3556 = vmatpush1.msra.mxu0 %v3526
    %3557 = vmatprep.subr.mxu0 0.0
    %3558 = vmatpush1.msra.mxu0 %v3525
    %3559 = vmatprep.subr.mxu0 0.0
    %3560 = vmatpush1.msra.mxu0 %v3524
    %3561 = vmatprep.subr.mxu0 0.0
    %3562 = vmatpush1.msra.mxu0 %v3523
    %3563 = vmatprep.subr.mxu0 0.0
    %3564 = vmatpush1.msra.mxu0 %v3522
    %3565 = vmatprep.subr.mxu0 0.0
    %3566 = vmatpush2.msra.mxu0 0.0
    %3567 = vmatprep.subr.mxu0 0.0
    %3568 = vmatpush2.msra.mxu0 0.0
    %3569 = vmatprep.subr.mxu0 0.0
    %3570 = vmatpush2.msra.mxu0 0.0
    %3571 = vmatprep.subr.mxu0 0.0
    %3572 = vmatpush2.msra.mxu0 0.0
    %3573 = vmatprep.subr.mxu0 0.0
    %3574 = vmatpush2.msra.mxu0 0.0
    %3575 = vmatprep.subr.mxu0 0.0
    %3576 = vmatpush2.msra.mxu0 0.0
    %3577 = vmatprep.subr.mxu0 0.0
    %3578 = vmatpush2.msra.mxu0 0.0
    %3579 = vmatprep.subr.mxu0 0.0
    %3580 = vmatpush2.msra.mxu0 0.0
    %3581 = vmatprep.subr.mxu0 0.0
    %3582 = vmatpush2.msra.mxu0 0.0
    %3583 = vmatprep.subr.mxu0 0.0
    %3584 = vmatpush2.msra.mxu0 0.0
    %3585 = vmatprep.subr.mxu0 0.0
    %3586 = vmatpush2.msra.mxu0 0.0
    %3587 = vmatprep.subr.mxu0 0.0
    %3588 = vmatpush2.msra.mxu0 0.0
    %3589 = vmatprep.subr.mxu0 0.0
    %3590 = vmatpush2.msra.mxu0 0.0
    %3591 = vmatprep.subr.mxu0 0.0
    %3592 = vmatpush2.msra.mxu0 0.0
    %3593 = vmatprep.subr.mxu0 0.0
    %3594 = vmatpush2.msra.mxu0 0.0
    %3595 = vmatprep.subr.mxu0 0.0
    %3596 = vmatpush2.msra.mxu0 0.0
    %3597 = vmatprep.mubr.f32.mxu0 0.0
    %3598 = vmatmul.mubr.f32.gmra.mxu0 %v3531
    %v3599 = vpop.f32.mrf.mxu0
    %v3600 = vadd.f32 0.0, %v3599
    %v3601 = vpop.f32.mrf.mxu0
    %3602 = vdwg.mxu0
    %v3603 = vadd.f32 %v3521, %v3600
    %v3604 = vld [vmem:[%s17 + $0x2c0] sm:$0xff]
    %v3605 = vld [vmem:[%s17 + $0x2c8] sm:$0xff]
    %v3606 = vld [vmem:[%s17 + $0x2d0] sm:$0xff]
    %v3607 = vld [vmem:[%s17 + $0x2d8] sm:$0xff]
    %v3608 = vld [vmem:[%s17 + $0x2e0] sm:$0xff]
    %v3609 = vld [vmem:[%s17 + $0x2e8] sm:$0xff]
    %v3610 = vld [vmem:[%s17 + $0x2f0] sm:$0xff]
    %v3611 = vld [vmem:[%s17 + $0x2f8] sm:$0xff]
    %v3612 = vrot.slane %v2697, 3
    %v3613 = vsel %vm2709, %v3612, 0
    %3615 = vmatprep.subr.mxu0 0.0
    %3616 = vmatpush1.msra.mxu0 0.0
    %3617 = vmatprep.subr.mxu0 0.0
    %3618 = vmatpush1.msra.mxu0 0.0
    %3619 = vmatprep.subr.mxu0 0.0
    %3620 = vmatpush1.msra.mxu0 0.0
    %3621 = vmatprep.subr.mxu0 0.0
    %3622 = vmatpush1.msra.mxu0 0.0
    %3623 = vmatprep.subr.mxu0 0.0
    %3624 = vmatpush1.msra.mxu0 0.0
    %3625 = vmatprep.subr.mxu0 0.0
    %3626 = vmatpush1.msra.mxu0 0.0
    %3627 = vmatprep.subr.mxu0 0.0
    %3628 = vmatpush1.msra.mxu0 0.0
    %3629 = vmatprep.subr.mxu0 0.0
    %3630 = vmatpush1.msra.mxu0 0.0
    %3631 = vmatprep.subr.mxu0 0.0
    %3632 = vmatpush1.msra.mxu0 %v3611
    %3633 = vmatprep.subr.mxu0 0.0
    %3634 = vmatpush1.msra.mxu0 %v3610
    %3635 = vmatprep.subr.mxu0 0.0
    %3636 = vmatpush1.msra.mxu0 %v3609
    %3637 = vmatprep.subr.mxu0 0.0
    %3638 = vmatpush1.msra.mxu0 %v3608
    %3639 = vmatprep.subr.mxu0 0.0
    %3640 = vmatpush1.msra.mxu0 %v3607
    %3641 = vmatprep.subr.mxu0 0.0
    %3642 = vmatpush1.msra.mxu0 %v3606
    %3643 = vmatprep.subr.mxu0 0.0
    %3644 = vmatpush1.msra.mxu0 %v3605
    %3645 = vmatprep.subr.mxu0 0.0
    %3646 = vmatpush1.msra.mxu0 %v3604
    %3647 = vmatprep.subr.mxu0 0.0
    %3648 = vmatpush2.msra.mxu0 0.0
    %3649 = vmatprep.subr.mxu0 0.0
    %3650 = vmatpush2.msra.mxu0 0.0
    %3651 = vmatprep.subr.mxu0 0.0
    %3652 = vmatpush2.msra.mxu0 0.0
    %3653 = vmatprep.subr.mxu0 0.0
    %3654 = vmatpush2.msra.mxu0 0.0
    %3655 = vmatprep.subr.mxu0 0.0
    %3656 = vmatpush2.msra.mxu0 0.0
    %3657 = vmatprep.subr.mxu0 0.0
    %3658 = vmatpush2.msra.mxu0 0.0
    %3659 = vmatprep.subr.mxu0 0.0
    %3660 = vmatpush2.msra.mxu0 0.0
    %3661 = vmatprep.subr.mxu0 0.0
    %3662 = vmatpush2.msra.mxu0 0.0
    %3663 = vmatprep.subr.mxu0 0.0
    %3664 = vmatpush2.msra.mxu0 0.0
    %3665 = vmatprep.subr.mxu0 0.0
    %3666 = vmatpush2.msra.mxu0 0.0
    %3667 = vmatprep.subr.mxu0 0.0
    %3668 = vmatpush2.msra.mxu0 0.0
    %3669 = vmatprep.subr.mxu0 0.0
    %3670 = vmatpush2.msra.mxu0 0.0
    %3671 = vmatprep.subr.mxu0 0.0
    %3672 = vmatpush2.msra.mxu0 0.0
    %3673 = vmatprep.subr.mxu0 0.0
    %3674 = vmatpush2.msra.mxu0 0.0
    %3675 = vmatprep.subr.mxu0 0.0
    %3676 = vmatpush2.msra.mxu0 0.0
    %3677 = vmatprep.subr.mxu0 0.0
    %3678 = vmatpush2.msra.mxu0 0.0
    %3679 = vmatprep.mubr.f32.mxu0 0.0
    %3680 = vmatmul.mubr.f32.gmra.mxu0 %v3613
    %v3681 = vpop.f32.mrf.mxu0
    %v3682 = vadd.f32 0.0, %v3681
    %v3683 = vpop.f32.mrf.mxu0
    %3684 = vdwg.mxu0
    %v3685 = vadd.f32 %v3603, %v3682
    %v3686 = vld [vmem:[%s17 + $0x300] sm:$0xff]
    %v3687 = vld [vmem:[%s17 + $0x308] sm:$0xff]
    %v3688 = vld [vmem:[%s17 + $0x310] sm:$0xff]
    %v3689 = vld [vmem:[%s17 + $0x318] sm:$0xff]
    %v3690 = vld [vmem:[%s17 + $0x320] sm:$0xff]
    %v3691 = vld [vmem:[%s17 + $0x328] sm:$0xff]
    %v3692 = vld [vmem:[%s17 + $0x330] sm:$0xff]
    %v3693 = vld [vmem:[%s17 + $0x338] sm:$0xff]
    %v3694 = vrot.slane %v2697, 4
    %v3695 = vsel %vm2709, %v3694, 0
    %3697 = vmatprep.subr.mxu0 0.0
    %3698 = vmatpush1.msra.mxu0 0.0
    %3699 = vmatprep.subr.mxu0 0.0
    %3700 = vmatpush1.msra.mxu0 0.0
    %3701 = vmatprep.subr.mxu0 0.0
    %3702 = vmatpush1.msra.mxu0 0.0
    %3703 = vmatprep.subr.mxu0 0.0
    %3704 = vmatpush1.msra.mxu0 0.0
    %3705 = vmatprep.subr.mxu0 0.0
    %3706 = vmatpush1.msra.mxu0 0.0
    %3707 = vmatprep.subr.mxu0 0.0
    %3708 = vmatpush1.msra.mxu0 0.0
    %3709 = vmatprep.subr.mxu0 0.0
    %3710 = vmatpush1.msra.mxu0 0.0
    %3711 = vmatprep.subr.mxu0 0.0
    %3712 = vmatpush1.msra.mxu0 0.0
    %3713 = vmatprep.subr.mxu0 0.0
    %3714 = vmatpush1.msra.mxu0 %v3693
    %3715 = vmatprep.subr.mxu0 0.0
    %3716 = vmatpush1.msra.mxu0 %v3692
    %3717 = vmatprep.subr.mxu0 0.0
    %3718 = vmatpush1.msra.mxu0 %v3691
    %3719 = vmatprep.subr.mxu0 0.0
    %3720 = vmatpush1.msra.mxu0 %v3690
    %3721 = vmatprep.subr.mxu0 0.0
    %3722 = vmatpush1.msra.mxu0 %v3689
    %3723 = vmatprep.subr.mxu0 0.0
    %3724 = vmatpush1.msra.mxu0 %v3688
    %3725 = vmatprep.subr.mxu0 0.0
    %3726 = vmatpush1.msra.mxu0 %v3687
    %3727 = vmatprep.subr.mxu0 0.0
    %3728 = vmatpush1.msra.mxu0 %v3686
    %3729 = vmatprep.subr.mxu0 0.0
    %3730 = vmatpush2.msra.mxu0 0.0
    %3731 = vmatprep.subr.mxu0 0.0
    %3732 = vmatpush2.msra.mxu0 0.0
    %3733 = vmatprep.subr.mxu0 0.0
    %3734 = vmatpush2.msra.mxu0 0.0
    %3735 = vmatprep.subr.mxu0 0.0
    %3736 = vmatpush2.msra.mxu0 0.0
    %3737 = vmatprep.subr.mxu0 0.0
    %3738 = vmatpush2.msra.mxu0 0.0
    %3739 = vmatprep.subr.mxu0 0.0
    %3740 = vmatpush2.msra.mxu0 0.0
    %3741 = vmatprep.subr.mxu0 0.0
    %3742 = vmatpush2.msra.mxu0 0.0
    %3743 = vmatprep.subr.mxu0 0.0
    %3744 = vmatpush2.msra.mxu0 0.0
    %3745 = vmatprep.subr.mxu0 0.0
    %3746 = vmatpush2.msra.mxu0 0.0
    %3747 = vmatprep.subr.mxu0 0.0
    %3748 = vmatpush2.msra.mxu0 0.0
    %3749 = vmatprep.subr.mxu0 0.0
    %3750 = vmatpush2.msra.mxu0 0.0
    %3751 = vmatprep.subr.mxu0 0.0
    %3752 = vmatpush2.msra.mxu0 0.0
    %3753 = vmatprep.subr.mxu0 0.0
    %3754 = vmatpush2.msra.mxu0 0.0
    %3755 = vmatprep.subr.mxu0 0.0
    %3756 = vmatpush2.msra.mxu0 0.0
    %3757 = vmatprep.subr.mxu0 0.0
    %3758 = vmatpush2.msra.mxu0 0.0
    %3759 = vmatprep.subr.mxu0 0.0
    %3760 = vmatpush2.msra.mxu0 0.0
    %3761 = vmatprep.mubr.f32.mxu0 0.0
    %3762 = vmatmul.mubr.f32.gmra.mxu0 %v3695
    %v3763 = vpop.f32.mrf.mxu0
    %v3764 = vadd.f32 0.0, %v3763
    %v3765 = vpop.f32.mrf.mxu0
    %3766 = vdwg.mxu0
    %v3767 = vadd.f32 %v3685, %v3764
    %v3768 = vld [vmem:[%s17 + $0x340] sm:$0xff]
    %v3769 = vld [vmem:[%s17 + $0x348] sm:$0xff]
    %v3770 = vld [vmem:[%s17 + $0x350] sm:$0xff]
    %v3771 = vld [vmem:[%s17 + $0x358] sm:$0xff]
    %v3772 = vld [vmem:[%s17 + $0x360] sm:$0xff]
    %v3773 = vld [vmem:[%s17 + $0x368] sm:$0xff]
    %v3774 = vld [vmem:[%s17 + $0x370] sm:$0xff]
    %v3775 = vld [vmem:[%s17 + $0x378] sm:$0xff]
    %v3776 = vrot.slane %v2697, 5
    %v3777 = vsel %vm2709, %v3776, 0
    %3779 = vmatprep.subr.mxu0 0.0
    %3780 = vmatpush1.msra.mxu0 0.0
    %3781 = vmatprep.subr.mxu0 0.0
    %3782 = vmatpush1.msra.mxu0 0.0
    %3783 = vmatprep.subr.mxu0 0.0
    %3784 = vmatpush1.msra.mxu0 0.0
    %3785 = vmatprep.subr.mxu0 0.0
    %3786 = vmatpush1.msra.mxu0 0.0
    %3787 = vmatprep.subr.mxu0 0.0
    %3788 = vmatpush1.msra.mxu0 0.0
    %3789 = vmatprep.subr.mxu0 0.0
    %3790 = vmatpush1.msra.mxu0 0.0
    %3791 = vmatprep.subr.mxu0 0.0
    %3792 = vmatpush1.msra.mxu0 0.0
    %3793 = vmatprep.subr.mxu0 0.0
    %3794 = vmatpush1.msra.mxu0 0.0
    %3795 = vmatprep.subr.mxu0 0.0
    %3796 = vmatpush1.msra.mxu0 %v3775
    %3797 = vmatprep.subr.mxu0 0.0
    %3798 = vmatpush1.msra.mxu0 %v3774
    %3799 = vmatprep.subr.mxu0 0.0
    %3800 = vmatpush1.msra.mxu0 %v3773
    %3801 = vmatprep.subr.mxu0 0.0
    %3802 = vmatpush1.msra.mxu0 %v3772
    %3803 = vmatprep.subr.mxu0 0.0
    %3804 = vmatpush1.msra.mxu0 %v3771
    %3805 = vmatprep.subr.mxu0 0.0
    %3806 = vmatpush1.msra.mxu0 %v3770
    %3807 = vmatprep.subr.mxu0 0.0
    %3808 = vmatpush1.msra.mxu0 %v3769
    %3809 = vmatprep.subr.mxu0 0.0
    %3810 = vmatpush1.msra.mxu0 %v3768
    %3811 = vmatprep.subr.mxu0 0.0
    %3812 = vmatpush2.msra.mxu0 0.0
    %3813 = vmatprep.subr.mxu0 0.0
    %3814 = vmatpush2.msra.mxu0 0.0
    %3815 = vmatprep.subr.mxu0 0.0
    %3816 = vmatpush2.msra.mxu0 0.0
    %3817 = vmatprep.subr.mxu0 0.0
    %3818 = vmatpush2.msra.mxu0 0.0
    %3819 = vmatprep.subr.mxu0 0.0
    %3820 = vmatpush2.msra.mxu0 0.0
    %3821 = vmatprep.subr.mxu0 0.0
    %3822 = vmatpush2.msra.mxu0 0.0
    %3823 = vmatprep.subr.mxu0 0.0
    %3824 = vmatpush2.msra.mxu0 0.0
    %3825 = vmatprep.subr.mxu0 0.0
    %3826 = vmatpush2.msra.mxu0 0.0
    %3827 = vmatprep.subr.mxu0 0.0
    %3828 = vmatpush2.msra.mxu0 0.0
    %3829 = vmatprep.subr.mxu0 0.0
    %3830 = vmatpush2.msra.mxu0 0.0
    %3831 = vmatprep.subr.mxu0 0.0
    %3832 = vmatpush2.msra.mxu0 0.0
    %3833 = vmatprep.subr.mxu0 0.0
    %3834 = vmatpush2.msra.mxu0 0.0
    %3835 = vmatprep.subr.mxu0 0.0
    %3836 = vmatpush2.msra.mxu0 0.0
    %3837 = vmatprep.subr.mxu0 0.0
    %3838 = vmatpush2.msra.mxu0 0.0
    %3839 = vmatprep.subr.mxu0 0.0
    %3840 = vmatpush2.msra.mxu0 0.0
    %3841 = vmatprep.subr.mxu0 0.0
    %3842 = vmatpush2.msra.mxu0 0.0
    %3843 = vmatprep.mubr.f32.mxu0 0.0
    %3844 = vmatmul.mubr.f32.gmra.mxu0 %v3777
    %v3845 = vpop.f32.mrf.mxu0
    %v3846 = vadd.f32 0.0, %v3845
    %v3847 = vpop.f32.mrf.mxu0
    %3848 = vdwg.mxu0
    %v3849 = vadd.f32 %v3767, %v3846
    %v3850 = vld [vmem:[%s17 + $0x380] sm:$0xff]
    %v3851 = vld [vmem:[%s17 + $0x388] sm:$0xff]
    %v3852 = vld [vmem:[%s17 + $0x390] sm:$0xff]
    %v3853 = vld [vmem:[%s17 + $0x398] sm:$0xff]
    %v3854 = vld [vmem:[%s17 + $0x3a0] sm:$0xff]
    %v3855 = vld [vmem:[%s17 + $0x3a8] sm:$0xff]
    %v3856 = vld [vmem:[%s17 + $0x3b0] sm:$0xff]
    %v3857 = vld [vmem:[%s17 + $0x3b8] sm:$0xff]
    %v3858 = vrot.slane %v2697, 6
    %v3859 = vsel %vm2709, %v3858, 0
    %3861 = vmatprep.subr.mxu0 0.0
    %3862 = vmatpush1.msra.mxu0 0.0
    %3863 = vmatprep.subr.mxu0 0.0
    %3864 = vmatpush1.msra.mxu0 0.0
    %3865 = vmatprep.subr.mxu0 0.0
    %3866 = vmatpush1.msra.mxu0 0.0
    %3867 = vmatprep.subr.mxu0 0.0
    %3868 = vmatpush1.msra.mxu0 0.0
    %3869 = vmatprep.subr.mxu0 0.0
    %3870 = vmatpush1.msra.mxu0 0.0
    %3871 = vmatprep.subr.mxu0 0.0
    %3872 = vmatpush1.msra.mxu0 0.0
    %3873 = vmatprep.subr.mxu0 0.0
    %3874 = vmatpush1.msra.mxu0 0.0
    %3875 = vmatprep.subr.mxu0 0.0
    %3876 = vmatpush1.msra.mxu0 0.0
    %3877 = vmatprep.subr.mxu0 0.0
    %3878 = vmatpush1.msra.mxu0 %v3857
    %3879 = vmatprep.subr.mxu0 0.0
    %3880 = vmatpush1.msra.mxu0 %v3856
    %3881 = vmatprep.subr.mxu0 0.0
    %3882 = vmatpush1.msra.mxu0 %v3855
    %3883 = vmatprep.subr.mxu0 0.0
    %3884 = vmatpush1.msra.mxu0 %v3854
    %3885 = vmatprep.subr.mxu0 0.0
    %3886 = vmatpush1.msra.mxu0 %v3853
    %3887 = vmatprep.subr.mxu0 0.0
    %3888 = vmatpush1.msra.mxu0 %v3852
    %3889 = vmatprep.subr.mxu0 0.0
    %3890 = vmatpush1.msra.mxu0 %v3851
    %3891 = vmatprep.subr.mxu0 0.0
    %3892 = vmatpush1.msra.mxu0 %v3850
    %3893 = vmatprep.subr.mxu0 0.0
    %3894 = vmatpush2.msra.mxu0 0.0
    %3895 = vmatprep.subr.mxu0 0.0
    %3896 = vmatpush2.msra.mxu0 0.0
    %3897 = vmatprep.subr.mxu0 0.0
    %3898 = vmatpush2.msra.mxu0 0.0
    %3899 = vmatprep.subr.mxu0 0.0
    %3900 = vmatpush2.msra.mxu0 0.0
    %3901 = vmatprep.subr.mxu0 0.0
    %3902 = vmatpush2.msra.mxu0 0.0
    %3903 = vmatprep.subr.mxu0 0.0
    %3904 = vmatpush2.msra.mxu0 0.0
    %3905 = vmatprep.subr.mxu0 0.0
    %3906 = vmatpush2.msra.mxu0 0.0
    %3907 = vmatprep.subr.mxu0 0.0
    %3908 = vmatpush2.msra.mxu0 0.0
    %3909 = vmatprep.subr.mxu0 0.0
    %3910 = vmatpush2.msra.mxu0 0.0
    %3911 = vmatprep.subr.mxu0 0.0
    %3912 = vmatpush2.msra.mxu0 0.0
    %3913 = vmatprep.subr.mxu0 0.0
    %3914 = vmatpush2.msra.mxu0 0.0
    %3915 = vmatprep.subr.mxu0 0.0
    %3916 = vmatpush2.msra.mxu0 0.0
    %3917 = vmatprep.subr.mxu0 0.0
    %3918 = vmatpush2.msra.mxu0 0.0
    %3919 = vmatprep.subr.mxu0 0.0
    %3920 = vmatpush2.msra.mxu0 0.0
    %3921 = vmatprep.subr.mxu0 0.0
    %3922 = vmatpush2.msra.mxu0 0.0
    %3923 = vmatprep.subr.mxu0 0.0
    %3924 = vmatpush2.msra.mxu0 0.0
    %3925 = vmatprep.mubr.f32.mxu0 0.0
    %3926 = vmatmul.mubr.f32.gmra.mxu0 %v3859
    %v3927 = vpop.f32.mrf.mxu0
    %v3928 = vadd.f32 0.0, %v3927
    %v3929 = vpop.f32.mrf.mxu0
    %3930 = vdwg.mxu0
    %v3931 = vadd.f32 %v3849, %v3928
    %v3932 = vld [vmem:[%s17 + $0x3c0] sm:$0xff]
    %v3933 = vld [vmem:[%s17 + $0x3c8] sm:$0xff]
    %v3934 = vld [vmem:[%s17 + $0x3d0] sm:$0xff]
    %v3935 = vld [vmem:[%s17 + $0x3d8] sm:$0xff]
    %v3936 = vld [vmem:[%s17 + $0x3e0] sm:$0xff]
    %v3937 = vld [vmem:[%s17 + $0x3e8] sm:$0xff]
    %v3938 = vld [vmem:[%s17 + $0x3f0] sm:$0xff]
    %v3939 = vld [vmem:[%s17 + $0x3f8] sm:$0xff]
    %v3940 = vrot.slane %v2697, 7
    %v3941 = vsel %vm2709, %v3940, 0
    %3943 = vmatprep.subr.mxu0 0.0
    %3944 = vmatpush1.msra.mxu0 0.0
    %3945 = vmatprep.subr.mxu0 0.0
    %3946 = vmatpush1.msra.mxu0 0.0
    %3947 = vmatprep.subr.mxu0 0.0
    %3948 = vmatpush1.msra.mxu0 0.0
    %3949 = vmatprep.subr.mxu0 0.0
    %3950 = vmatpush1.msra.mxu0 0.0
    %3951 = vmatprep.subr.mxu0 0.0
    %3952 = vmatpush1.msra.mxu0 0.0
    %3953 = vmatprep.subr.mxu0 0.0
    %3954 = vmatpush1.msra.mxu0 0.0
    %3955 = vmatprep.subr.mxu0 0.0
    %3956 = vmatpush1.msra.mxu0 0.0
    %3957 = vmatprep.subr.mxu0 0.0
    %3958 = vmatpush1.msra.mxu0 0.0
    %3959 = vmatprep.subr.mxu0 0.0
    %3960 = vmatpush1.msra.mxu0 %v3939
    %3961 = vmatprep.subr.mxu0 0.0
    %3962 = vmatpush1.msra.mxu0 %v3938
    %3963 = vmatprep.subr.mxu0 0.0
    %3964 = vmatpush1.msra.mxu0 %v3937
    %3965 = vmatprep.subr.mxu0 0.0
    %3966 = vmatpush1.msra.mxu0 %v3936
    %3967 = vmatprep.subr.mxu0 0.0
    %3968 = vmatpush1.msra.mxu0 %v3935
    %3969 = vmatprep.subr.mxu0 0.0
    %3970 = vmatpush1.msra.mxu0 %v3934
    %3971 = vmatprep.subr.mxu0 0.0
    %3972 = vmatpush1.msra.mxu0 %v3933
    %3973 = vmatprep.subr.mxu0 0.0
    %3974 = vmatpush1.msra.mxu0 %v3932
    %3975 = vmatprep.subr.mxu0 0.0
    %3976 = vmatpush2.msra.mxu0 0.0
    %3977 = vmatprep.subr.mxu0 0.0
    %3978 = vmatpush2.msra.mxu0 0.0
    %3979 = vmatprep.subr.mxu0 0.0
    %3980 = vmatpush2.msra.mxu0 0.0
    %3981 = vmatprep.subr.mxu0 0.0
    %3982 = vmatpush2.msra.mxu0 0.0
    %3983 = vmatprep.subr.mxu0 0.0
    %3984 = vmatpush2.msra.mxu0 0.0
    %3985 = vmatprep.subr.mxu0 0.0
    %3986 = vmatpush2.msra.mxu0 0.0
    %3987 = vmatprep.subr.mxu0 0.0
    %3988 = vmatpush2.msra.mxu0 0.0
    %3989 = vmatprep.subr.mxu0 0.0
    %3990 = vmatpush2.msra.mxu0 0.0
    %3991 = vmatprep.subr.mxu0 0.0
    %3992 = vmatpush2.msra.mxu0 0.0
    %3993 = vmatprep.subr.mxu0 0.0
    %3994 = vmatpush2.msra.mxu0 0.0
    %3995 = vmatprep.subr.mxu0 0.0
    %3996 = vmatpush2.msra.mxu0 0.0
    %3997 = vmatprep.subr.mxu0 0.0
    %3998 = vmatpush2.msra.mxu0 0.0
    %3999 = vmatprep.subr.mxu0 0.0
    %4000 = vmatpush2.msra.mxu0 0.0
    %4001 = vmatprep.subr.mxu0 0.0
    %4002 = vmatpush2.msra.mxu0 0.0
    %4003 = vmatprep.subr.mxu0 0.0
    %4004 = vmatpush2.msra.mxu0 0.0
    %4005 = vmatprep.subr.mxu0 0.0
    %4006 = vmatpush2.msra.mxu0 0.0
    %4007 = vmatprep.mubr.f32.mxu0 0.0
    %4008 = vmatmul.mubr.f32.gmra.mxu0 %v3941
    %v4009 = vpop.f32.mrf.mxu0
    %v4010 = vadd.f32 0.0, %v4009
    %v4011 = vpop.f32.mrf.mxu0
    %4012 = vdwg.mxu0
    %v4013 = vadd.f32 %v3931, %v4010
    %4014 = vrot.lane.b32.xlu0 %v2692, 64
    %v4015 = vpop.permute.xlu0 %4014
    %v4016 = vsel %vm2709, %v4015, 0
    %4018 = vmatprep.subr.mxu0 0.0
    %4019 = vmatpush1.msra.mxu0 0.0
    %4020 = vmatprep.subr.mxu0 0.0
    %4021 = vmatpush1.msra.mxu0 0.0
    %4022 = vmatprep.subr.mxu0 0.0
    %4023 = vmatpush1.msra.mxu0 0.0
    %4024 = vmatprep.subr.mxu0 0.0
    %4025 = vmatpush1.msra.mxu0 0.0
    %4026 = vmatprep.subr.mxu0 0.0
    %4027 = vmatpush1.msra.mxu0 0.0
    %4028 = vmatprep.subr.mxu0 0.0
    %4029 = vmatpush1.msra.mxu0 0.0
    %4030 = vmatprep.subr.mxu0 0.0
    %4031 = vmatpush1.msra.mxu0 0.0
    %4032 = vmatprep.subr.mxu0 0.0
    %4033 = vmatpush1.msra.mxu0 0.0
    %4034 = vmatprep.subr.mxu0 0.0
    %4035 = vmatpush1.msra.mxu0 %v2708
    %4036 = vmatprep.subr.mxu0 0.0
    %4037 = vmatpush1.msra.mxu0 %v2707
    %4038 = vmatprep.subr.mxu0 0.0
    %4039 = vmatpush1.msra.mxu0 %v2706
    %4040 = vmatprep.subr.mxu0 0.0
    %4041 = vmatpush1.msra.mxu0 %v2705
    %4042 = vmatprep.subr.mxu0 0.0
    %4043 = vmatpush1.msra.mxu0 %v2704
    %4044 = vmatprep.subr.mxu0 0.0
    %4045 = vmatpush1.msra.mxu0 %v2703
    %4046 = vmatprep.subr.mxu0 0.0
    %4047 = vmatpush1.msra.mxu0 %v2702
    %4048 = vmatprep.subr.mxu0 0.0
    %4049 = vmatpush1.msra.mxu0 %v2701
    %4050 = vmatprep.subr.mxu0 0.0
    %4051 = vmatpush2.msra.mxu0 0.0
    %4052 = vmatprep.subr.mxu0 0.0
    %4053 = vmatpush2.msra.mxu0 0.0
    %4054 = vmatprep.subr.mxu0 0.0
    %4055 = vmatpush2.msra.mxu0 0.0
    %4056 = vmatprep.subr.mxu0 0.0
    %4057 = vmatpush2.msra.mxu0 0.0
    %4058 = vmatprep.subr.mxu0 0.0
    %4059 = vmatpush2.msra.mxu0 0.0
    %4060 = vmatprep.subr.mxu0 0.0
    %4061 = vmatpush2.msra.mxu0 0.0
    %4062 = vmatprep.subr.mxu0 0.0
    %4063 = vmatpush2.msra.mxu0 0.0
    %4064 = vmatprep.subr.mxu0 0.0
    %4065 = vmatpush2.msra.mxu0 0.0
    %4066 = vmatprep.subr.mxu0 0.0
    %4067 = vmatpush2.msra.mxu0 0.0
    %4068 = vmatprep.subr.mxu0 0.0
    %4069 = vmatpush2.msra.mxu0 0.0
    %4070 = vmatprep.subr.mxu0 0.0
    %4071 = vmatpush2.msra.mxu0 0.0
    %4072 = vmatprep.subr.mxu0 0.0
    %4073 = vmatpush2.msra.mxu0 0.0
    %4074 = vmatprep.subr.mxu0 0.0
    %4075 = vmatpush2.msra.mxu0 0.0
    %4076 = vmatprep.subr.mxu0 0.0
    %4077 = vmatpush2.msra.mxu0 0.0
    %4078 = vmatprep.subr.mxu0 0.0
    %4079 = vmatpush2.msra.mxu0 0.0
    %4080 = vmatprep.subr.mxu0 0.0
    %4081 = vmatpush2.msra.mxu0 0.0
    %4082 = vmatprep.mubr.f32.mxu0 0.0
    %4083 = vmatmul.mubr.f32.gmra.mxu0 %v4016
    %v4084 = vpop.f32.mrf.mxu0
    %v4085 = vadd.f32 0.0, %v4084
    %v4086 = vpop.f32.mrf.mxu0
    %4087 = vdwg.mxu0
    %v4088 = vadd.f32 %v2700, %v4085
    %4089 = vrot.lane.b32.xlu0 %v2792, 64
    %v4090 = vpop.permute.xlu0 %4089
    %v4091 = vsel %vm2709, %v4090, 0
    %4093 = vmatprep.subr.mxu0 0.0
    %4094 = vmatpush1.msra.mxu0 0.0
    %4095 = vmatprep.subr.mxu0 0.0
    %4096 = vmatpush1.msra.mxu0 0.0
    %4097 = vmatprep.subr.mxu0 0.0
    %4098 = vmatpush1.msra.mxu0 0.0
    %4099 = vmatprep.subr.mxu0 0.0
    %4100 = vmatpush1.msra.mxu0 0.0
    %4101 = vmatprep.subr.mxu0 0.0
    %4102 = vmatpush1.msra.mxu0 0.0
    %4103 = vmatprep.subr.mxu0 0.0
    %4104 = vmatpush1.msra.mxu0 0.0
    %4105 = vmatprep.subr.mxu0 0.0
    %4106 = vmatpush1.msra.mxu0 0.0
    %4107 = vmatprep.subr.mxu0 0.0
    %4108 = vmatpush1.msra.mxu0 0.0
    %4109 = vmatprep.subr.mxu0 0.0
    %4110 = vmatpush1.msra.mxu0 %v2791
    %4111 = vmatprep.subr.mxu0 0.0
    %4112 = vmatpush1.msra.mxu0 %v2790
    %4113 = vmatprep.subr.mxu0 0.0
    %4114 = vmatpush1.msra.mxu0 %v2789
    %4115 = vmatprep.subr.mxu0 0.0
    %4116 = vmatpush1.msra.mxu0 %v2788
    %4117 = vmatprep.subr.mxu0 0.0
    %4118 = vmatpush1.msra.mxu0 %v2787
    %4119 = vmatprep.subr.mxu0 0.0
    %4120 = vmatpush1.msra.mxu0 %v2786
    %4121 = vmatprep.subr.mxu0 0.0
    %4122 = vmatpush1.msra.mxu0 %v2785
    %4123 = vmatprep.subr.mxu0 0.0
    %4124 = vmatpush1.msra.mxu0 %v2784
    %4125 = vmatprep.subr.mxu0 0.0
    %4126 = vmatpush2.msra.mxu0 0.0
    %4127 = vmatprep.subr.mxu0 0.0
    %4128 = vmatpush2.msra.mxu0 0.0
    %4129 = vmatprep.subr.mxu0 0.0
    %4130 = vmatpush2.msra.mxu0 0.0
    %4131 = vmatprep.subr.mxu0 0.0
    %4132 = vmatpush2.msra.mxu0 0.0
    %4133 = vmatprep.subr.mxu0 0.0
    %4134 = vmatpush2.msra.mxu0 0.0
    %4135 = vmatprep.subr.mxu0 0.0
    %4136 = vmatpush2.msra.mxu0 0.0
    %4137 = vmatprep.subr.mxu0 0.0
    %4138 = vmatpush2.msra.mxu0 0.0
    %4139 = vmatprep.subr.mxu0 0.0
    %4140 = vmatpush2.msra.mxu0 0.0
    %4141 = vmatprep.subr.mxu0 0.0
    %4142 = vmatpush2.msra.mxu0 0.0
    %4143 = vmatprep.subr.mxu0 0.0
    %4144 = vmatpush2.msra.mxu0 0.0
    %4145 = vmatprep.subr.mxu0 0.0
    %4146 = vmatpush2.msra.mxu0 0.0
    %4147 = vmatprep.subr.mxu0 0.0
    %4148 = vmatpush2.msra.mxu0 0.0
    %4149 = vmatprep.subr.mxu0 0.0
    %4150 = vmatpush2.msra.mxu0 0.0
    %4151 = vmatprep.subr.mxu0 0.0
    %4152 = vmatpush2.msra.mxu0 0.0
    %4153 = vmatprep.subr.mxu0 0.0
    %4154 = vmatpush2.msra.mxu0 0.0
    %4155 = vmatprep.subr.mxu0 0.0
    %4156 = vmatpush2.msra.mxu0 0.0
    %4157 = vmatprep.mubr.f32.mxu0 0.0
    %4158 = vmatmul.mubr.f32.gmra.mxu0 %v4091
    %v4159 = vpop.f32.mrf.mxu0
    %v4160 = vadd.f32 0.0, %v4159
    %v4161 = vpop.f32.mrf.mxu0
    %4162 = vdwg.mxu0
    %v4163 = vadd.f32 %v4088, %v4160
    %4164 = vrot.lane.b32.xlu0 %v2874, 64
    %v4165 = vpop.permute.xlu0 %4164
    %v4166 = vsel %vm2709, %v4165, 0
    %4168 = vmatprep.subr.mxu0 0.0
    %4169 = vmatpush1.msra.mxu0 0.0
    %4170 = vmatprep.subr.mxu0 0.0
    %4171 = vmatpush1.msra.mxu0 0.0
    %4172 = vmatprep.subr.mxu0 0.0
    %4173 = vmatpush1.msra.mxu0 0.0
    %4174 = vmatprep.subr.mxu0 0.0
    %4175 = vmatpush1.msra.mxu0 0.0
    %4176 = vmatprep.subr.mxu0 0.0
    %4177 = vmatpush1.msra.mxu0 0.0
    %4178 = vmatprep.subr.mxu0 0.0
    %4179 = vmatpush1.msra.mxu0 0.0
    %4180 = vmatprep.subr.mxu0 0.0
    %4181 = vmatpush1.msra.mxu0 0.0
    %4182 = vmatprep.subr.mxu0 0.0
    %4183 = vmatpush1.msra.mxu0 0.0
    %4184 = vmatprep.subr.mxu0 0.0
    %4185 = vmatpush1.msra.mxu0 %v2873
    %4186 = vmatprep.subr.mxu0 0.0
    %4187 = vmatpush1.msra.mxu0 %v2872
    %4188 = vmatprep.subr.mxu0 0.0
    %4189 = vmatpush1.msra.mxu0 %v2871
    %4190 = vmatprep.subr.mxu0 0.0
    %4191 = vmatpush1.msra.mxu0 %v2870
    %4192 = vmatprep.subr.mxu0 0.0
    %4193 = vmatpush1.msra.mxu0 %v2869
    %4194 = vmatprep.subr.mxu0 0.0
    %4195 = vmatpush1.msra.mxu0 %v2868
    %4196 = vmatprep.subr.mxu0 0.0
    %4197 = vmatpush1.msra.mxu0 %v2867
    %4198 = vmatprep.subr.mxu0 0.0
    %4199 = vmatpush1.msra.mxu0 %v2866
    %4200 = vmatprep.subr.mxu0 0.0
    %4201 = vmatpush2.msra.mxu0 0.0
    %4202 = vmatprep.subr.mxu0 0.0
    %4203 = vmatpush2.msra.mxu0 0.0
    %4204 = vmatprep.subr.mxu0 0.0
    %4205 = vmatpush2.msra.mxu0 0.0
    %4206 = vmatprep.subr.mxu0 0.0
    %4207 = vmatpush2.msra.mxu0 0.0
    %4208 = vmatprep.subr.mxu0 0.0
    %4209 = vmatpush2.msra.mxu0 0.0
    %4210 = vmatprep.subr.mxu0 0.0
    %4211 = vmatpush2.msra.mxu0 0.0
    %4212 = vmatprep.subr.mxu0 0.0
    %4213 = vmatpush2.msra.mxu0 0.0
    %4214 = vmatprep.subr.mxu0 0.0
    %4215 = vmatpush2.msra.mxu0 0.0
    %4216 = vmatprep.subr.mxu0 0.0
    %4217 = vmatpush2.msra.mxu0 0.0
    %4218 = vmatprep.subr.mxu0 0.0
    %4219 = vmatpush2.msra.mxu0 0.0
    %4220 = vmatprep.subr.mxu0 0.0
    %4221 = vmatpush2.msra.mxu0 0.0
    %4222 = vmatprep.subr.mxu0 0.0
    %4223 = vmatpush2.msra.mxu0 0.0
    %4224 = vmatprep.subr.mxu0 0.0
    %4225 = vmatpush2.msra.mxu0 0.0
    %4226 = vmatprep.subr.mxu0 0.0
    %4227 = vmatpush2.msra.mxu0 0.0
    %4228 = vmatprep.subr.mxu0 0.0
    %4229 = vmatpush2.msra.mxu0 0.0
    %4230 = vmatprep.subr.mxu0 0.0
    %4231 = vmatpush2.msra.mxu0 0.0
    %4232 = vmatprep.mubr.f32.mxu0 0.0
    %4233 = vmatmul.mubr.f32.gmra.mxu0 %v4166
    %v4234 = vpop.f32.mrf.mxu0
    %v4235 = vadd.f32 0.0, %v4234
    %v4236 = vpop.f32.mrf.mxu0
    %4237 = vdwg.mxu0
    %v4238 = vadd.f32 %v4163, %v4235
    %4239 = vrot.lane.b32.xlu0 %v2956, 64
    %v4240 = vpop.permute.xlu0 %4239
    %v4241 = vsel %vm2709, %v4240, 0
    %4243 = vmatprep.subr.mxu0 0.0
    %4244 = vmatpush1.msra.mxu0 0.0
    %4245 = vmatprep.subr.mxu0 0.0
    %4246 = vmatpush1.msra.mxu0 0.0
    %4247 = vmatprep.subr.mxu0 0.0
    %4248 = vmatpush1.msra.mxu0 0.0
    %4249 = vmatprep.subr.mxu0 0.0
    %4250 = vmatpush1.msra.mxu0 0.0
    %4251 = vmatprep.subr.mxu0 0.0
    %4252 = vmatpush1.msra.mxu0 0.0
    %4253 = vmatprep.subr.mxu0 0.0
    %4254 = vmatpush1.msra.mxu0 0.0
    %4255 = vmatprep.subr.mxu0 0.0
    %4256 = vmatpush1.msra.mxu0 0.0
    %4257 = vmatprep.subr.mxu0 0.0
    %4258 = vmatpush1.msra.mxu0 0.0
    %4259 = vmatprep.subr.mxu0 0.0
    %4260 = vmatpush1.msra.mxu0 %v2955
    %4261 = vmatprep.subr.mxu0 0.0
    %4262 = vmatpush1.msra.mxu0 %v2954
    %4263 = vmatprep.subr.mxu0 0.0
    %4264 = vmatpush1.msra.mxu0 %v2953
    %4265 = vmatprep.subr.mxu0 0.0
    %4266 = vmatpush1.msra.mxu0 %v2952
    %4267 = vmatprep.subr.mxu0 0.0
    %4268 = vmatpush1.msra.mxu0 %v2951
    %4269 = vmatprep.subr.mxu0 0.0
    %4270 = vmatpush1.msra.mxu0 %v2950
    %4271 = vmatprep.subr.mxu0 0.0
    %4272 = vmatpush1.msra.mxu0 %v2949
    %4273 = vmatprep.subr.mxu0 0.0
    %4274 = vmatpush1.msra.mxu0 %v2948
    %4275 = vmatprep.subr.mxu0 0.0
    %4276 = vmatpush2.msra.mxu0 0.0
    %4277 = vmatprep.subr.mxu0 0.0
    %4278 = vmatpush2.msra.mxu0 0.0
    %4279 = vmatprep.subr.mxu0 0.0
    %4280 = vmatpush2.msra.mxu0 0.0
    %4281 = vmatprep.subr.mxu0 0.0
    %4282 = vmatpush2.msra.mxu0 0.0
    %4283 = vmatprep.subr.mxu0 0.0
    %4284 = vmatpush2.msra.mxu0 0.0
    %4285 = vmatprep.subr.mxu0 0.0
    %4286 = vmatpush2.msra.mxu0 0.0
    %4287 = vmatprep.subr.mxu0 0.0
    %4288 = vmatpush2.msra.mxu0 0.0
    %4289 = vmatprep.subr.mxu0 0.0
    %4290 = vmatpush2.msra.mxu0 0.0
    %4291 = vmatprep.subr.mxu0 0.0
    %4292 = vmatpush2.msra.mxu0 0.0
    %4293 = vmatprep.subr.mxu0 0.0
    %4294 = vmatpush2.msra.mxu0 0.0
    %4295 = vmatprep.subr.mxu0 0.0
    %4296 = vmatpush2.msra.mxu0 0.0
    %4297 = vmatprep.subr.mxu0 0.0
    %4298 = vmatpush2.msra.mxu0 0.0
    %4299 = vmatprep.subr.mxu0 0.0
    %4300 = vmatpush2.msra.mxu0 0.0
    %4301 = vmatprep.subr.mxu0 0.0
    %4302 = vmatpush2.msra.mxu0 0.0
    %4303 = vmatprep.subr.mxu0 0.0
    %4304 = vmatpush2.msra.mxu0 0.0
    %4305 = vmatprep.subr.mxu0 0.0
    %4306 = vmatpush2.msra.mxu0 0.0
    %4307 = vmatprep.mubr.f32.mxu0 0.0
    %4308 = vmatmul.mubr.f32.gmra.mxu0 %v4241
    %v4309 = vpop.f32.mrf.mxu0
    %v4310 = vadd.f32 0.0, %v4309
    %v4311 = vpop.f32.mrf.mxu0
    %4312 = vdwg.mxu0
    %v4313 = vadd.f32 %v4238, %v4310
    %4314 = vrot.lane.b32.xlu0 %v3038, 64
    %v4315 = vpop.permute.xlu0 %4314
    %v4316 = vsel %vm2709, %v4315, 0
    %4318 = vmatprep.subr.mxu0 0.0
    %4319 = vmatpush1.msra.mxu0 0.0
    %4320 = vmatprep.subr.mxu0 0.0
    %4321 = vmatpush1.msra.mxu0 0.0
    %4322 = vmatprep.subr.mxu0 0.0
    %4323 = vmatpush1.msra.mxu0 0.0
    %4324 = vmatprep.subr.mxu0 0.0
    %4325 = vmatpush1.msra.mxu0 0.0
    %4326 = vmatprep.subr.mxu0 0.0
    %4327 = vmatpush1.msra.mxu0 0.0
    %4328 = vmatprep.subr.mxu0 0.0
    %4329 = vmatpush1.msra.mxu0 0.0
    %4330 = vmatprep.subr.mxu0 0.0
    %4331 = vmatpush1.msra.mxu0 0.0
    %4332 = vmatprep.subr.mxu0 0.0
    %4333 = vmatpush1.msra.mxu0 0.0
    %4334 = vmatprep.subr.mxu0 0.0
    %4335 = vmatpush1.msra.mxu0 %v3037
    %4336 = vmatprep.subr.mxu0 0.0
    %4337 = vmatpush1.msra.mxu0 %v3036
    %4338 = vmatprep.subr.mxu0 0.0
    %4339 = vmatpush1.msra.mxu0 %v3035
    %4340 = vmatprep.subr.mxu0 0.0
    %4341 = vmatpush1.msra.mxu0 %v3034
    %4342 = vmatprep.subr.mxu0 0.0
    %4343 = vmatpush1.msra.mxu0 %v3033
    %4344 = vmatprep.subr.mxu0 0.0
    %4345 = vmatpush1.msra.mxu0 %v3032
    %4346 = vmatprep.subr.mxu0 0.0
    %4347 = vmatpush1.msra.mxu0 %v3031
    %4348 = vmatprep.subr.mxu0 0.0
    %4349 = vmatpush1.msra.mxu0 %v3030
    %4350 = vmatprep.subr.mxu0 0.0
    %4351 = vmatpush2.msra.mxu0 0.0
    %4352 = vmatprep.subr.mxu0 0.0
    %4353 = vmatpush2.msra.mxu0 0.0
    %4354 = vmatprep.subr.mxu0 0.0
    %4355 = vmatpush2.msra.mxu0 0.0
    %4356 = vmatprep.subr.mxu0 0.0
    %4357 = vmatpush2.msra.mxu0 0.0
    %4358 = vmatprep.subr.mxu0 0.0
    %4359 = vmatpush2.msra.mxu0 0.0
    %4360 = vmatprep.subr.mxu0 0.0
    %4361 = vmatpush2.msra.mxu0 0.0
    %4362 = vmatprep.subr.mxu0 0.0
    %4363 = vmatpush2.msra.mxu0 0.0
    %4364 = vmatprep.subr.mxu0 0.0
    %4365 = vmatpush2.msra.mxu0 0.0
    %4366 = vmatprep.subr.mxu0 0.0
    %4367 = vmatpush2.msra.mxu0 0.0
    %4368 = vmatprep.subr.mxu0 0.0
    %4369 = vmatpush2.msra.mxu0 0.0
    %4370 = vmatprep.subr.mxu0 0.0
    %4371 = vmatpush2.msra.mxu0 0.0
    %4372 = vmatprep.subr.mxu0 0.0
    %4373 = vmatpush2.msra.mxu0 0.0
    %4374 = vmatprep.subr.mxu0 0.0
    %4375 = vmatpush2.msra.mxu0 0.0
    %4376 = vmatprep.subr.mxu0 0.0
    %4377 = vmatpush2.msra.mxu0 0.0
    %4378 = vmatprep.subr.mxu0 0.0
    %4379 = vmatpush2.msra.mxu0 0.0
    %4380 = vmatprep.subr.mxu0 0.0
    %4381 = vmatpush2.msra.mxu0 0.0
    %4382 = vmatprep.mubr.f32.mxu0 0.0
    %4383 = vmatmul.mubr.f32.gmra.mxu0 %v4316
    %v4384 = vpop.f32.mrf.mxu0
    %v4385 = vadd.f32 0.0, %v4384
    %v4386 = vpop.f32.mrf.mxu0
    %4387 = vdwg.mxu0
    %v4388 = vadd.f32 %v4313, %v4385
    %4389 = vrot.lane.b32.xlu0 %v3120, 64
    %v4390 = vpop.permute.xlu0 %4389
    %v4391 = vsel %vm2709, %v4390, 0
    %4393 = vmatprep.subr.mxu0 0.0
    %4394 = vmatpush1.msra.mxu0 0.0
    %4395 = vmatprep.subr.mxu0 0.0
    %4396 = vmatpush1.msra.mxu0 0.0
    %4397 = vmatprep.subr.mxu0 0.0
    %4398 = vmatpush1.msra.mxu0 0.0
    %4399 = vmatprep.subr.mxu0 0.0
    %4400 = vmatpush1.msra.mxu0 0.0
    %4401 = vmatprep.subr.mxu0 0.0
    %4402 = vmatpush1.msra.mxu0 0.0
    %4403 = vmatprep.subr.mxu0 0.0
    %4404 = vmatpush1.msra.mxu0 0.0
    %4405 = vmatprep.subr.mxu0 0.0
    %4406 = vmatpush1.msra.mxu0 0.0
    %4407 = vmatprep.subr.mxu0 0.0
    %4408 = vmatpush1.msra.mxu0 0.0
    %4409 = vmatprep.subr.mxu0 0.0
    %4410 = vmatpush1.msra.mxu0 %v3119
    %4411 = vmatprep.subr.mxu0 0.0
    %4412 = vmatpush1.msra.mxu0 %v3118
    %4413 = vmatprep.subr.mxu0 0.0
    %4414 = vmatpush1.msra.mxu0 %v3117
    %4415 = vmatprep.subr.mxu0 0.0
    %4416 = vmatpush1.msra.mxu0 %v3116
    %4417 = vmatprep.subr.mxu0 0.0
    %4418 = vmatpush1.msra.mxu0 %v3115
    %4419 = vmatprep.subr.mxu0 0.0
    %4420 = vmatpush1.msra.mxu0 %v3114
    %4421 = vmatprep.subr.mxu0 0.0
    %4422 = vmatpush1.msra.mxu0 %v3113
    %4423 = vmatprep.subr.mxu0 0.0
    %4424 = vmatpush1.msra.mxu0 %v3112
    %4425 = vmatprep.subr.mxu0 0.0
    %4426 = vmatpush2.msra.mxu0 0.0
    %4427 = vmatprep.subr.mxu0 0.0
    %4428 = vmatpush2.msra.mxu0 0.0
    %4429 = vmatprep.subr.mxu0 0.0
    %4430 = vmatpush2.msra.mxu0 0.0
    %4431 = vmatprep.subr.mxu0 0.0
    %4432 = vmatpush2.msra.mxu0 0.0
    %4433 = vmatprep.subr.mxu0 0.0
    %4434 = vmatpush2.msra.mxu0 0.0
    %4435 = vmatprep.subr.mxu0 0.0
    %4436 = vmatpush2.msra.mxu0 0.0
    %4437 = vmatprep.subr.mxu0 0.0
    %4438 = vmatpush2.msra.mxu0 0.0
    %4439 = vmatprep.subr.mxu0 0.0
    %4440 = vmatpush2.msra.mxu0 0.0
    %4441 = vmatprep.subr.mxu0 0.0
    %4442 = vmatpush2.msra.mxu0 0.0
    %4443 = vmatprep.subr.mxu0 0.0
    %4444 = vmatpush2.msra.mxu0 0.0
    %4445 = vmatprep.subr.mxu0 0.0
    %4446 = vmatpush2.msra.mxu0 0.0
    %4447 = vmatprep.subr.mxu0 0.0
    %4448 = vmatpush2.msra.mxu0 0.0
    %4449 = vmatprep.subr.mxu0 0.0
    %4450 = vmatpush2.msra.mxu0 0.0
    %4451 = vmatprep.subr.mxu0 0.0
    %4452 = vmatpush2.msra.mxu0 0.0
    %4453 = vmatprep.subr.mxu0 0.0
    %4454 = vmatpush2.msra.mxu0 0.0
    %4455 = vmatprep.subr.mxu0 0.0
    %4456 = vmatpush2.msra.mxu0 0.0
    %4457 = vmatprep.mubr.f32.mxu0 0.0
    %4458 = vmatmul.mubr.f32.gmra.mxu0 %v4391
    %v4459 = vpop.f32.mrf.mxu0
    %v4460 = vadd.f32 0.0, %v4459
    %v4461 = vpop.f32.mrf.mxu0
    %4462 = vdwg.mxu0
    %v4463 = vadd.f32 %v4388, %v4460
    %4464 = vrot.lane.b32.xlu0 %v3202, 64
    %v4465 = vpop.permute.xlu0 %4464
    %v4466 = vsel %vm2709, %v4465, 0
    %4468 = vmatprep.subr.mxu0 0.0
    %4469 = vmatpush1.msra.mxu0 0.0
    %4470 = vmatprep.subr.mxu0 0.0
    %4471 = vmatpush1.msra.mxu0 0.0
    %4472 = vmatprep.subr.mxu0 0.0
    %4473 = vmatpush1.msra.mxu0 0.0
    %4474 = vmatprep.subr.mxu0 0.0
    %4475 = vmatpush1.msra.mxu0 0.0
    %4476 = vmatprep.subr.mxu0 0.0
    %4477 = vmatpush1.msra.mxu0 0.0
    %4478 = vmatprep.subr.mxu0 0.0
    %4479 = vmatpush1.msra.mxu0 0.0
    %4480 = vmatprep.subr.mxu0 0.0
    %4481 = vmatpush1.msra.mxu0 0.0
    %4482 = vmatprep.subr.mxu0 0.0
    %4483 = vmatpush1.msra.mxu0 0.0
    %4484 = vmatprep.subr.mxu0 0.0
    %4485 = vmatpush1.msra.mxu0 %v3201
    %4486 = vmatprep.subr.mxu0 0.0
    %4487 = vmatpush1.msra.mxu0 %v3200
    %4488 = vmatprep.subr.mxu0 0.0
    %4489 = vmatpush1.msra.mxu0 %v3199
    %4490 = vmatprep.subr.mxu0 0.0
    %4491 = vmatpush1.msra.mxu0 %v3198
    %4492 = vmatprep.subr.mxu0 0.0
    %4493 = vmatpush1.msra.mxu0 %v3197
    %4494 = vmatprep.subr.mxu0 0.0
    %4495 = vmatpush1.msra.mxu0 %v3196
    %4496 = vmatprep.subr.mxu0 0.0
    %4497 = vmatpush1.msra.mxu0 %v3195
    %4498 = vmatprep.subr.mxu0 0.0
    %4499 = vmatpush1.msra.mxu0 %v3194
    %4500 = vmatprep.subr.mxu0 0.0
    %4501 = vmatpush2.msra.mxu0 0.0
    %4502 = vmatprep.subr.mxu0 0.0
    %4503 = vmatpush2.msra.mxu0 0.0
    %4504 = vmatprep.subr.mxu0 0.0
    %4505 = vmatpush2.msra.mxu0 0.0
    %4506 = vmatprep.subr.mxu0 0.0
    %4507 = vmatpush2.msra.mxu0 0.0
    %4508 = vmatprep.subr.mxu0 0.0
    %4509 = vmatpush2.msra.mxu0 0.0
    %4510 = vmatprep.subr.mxu0 0.0
    %4511 = vmatpush2.msra.mxu0 0.0
    %4512 = vmatprep.subr.mxu0 0.0
    %4513 = vmatpush2.msra.mxu0 0.0
    %4514 = vmatprep.subr.mxu0 0.0
    %4515 = vmatpush2.msra.mxu0 0.0
    %4516 = vmatprep.subr.mxu0 0.0
    %4517 = vmatpush2.msra.mxu0 0.0
    %4518 = vmatprep.subr.mxu0 0.0
    %4519 = vmatpush2.msra.mxu0 0.0
    %4520 = vmatprep.subr.mxu0 0.0
    %4521 = vmatpush2.msra.mxu0 0.0
    %4522 = vmatprep.subr.mxu0 0.0
    %4523 = vmatpush2.msra.mxu0 0.0
    %4524 = vmatprep.subr.mxu0 0.0
    %4525 = vmatpush2.msra.mxu0 0.0
    %4526 = vmatprep.subr.mxu0 0.0
    %4527 = vmatpush2.msra.mxu0 0.0
    %4528 = vmatprep.subr.mxu0 0.0
    %4529 = vmatpush2.msra.mxu0 0.0
    %4530 = vmatprep.subr.mxu0 0.0
    %4531 = vmatpush2.msra.mxu0 0.0
    %4532 = vmatprep.mubr.f32.mxu0 0.0
    %4533 = vmatmul.mubr.f32.gmra.mxu0 %v4466
    %v4534 = vpop.f32.mrf.mxu0
    %v4535 = vadd.f32 0.0, %v4534
    %v4536 = vpop.f32.mrf.mxu0
    %4537 = vdwg.mxu0
    %v4538 = vadd.f32 %v4463, %v4535
    %4539 = vrot.lane.b32.xlu0 %v3284, 64
    %v4540 = vpop.permute.xlu0 %4539
    %v4541 = vsel %vm2709, %v4540, 0
    %4543 = vmatprep.subr.mxu0 0.0
    %4544 = vmatpush1.msra.mxu0 0.0
    %4545 = vmatprep.subr.mxu0 0.0
    %4546 = vmatpush1.msra.mxu0 0.0
    %4547 = vmatprep.subr.mxu0 0.0
    %4548 = vmatpush1.msra.mxu0 0.0
    %4549 = vmatprep.subr.mxu0 0.0
    %4550 = vmatpush1.msra.mxu0 0.0
    %4551 = vmatprep.subr.mxu0 0.0
    %4552 = vmatpush1.msra.mxu0 0.0
    %4553 = vmatprep.subr.mxu0 0.0
    %4554 = vmatpush1.msra.mxu0 0.0
    %4555 = vmatprep.subr.mxu0 0.0
    %4556 = vmatpush1.msra.mxu0 0.0
    %4557 = vmatprep.subr.mxu0 0.0
    %4558 = vmatpush1.msra.mxu0 0.0
    %4559 = vmatprep.subr.mxu0 0.0
    %4560 = vmatpush1.msra.mxu0 %v3283
    %4561 = vmatprep.subr.mxu0 0.0
    %4562 = vmatpush1.msra.mxu0 %v3282
    %4563 = vmatprep.subr.mxu0 0.0
    %4564 = vmatpush1.msra.mxu0 %v3281
    %4565 = vmatprep.subr.mxu0 0.0
    %4566 = vmatpush1.msra.mxu0 %v3280
    %4567 = vmatprep.subr.mxu0 0.0
    %4568 = vmatpush1.msra.mxu0 %v3279
    %4569 = vmatprep.subr.mxu0 0.0
    %4570 = vmatpush1.msra.mxu0 %v3278
    %4571 = vmatprep.subr.mxu0 0.0
    %4572 = vmatpush1.msra.mxu0 %v3277
    %4573 = vmatprep.subr.mxu0 0.0
    %4574 = vmatpush1.msra.mxu0 %v3276
    %4575 = vmatprep.subr.mxu0 0.0
    %4576 = vmatpush2.msra.mxu0 0.0
    %4577 = vmatprep.subr.mxu0 0.0
    %4578 = vmatpush2.msra.mxu0 0.0
    %4579 = vmatprep.subr.mxu0 0.0
    %4580 = vmatpush2.msra.mxu0 0.0
    %4581 = vmatprep.subr.mxu0 0.0
    %4582 = vmatpush2.msra.mxu0 0.0
    %4583 = vmatprep.subr.mxu0 0.0
    %4584 = vmatpush2.msra.mxu0 0.0
    %4585 = vmatprep.subr.mxu0 0.0
    %4586 = vmatpush2.msra.mxu0 0.0
    %4587 = vmatprep.subr.mxu0 0.0
    %4588 = vmatpush2.msra.mxu0 0.0
    %4589 = vmatprep.subr.mxu0 0.0
    %4590 = vmatpush2.msra.mxu0 0.0
    %4591 = vmatprep.subr.mxu0 0.0
    %4592 = vmatpush2.msra.mxu0 0.0
    %4593 = vmatprep.subr.mxu0 0.0
    %4594 = vmatpush2.msra.mxu0 0.0
    %4595 = vmatprep.subr.mxu0 0.0
    %4596 = vmatpush2.msra.mxu0 0.0
    %4597 = vmatprep.subr.mxu0 0.0
    %4598 = vmatpush2.msra.mxu0 0.0
    %4599 = vmatprep.subr.mxu0 0.0
    %4600 = vmatpush2.msra.mxu0 0.0
    %4601 = vmatprep.subr.mxu0 0.0
    %4602 = vmatpush2.msra.mxu0 0.0
    %4603 = vmatprep.subr.mxu0 0.0
    %4604 = vmatpush2.msra.mxu0 0.0
    %4605 = vmatprep.subr.mxu0 0.0
    %4606 = vmatpush2.msra.mxu0 0.0
    %4607 = vmatprep.mubr.f32.mxu0 0.0
    %4608 = vmatmul.mubr.f32.gmra.mxu0 %v4541
    %v4609 = vpop.f32.mrf.mxu0
    %v4610 = vadd.f32 0.0, %v4609
    %v4611 = vpop.f32.mrf.mxu0
    %4612 = vdwg.mxu0
    %v4613 = vadd.f32 %v4538, %v4610
    %4614 = vrot.lane.b32.xlu0 %v2697, 64
    %v4615 = vpop.permute.xlu0 %4614
    %v4616 = vsel %vm2709, %v4615, 0
    %4618 = vmatprep.subr.mxu0 0.0
    %4619 = vmatpush1.msra.mxu0 0.0
    %4620 = vmatprep.subr.mxu0 0.0
    %4621 = vmatpush1.msra.mxu0 0.0
    %4622 = vmatprep.subr.mxu0 0.0
    %4623 = vmatpush1.msra.mxu0 0.0
    %4624 = vmatprep.subr.mxu0 0.0
    %4625 = vmatpush1.msra.mxu0 0.0
    %4626 = vmatprep.subr.mxu0 0.0
    %4627 = vmatpush1.msra.mxu0 0.0
    %4628 = vmatprep.subr.mxu0 0.0
    %4629 = vmatpush1.msra.mxu0 0.0
    %4630 = vmatprep.subr.mxu0 0.0
    %4631 = vmatpush1.msra.mxu0 0.0
    %4632 = vmatprep.subr.mxu0 0.0
    %4633 = vmatpush1.msra.mxu0 0.0
    %4634 = vmatprep.subr.mxu0 0.0
    %4635 = vmatpush1.msra.mxu0 %v3365
    %4636 = vmatprep.subr.mxu0 0.0
    %4637 = vmatpush1.msra.mxu0 %v3364
    %4638 = vmatprep.subr.mxu0 0.0
    %4639 = vmatpush1.msra.mxu0 %v3363
    %4640 = vmatprep.subr.mxu0 0.0
    %4641 = vmatpush1.msra.mxu0 %v3362
    %4642 = vmatprep.subr.mxu0 0.0
    %4643 = vmatpush1.msra.mxu0 %v3361
    %4644 = vmatprep.subr.mxu0 0.0
    %4645 = vmatpush1.msra.mxu0 %v3360
    %4646 = vmatprep.subr.mxu0 0.0
    %4647 = vmatpush1.msra.mxu0 %v3359
    %4648 = vmatprep.subr.mxu0 0.0
    %4649 = vmatpush1.msra.mxu0 %v3358
    %4650 = vmatprep.subr.mxu0 0.0
    %4651 = vmatpush2.msra.mxu0 0.0
    %4652 = vmatprep.subr.mxu0 0.0
    %4653 = vmatpush2.msra.mxu0 0.0
    %4654 = vmatprep.subr.mxu0 0.0
    %4655 = vmatpush2.msra.mxu0 0.0
    %4656 = vmatprep.subr.mxu0 0.0
    %4657 = vmatpush2.msra.mxu0 0.0
    %4658 = vmatprep.subr.mxu0 0.0
    %4659 = vmatpush2.msra.mxu0 0.0
    %4660 = vmatprep.subr.mxu0 0.0
    %4661 = vmatpush2.msra.mxu0 0.0
    %4662 = vmatprep.subr.mxu0 0.0
    %4663 = vmatpush2.msra.mxu0 0.0
    %4664 = vmatprep.subr.mxu0 0.0
    %4665 = vmatpush2.msra.mxu0 0.0
    %4666 = vmatprep.subr.mxu0 0.0
    %4667 = vmatpush2.msra.mxu0 0.0
    %4668 = vmatprep.subr.mxu0 0.0
    %4669 = vmatpush2.msra.mxu0 0.0
    %4670 = vmatprep.subr.mxu0 0.0
    %4671 = vmatpush2.msra.mxu0 0.0
    %4672 = vmatprep.subr.mxu0 0.0
    %4673 = vmatpush2.msra.mxu0 0.0
    %4674 = vmatprep.subr.mxu0 0.0
    %4675 = vmatpush2.msra.mxu0 0.0
    %4676 = vmatprep.subr.mxu0 0.0
    %4677 = vmatpush2.msra.mxu0 0.0
    %4678 = vmatprep.subr.mxu0 0.0
    %4679 = vmatpush2.msra.mxu0 0.0
    %4680 = vmatprep.subr.mxu0 0.0
    %4681 = vmatpush2.msra.mxu0 0.0
    %4682 = vmatprep.mubr.f32.mxu0 0.0
    %4683 = vmatmul.mubr.f32.gmra.mxu0 %v4616
    %v4684 = vpop.f32.mrf.mxu0
    %v4685 = vadd.f32 0.0, %v4684
    %v4686 = vpop.f32.mrf.mxu0
    %4687 = vdwg.mxu0
    %v4688 = vadd.f32 %v4613, %v4685
    %4689 = vrot.lane.b32.xlu0 %v3448, 64
    %v4690 = vpop.permute.xlu0 %4689
    %v4691 = vsel %vm2709, %v4690, 0
    %4693 = vmatprep.subr.mxu0 0.0
    %4694 = vmatpush1.msra.mxu0 0.0
    %4695 = vmatprep.subr.mxu0 0.0
    %4696 = vmatpush1.msra.mxu0 0.0
    %4697 = vmatprep.subr.mxu0 0.0
    %4698 = vmatpush1.msra.mxu0 0.0
    %4699 = vmatprep.subr.mxu0 0.0
    %4700 = vmatpush1.msra.mxu0 0.0
    %4701 = vmatprep.subr.mxu0 0.0
    %4702 = vmatpush1.msra.mxu0 0.0
    %4703 = vmatprep.subr.mxu0 0.0
    %4704 = vmatpush1.msra.mxu0 0.0
    %4705 = vmatprep.subr.mxu0 0.0
    %4706 = vmatpush1.msra.mxu0 0.0
    %4707 = vmatprep.subr.mxu0 0.0
    %4708 = vmatpush1.msra.mxu0 0.0
    %4709 = vmatprep.subr.mxu0 0.0
    %4710 = vmatpush1.msra.mxu0 %v3447
    %4711 = vmatprep.subr.mxu0 0.0
    %4712 = vmatpush1.msra.mxu0 %v3446
    %4713 = vmatprep.subr.mxu0 0.0
    %4714 = vmatpush1.msra.mxu0 %v3445
    %4715 = vmatprep.subr.mxu0 0.0
    %4716 = vmatpush1.msra.mxu0 %v3444
    %4717 = vmatprep.subr.mxu0 0.0
    %4718 = vmatpush1.msra.mxu0 %v3443
    %4719 = vmatprep.subr.mxu0 0.0
    %4720 = vmatpush1.msra.mxu0 %v3442
    %4721 = vmatprep.subr.mxu0 0.0
    %4722 = vmatpush1.msra.mxu0 %v3441
    %4723 = vmatprep.subr.mxu0 0.0
    %4724 = vmatpush1.msra.mxu0 %v3440
    %4725 = vmatprep.subr.mxu0 0.0
    %4726 = vmatpush2.msra.mxu0 0.0
    %4727 = vmatprep.subr.mxu0 0.0
    %4728 = vmatpush2.msra.mxu0 0.0
    %4729 = vmatprep.subr.mxu0 0.0
    %4730 = vmatpush2.msra.mxu0 0.0
    %4731 = vmatprep.subr.mxu0 0.0
    %4732 = vmatpush2.msra.mxu0 0.0
    %4733 = vmatprep.subr.mxu0 0.0
    %4734 = vmatpush2.msra.mxu0 0.0
    %4735 = vmatprep.subr.mxu0 0.0
    %4736 = vmatpush2.msra.mxu0 0.0
    %4737 = vmatprep.subr.mxu0 0.0
    %4738 = vmatpush2.msra.mxu0 0.0
    %4739 = vmatprep.subr.mxu0 0.0
    %4740 = vmatpush2.msra.mxu0 0.0
    %4741 = vmatprep.subr.mxu0 0.0
    %4742 = vmatpush2.msra.mxu0 0.0
    %4743 = vmatprep.subr.mxu0 0.0
    %4744 = vmatpush2.msra.mxu0 0.0
    %4745 = vmatprep.subr.mxu0 0.0
    %4746 = vmatpush2.msra.mxu0 0.0
    %4747 = vmatprep.subr.mxu0 0.0
    %4748 = vmatpush2.msra.mxu0 0.0
    %4749 = vmatprep.subr.mxu0 0.0
    %4750 = vmatpush2.msra.mxu0 0.0
    %4751 = vmatprep.subr.mxu0 0.0
    %4752 = vmatpush2.msra.mxu0 0.0
    %4753 = vmatprep.subr.mxu0 0.0
    %4754 = vmatpush2.msra.mxu0 0.0
    %4755 = vmatprep.subr.mxu0 0.0
    %4756 = vmatpush2.msra.mxu0 0.0
    %4757 = vmatprep.mubr.f32.mxu0 0.0
    %4758 = vmatmul.mubr.f32.gmra.mxu0 %v4691
    %v4759 = vpop.f32.mrf.mxu0
    %v4760 = vadd.f32 0.0, %v4759
    %v4761 = vpop.f32.mrf.mxu0
    %4762 = vdwg.mxu0
    %v4763 = vadd.f32 %v4688, %v4760
    %4764 = vrot.lane.b32.xlu0 %v3530, 64
    %v4765 = vpop.permute.xlu0 %4764
    %v4766 = vsel %vm2709, %v4765, 0
    %4768 = vmatprep.subr.mxu0 0.0
    %4769 = vmatpush1.msra.mxu0 0.0
    %4770 = vmatprep.subr.mxu0 0.0
    %4771 = vmatpush1.msra.mxu0 0.0
    %4772 = vmatprep.subr.mxu0 0.0
    %4773 = vmatpush1.msra.mxu0 0.0
    %4774 = vmatprep.subr.mxu0 0.0
    %4775 = vmatpush1.msra.mxu0 0.0
    %4776 = vmatprep.subr.mxu0 0.0
    %4777 = vmatpush1.msra.mxu0 0.0
    %4778 = vmatprep.subr.mxu0 0.0
    %4779 = vmatpush1.msra.mxu0 0.0
    %4780 = vmatprep.subr.mxu0 0.0
    %4781 = vmatpush1.msra.mxu0 0.0
    %4782 = vmatprep.subr.mxu0 0.0
    %4783 = vmatpush1.msra.mxu0 0.0
    %4784 = vmatprep.subr.mxu0 0.0
    %4785 = vmatpush1.msra.mxu0 %v3529
    %4786 = vmatprep.subr.mxu0 0.0
    %4787 = vmatpush1.msra.mxu0 %v3528
    %4788 = vmatprep.subr.mxu0 0.0
    %4789 = vmatpush1.msra.mxu0 %v3527
    %4790 = vmatprep.subr.mxu0 0.0
    %4791 = vmatpush1.msra.mxu0 %v3526
    %4792 = vmatprep.subr.mxu0 0.0
    %4793 = vmatpush1.msra.mxu0 %v3525
    %4794 = vmatprep.subr.mxu0 0.0
    %4795 = vmatpush1.msra.mxu0 %v3524
    %4796 = vmatprep.subr.mxu0 0.0
    %4797 = vmatpush1.msra.mxu0 %v3523
    %4798 = vmatprep.subr.mxu0 0.0
    %4799 = vmatpush1.msra.mxu0 %v3522
    %4800 = vmatprep.subr.mxu0 0.0
    %4801 = vmatpush2.msra.mxu0 0.0
    %4802 = vmatprep.subr.mxu0 0.0
    %4803 = vmatpush2.msra.mxu0 0.0
    %4804 = vmatprep.subr.mxu0 0.0
    %4805 = vmatpush2.msra.mxu0 0.0
    %4806 = vmatprep.subr.mxu0 0.0
    %4807 = vmatpush2.msra.mxu0 0.0
    %4808 = vmatprep.subr.mxu0 0.0
    %4809 = vmatpush2.msra.mxu0 0.0
    %4810 = vmatprep.subr.mxu0 0.0
    %4811 = vmatpush2.msra.mxu0 0.0
    %4812 = vmatprep.subr.mxu0 0.0
    %4813 = vmatpush2.msra.mxu0 0.0
    %4814 = vmatprep.subr.mxu0 0.0
    %4815 = vmatpush2.msra.mxu0 0.0
    %4816 = vmatprep.subr.mxu0 0.0
    %4817 = vmatpush2.msra.mxu0 0.0
    %4818 = vmatprep.subr.mxu0 0.0
    %4819 = vmatpush2.msra.mxu0 0.0
    %4820 = vmatprep.subr.mxu0 0.0
    %4821 = vmatpush2.msra.mxu0 0.0
    %4822 = vmatprep.subr.mxu0 0.0
    %4823 = vmatpush2.msra.mxu0 0.0
    %4824 = vmatprep.subr.mxu0 0.0
    %4825 = vmatpush2.msra.mxu0 0.0
    %4826 = vmatprep.subr.mxu0 0.0
    %4827 = vmatpush2.msra.mxu0 0.0
    %4828 = vmatprep.subr.mxu0 0.0
    %4829 = vmatpush2.msra.mxu0 0.0
    %4830 = vmatprep.subr.mxu0 0.0
    %4831 = vmatpush2.msra.mxu0 0.0
    %4832 = vmatprep.mubr.f32.mxu0 0.0
    %4833 = vmatmul.mubr.f32.gmra.mxu0 %v4766
    %v4834 = vpop.f32.mrf.mxu0
    %v4835 = vadd.f32 0.0, %v4834
    %v4836 = vpop.f32.mrf.mxu0
    %4837 = vdwg.mxu0
    %v4838 = vadd.f32 %v4763, %v4835
    %4839 = vrot.lane.b32.xlu0 %v3612, 64
    %v4840 = vpop.permute.xlu0 %4839
    %v4841 = vsel %vm2709, %v4840, 0
    %4843 = vmatprep.subr.mxu0 0.0
    %4844 = vmatpush1.msra.mxu0 0.0
    %4845 = vmatprep.subr.mxu0 0.0
    %4846 = vmatpush1.msra.mxu0 0.0
    %4847 = vmatprep.subr.mxu0 0.0
    %4848 = vmatpush1.msra.mxu0 0.0
    %4849 = vmatprep.subr.mxu0 0.0
    %4850 = vmatpush1.msra.mxu0 0.0
    %4851 = vmatprep.subr.mxu0 0.0
    %4852 = vmatpush1.msra.mxu0 0.0
    %4853 = vmatprep.subr.mxu0 0.0
    %4854 = vmatpush1.msra.mxu0 0.0
    %4855 = vmatprep.subr.mxu0 0.0
    %4856 = vmatpush1.msra.mxu0 0.0
    %4857 = vmatprep.subr.mxu0 0.0
    %4858 = vmatpush1.msra.mxu0 0.0
    %4859 = vmatprep.subr.mxu0 0.0
    %4860 = vmatpush1.msra.mxu0 %v3611
    %4861 = vmatprep.subr.mxu0 0.0
    %4862 = vmatpush1.msra.mxu0 %v3610
    %4863 = vmatprep.subr.mxu0 0.0
    %4864 = vmatpush1.msra.mxu0 %v3609
    %4865 = vmatprep.subr.mxu0 0.0
    %4866 = vmatpush1.msra.mxu0 %v3608
    %4867 = vmatprep.subr.mxu0 0.0
    %4868 = vmatpush1.msra.mxu0 %v3607
    %4869 = vmatprep.subr.mxu0 0.0
    %4870 = vmatpush1.msra.mxu0 %v3606
    %4871 = vmatprep.subr.mxu0 0.0
    %4872 = vmatpush1.msra.mxu0 %v3605
    %4873 = vmatprep.subr.mxu0 0.0
    %4874 = vmatpush1.msra.mxu0 %v3604
    %4875 = vmatprep.subr.mxu0 0.0
    %4876 = vmatpush2.msra.mxu0 0.0
    %4877 = vmatprep.subr.mxu0 0.0
    %4878 = vmatpush2.msra.mxu0 0.0
    %4879 = vmatprep.subr.mxu0 0.0
    %4880 = vmatpush2.msra.mxu0 0.0
    %4881 = vmatprep.subr.mxu0 0.0
    %4882 = vmatpush2.msra.mxu0 0.0
    %4883 = vmatprep.subr.mxu0 0.0
    %4884 = vmatpush2.msra.mxu0 0.0
    %4885 = vmatprep.subr.mxu0 0.0
    %4886 = vmatpush2.msra.mxu0 0.0
    %4887 = vmatprep.subr.mxu0 0.0
    %4888 = vmatpush2.msra.mxu0 0.0
    %4889 = vmatprep.subr.mxu0 0.0
    %4890 = vmatpush2.msra.mxu0 0.0
    %4891 = vmatprep.subr.mxu0 0.0
    %4892 = vmatpush2.msra.mxu0 0.0
    %4893 = vmatprep.subr.mxu0 0.0
    %4894 = vmatpush2.msra.mxu0 0.0
    %4895 = vmatprep.subr.mxu0 0.0
    %4896 = vmatpush2.msra.mxu0 0.0
    %4897 = vmatprep.subr.mxu0 0.0
    %4898 = vmatpush2.msra.mxu0 0.0
    %4899 = vmatprep.subr.mxu0 0.0
    %4900 = vmatpush2.msra.mxu0 0.0
    %4901 = vmatprep.subr.mxu0 0.0
    %4902 = vmatpush2.msra.mxu0 0.0
    %4903 = vmatprep.subr.mxu0 0.0
    %4904 = vmatpush2.msra.mxu0 0.0
    %4905 = vmatprep.subr.mxu0 0.0
    %4906 = vmatpush2.msra.mxu0 0.0
    %4907 = vmatprep.mubr.f32.mxu0 0.0
    %4908 = vmatmul.mubr.f32.gmra.mxu0 %v4841
    %v4909 = vpop.f32.mrf.mxu0
    %v4910 = vadd.f32 0.0, %v4909
    %v4911 = vpop.f32.mrf.mxu0
    %4912 = vdwg.mxu0
    %v4913 = vadd.f32 %v4838, %v4910
    %4914 = vrot.lane.b32.xlu0 %v3694, 64
    %v4915 = vpop.permute.xlu0 %4914
    %v4916 = vsel %vm2709, %v4915, 0
    %4918 = vmatprep.subr.mxu0 0.0
    %4919 = vmatpush1.msra.mxu0 0.0
    %4920 = vmatprep.subr.mxu0 0.0
    %4921 = vmatpush1.msra.mxu0 0.0
    %4922 = vmatprep.subr.mxu0 0.0
    %4923 = vmatpush1.msra.mxu0 0.0
    %4924 = vmatprep.subr.mxu0 0.0
    %4925 = vmatpush1.msra.mxu0 0.0
    %4926 = vmatprep.subr.mxu0 0.0
    %4927 = vmatpush1.msra.mxu0 0.0
    %4928 = vmatprep.subr.mxu0 0.0
    %4929 = vmatpush1.msra.mxu0 0.0
    %4930 = vmatprep.subr.mxu0 0.0
    %4931 = vmatpush1.msra.mxu0 0.0
    %4932 = vmatprep.subr.mxu0 0.0
    %4933 = vmatpush1.msra.mxu0 0.0
    %4934 = vmatprep.subr.mxu0 0.0
    %4935 = vmatpush1.msra.mxu0 %v3693
    %4936 = vmatprep.subr.mxu0 0.0
    %4937 = vmatpush1.msra.mxu0 %v3692
    %4938 = vmatprep.subr.mxu0 0.0
    %4939 = vmatpush1.msra.mxu0 %v3691
    %4940 = vmatprep.subr.mxu0 0.0
    %4941 = vmatpush1.msra.mxu0 %v3690
    %4942 = vmatprep.subr.mxu0 0.0
    %4943 = vmatpush1.msra.mxu0 %v3689
    %4944 = vmatprep.subr.mxu0 0.0
    %4945 = vmatpush1.msra.mxu0 %v3688
    %4946 = vmatprep.subr.mxu0 0.0
    %4947 = vmatpush1.msra.mxu0 %v3687
    %4948 = vmatprep.subr.mxu0 0.0
    %4949 = vmatpush1.msra.mxu0 %v3686
    %4950 = vmatprep.subr.mxu0 0.0
    %4951 = vmatpush2.msra.mxu0 0.0
    %4952 = vmatprep.subr.mxu0 0.0
    %4953 = vmatpush2.msra.mxu0 0.0
    %4954 = vmatprep.subr.mxu0 0.0
    %4955 = vmatpush2.msra.mxu0 0.0
    %4956 = vmatprep.subr.mxu0 0.0
    %4957 = vmatpush2.msra.mxu0 0.0
    %4958 = vmatprep.subr.mxu0 0.0
    %4959 = vmatpush2.msra.mxu0 0.0
    %4960 = vmatprep.subr.mxu0 0.0
    %4961 = vmatpush2.msra.mxu0 0.0
    %4962 = vmatprep.subr.mxu0 0.0
    %4963 = vmatpush2.msra.mxu0 0.0
    %4964 = vmatprep.subr.mxu0 0.0
    %4965 = vmatpush2.msra.mxu0 0.0
    %4966 = vmatprep.subr.mxu0 0.0
    %4967 = vmatpush2.msra.mxu0 0.0
    %4968 = vmatprep.subr.mxu0 0.0
    %4969 = vmatpush2.msra.mxu0 0.0
    %4970 = vmatprep.subr.mxu0 0.0
    %4971 = vmatpush2.msra.mxu0 0.0
    %4972 = vmatprep.subr.mxu0 0.0
    %4973 = vmatpush2.msra.mxu0 0.0
    %4974 = vmatprep.subr.mxu0 0.0
    %4975 = vmatpush2.msra.mxu0 0.0
    %4976 = vmatprep.subr.mxu0 0.0
    %4977 = vmatpush2.msra.mxu0 0.0
    %4978 = vmatprep.subr.mxu0 0.0
    %4979 = vmatpush2.msra.mxu0 0.0
    %4980 = vmatprep.subr.mxu0 0.0
    %4981 = vmatpush2.msra.mxu0 0.0
    %4982 = vmatprep.mubr.f32.mxu0 0.0
    %4983 = vmatmul.mubr.f32.gmra.mxu0 %v4916
    %v4984 = vpop.f32.mrf.mxu0
    %v4985 = vadd.f32 0.0, %v4984
    %v4986 = vpop.f32.mrf.mxu0
    %4987 = vdwg.mxu0
    %v4988 = vadd.f32 %v4913, %v4985
    %4989 = vrot.lane.b32.xlu0 %v3776, 64
    %v4990 = vpop.permute.xlu0 %4989
    %v4991 = vsel %vm2709, %v4990, 0
    %4993 = vmatprep.subr.mxu0 0.0
    %4994 = vmatpush1.msra.mxu0 0.0
    %4995 = vmatprep.subr.mxu0 0.0
    %4996 = vmatpush1.msra.mxu0 0.0
    %4997 = vmatprep.subr.mxu0 0.0
    %4998 = vmatpush1.msra.mxu0 0.0
    %4999 = vmatprep.subr.mxu0 0.0
    %5000 = vmatpush1.msra.mxu0 0.0
    %5001 = vmatprep.subr.mxu0 0.0
    %5002 = vmatpush1.msra.mxu0 0.0
    %5003 = vmatprep.subr.mxu0 0.0
    %5004 = vmatpush1.msra.mxu0 0.0
    %5005 = vmatprep.subr.mxu0 0.0
    %5006 = vmatpush1.msra.mxu0 0.0
    %5007 = vmatprep.subr.mxu0 0.0
    %5008 = vmatpush1.msra.mxu0 0.0
    %5009 = vmatprep.subr.mxu0 0.0
    %5010 = vmatpush1.msra.mxu0 %v3775
    %5011 = vmatprep.subr.mxu0 0.0
    %5012 = vmatpush1.msra.mxu0 %v3774
    %5013 = vmatprep.subr.mxu0 0.0
    %5014 = vmatpush1.msra.mxu0 %v3773
    %5015 = vmatprep.subr.mxu0 0.0
    %5016 = vmatpush1.msra.mxu0 %v3772
    %5017 = vmatprep.subr.mxu0 0.0
    %5018 = vmatpush1.msra.mxu0 %v3771
    %5019 = vmatprep.subr.mxu0 0.0
    %5020 = vmatpush1.msra.mxu0 %v3770
    %5021 = vmatprep.subr.mxu0 0.0
    %5022 = vmatpush1.msra.mxu0 %v3769
    %5023 = vmatprep.subr.mxu0 0.0
    %5024 = vmatpush1.msra.mxu0 %v3768
    %5025 = vmatprep.subr.mxu0 0.0
    %5026 = vmatpush2.msra.mxu0 0.0
    %5027 = vmatprep.subr.mxu0 0.0
    %5028 = vmatpush2.msra.mxu0 0.0
    %5029 = vmatprep.subr.mxu0 0.0
    %5030 = vmatpush2.msra.mxu0 0.0
    %5031 = vmatprep.subr.mxu0 0.0
    %5032 = vmatpush2.msra.mxu0 0.0
    %5033 = vmatprep.subr.mxu0 0.0
    %5034 = vmatpush2.msra.mxu0 0.0
    %5035 = vmatprep.subr.mxu0 0.0
    %5036 = vmatpush2.msra.mxu0 0.0
    %5037 = vmatprep.subr.mxu0 0.0
    %5038 = vmatpush2.msra.mxu0 0.0
    %5039 = vmatprep.subr.mxu0 0.0
    %5040 = vmatpush2.msra.mxu0 0.0
    %5041 = vmatprep.subr.mxu0 0.0
    %5042 = vmatpush2.msra.mxu0 0.0
    %5043 = vmatprep.subr.mxu0 0.0
    %5044 = vmatpush2.msra.mxu0 0.0
    %5045 = vmatprep.subr.mxu0 0.0
    %5046 = vmatpush2.msra.mxu0 0.0
    %5047 = vmatprep.subr.mxu0 0.0
    %5048 = vmatpush2.msra.mxu0 0.0
    %5049 = vmatprep.subr.mxu0 0.0
    %5050 = vmatpush2.msra.mxu0 0.0
    %5051 = vmatprep.subr.mxu0 0.0
    %5052 = vmatpush2.msra.mxu0 0.0
    %5053 = vmatprep.subr.mxu0 0.0
    %5054 = vmatpush2.msra.mxu0 0.0
    %5055 = vmatprep.subr.mxu0 0.0
    %5056 = vmatpush2.msra.mxu0 0.0
    %5057 = vmatprep.mubr.f32.mxu0 0.0
    %5058 = vmatmul.mubr.f32.gmra.mxu0 %v4991
    %v5059 = vpop.f32.mrf.mxu0
    %v5060 = vadd.f32 0.0, %v5059
    %v5061 = vpop.f32.mrf.mxu0
    %5062 = vdwg.mxu0
    %v5063 = vadd.f32 %v4988, %v5060
    %5064 = vrot.lane.b32.xlu0 %v3858, 64
    %v5065 = vpop.permute.xlu0 %5064
    %v5066 = vsel %vm2709, %v5065, 0
    %5068 = vmatprep.subr.mxu0 0.0
    %5069 = vmatpush1.msra.mxu0 0.0
    %5070 = vmatprep.subr.mxu0 0.0
    %5071 = vmatpush1.msra.mxu0 0.0
    %5072 = vmatprep.subr.mxu0 0.0
    %5073 = vmatpush1.msra.mxu0 0.0
    %5074 = vmatprep.subr.mxu0 0.0
    %5075 = vmatpush1.msra.mxu0 0.0
    %5076 = vmatprep.subr.mxu0 0.0
    %5077 = vmatpush1.msra.mxu0 0.0
    %5078 = vmatprep.subr.mxu0 0.0
    %5079 = vmatpush1.msra.mxu0 0.0
    %5080 = vmatprep.subr.mxu0 0.0
    %5081 = vmatpush1.msra.mxu0 0.0
    %5082 = vmatprep.subr.mxu0 0.0
    %5083 = vmatpush1.msra.mxu0 0.0
    %5084 = vmatprep.subr.mxu0 0.0
    %5085 = vmatpush1.msra.mxu0 %v3857
    %5086 = vmatprep.subr.mxu0 0.0
    %5087 = vmatpush1.msra.mxu0 %v3856
    %5088 = vmatprep.subr.mxu0 0.0
    %5089 = vmatpush1.msra.mxu0 %v3855
    %5090 = vmatprep.subr.mxu0 0.0
    %5091 = vmatpush1.msra.mxu0 %v3854
    %5092 = vmatprep.subr.mxu0 0.0
    %5093 = vmatpush1.msra.mxu0 %v3853
    %5094 = vmatprep.subr.mxu0 0.0
    %5095 = vmatpush1.msra.mxu0 %v3852
    %5096 = vmatprep.subr.mxu0 0.0
    %5097 = vmatpush1.msra.mxu0 %v3851
    %5098 = vmatprep.subr.mxu0 0.0
    %5099 = vmatpush1.msra.mxu0 %v3850
    %5100 = vmatprep.subr.mxu0 0.0
    %5101 = vmatpush2.msra.mxu0 0.0
    %5102 = vmatprep.subr.mxu0 0.0
    %5103 = vmatpush2.msra.mxu0 0.0
    %5104 = vmatprep.subr.mxu0 0.0
    %5105 = vmatpush2.msra.mxu0 0.0
    %5106 = vmatprep.subr.mxu0 0.0
    %5107 = vmatpush2.msra.mxu0 0.0
    %5108 = vmatprep.subr.mxu0 0.0
    %5109 = vmatpush2.msra.mxu0 0.0
    %5110 = vmatprep.subr.mxu0 0.0
    %5111 = vmatpush2.msra.mxu0 0.0
    %5112 = vmatprep.subr.mxu0 0.0
    %5113 = vmatpush2.msra.mxu0 0.0
    %5114 = vmatprep.subr.mxu0 0.0
    %5115 = vmatpush2.msra.mxu0 0.0
    %5116 = vmatprep.subr.mxu0 0.0
    %5117 = vmatpush2.msra.mxu0 0.0
    %5118 = vmatprep.subr.mxu0 0.0
    %5119 = vmatpush2.msra.mxu0 0.0
    %5120 = vmatprep.subr.mxu0 0.0
    %5121 = vmatpush2.msra.mxu0 0.0
    %5122 = vmatprep.subr.mxu0 0.0
    %5123 = vmatpush2.msra.mxu0 0.0
    %5124 = vmatprep.subr.mxu0 0.0
    %5125 = vmatpush2.msra.mxu0 0.0
    %5126 = vmatprep.subr.mxu0 0.0
    %5127 = vmatpush2.msra.mxu0 0.0
    %5128 = vmatprep.subr.mxu0 0.0
    %5129 = vmatpush2.msra.mxu0 0.0
    %5130 = vmatprep.subr.mxu0 0.0
    %5131 = vmatpush2.msra.mxu0 0.0
    %5132 = vmatprep.mubr.f32.mxu0 0.0
    %5133 = vmatmul.mubr.f32.gmra.mxu0 %v5066
    %v5134 = vpop.f32.mrf.mxu0
    %v5135 = vadd.f32 0.0, %v5134
    %v5136 = vpop.f32.mrf.mxu0
    %5137 = vdwg.mxu0
    %v5138 = vadd.f32 %v5063, %v5135
    %5139 = vrot.lane.b32.xlu0 %v3940, 64
    %v5140 = vpop.permute.xlu0 %5139
    %v5141 = vsel %vm2709, %v5140, 0
    %5143 = vmatprep.subr.mxu0 0.0
    %5144 = vmatpush1.msra.mxu0 0.0
    %5145 = vmatprep.subr.mxu0 0.0
    %5146 = vmatpush1.msra.mxu0 0.0
    %5147 = vmatprep.subr.mxu0 0.0
    %5148 = vmatpush1.msra.mxu0 0.0
    %5149 = vmatprep.subr.mxu0 0.0
    %5150 = vmatpush1.msra.mxu0 0.0
    %5151 = vmatprep.subr.mxu0 0.0
    %5152 = vmatpush1.msra.mxu0 0.0
    %5153 = vmatprep.subr.mxu0 0.0
    %5154 = vmatpush1.msra.mxu0 0.0
    %5155 = vmatprep.subr.mxu0 0.0
    %5156 = vmatpush1.msra.mxu0 0.0
    %5157 = vmatprep.subr.mxu0 0.0
    %5158 = vmatpush1.msra.mxu0 0.0
    %5159 = vmatprep.subr.mxu0 0.0
    %5160 = vmatpush1.msra.mxu0 %v3939
    %5161 = vmatprep.subr.mxu0 0.0
    %5162 = vmatpush1.msra.mxu0 %v3938
    %5163 = vmatprep.subr.mxu0 0.0
    %5164 = vmatpush1.msra.mxu0 %v3937
    %5165 = vmatprep.subr.mxu0 0.0
    %5166 = vmatpush1.msra.mxu0 %v3936
    %5167 = vmatprep.subr.mxu0 0.0
    %5168 = vmatpush1.msra.mxu0 %v3935
    %5169 = vmatprep.subr.mxu0 0.0
    %5170 = vmatpush1.msra.mxu0 %v3934
    %5171 = vmatprep.subr.mxu0 0.0
    %5172 = vmatpush1.msra.mxu0 %v3933
    %5173 = vmatprep.subr.mxu0 0.0
    %5174 = vmatpush1.msra.mxu0 %v3932
    %5175 = vmatprep.subr.mxu0 0.0
    %5176 = vmatpush2.msra.mxu0 0.0
    %5177 = vmatprep.subr.mxu0 0.0
    %5178 = vmatpush2.msra.mxu0 0.0
    %5179 = vmatprep.subr.mxu0 0.0
    %5180 = vmatpush2.msra.mxu0 0.0
    %5181 = vmatprep.subr.mxu0 0.0
    %5182 = vmatpush2.msra.mxu0 0.0
    %5183 = vmatprep.subr.mxu0 0.0
    %5184 = vmatpush2.msra.mxu0 0.0
    %5185 = vmatprep.subr.mxu0 0.0
    %5186 = vmatpush2.msra.mxu0 0.0
    %5187 = vmatprep.subr.mxu0 0.0
    %5188 = vmatpush2.msra.mxu0 0.0
    %5189 = vmatprep.subr.mxu0 0.0
    %5190 = vmatpush2.msra.mxu0 0.0
    %5191 = vmatprep.subr.mxu0 0.0
    %5192 = vmatpush2.msra.mxu0 0.0
    %5193 = vmatprep.subr.mxu0 0.0
    %5194 = vmatpush2.msra.mxu0 0.0
    %5195 = vmatprep.subr.mxu0 0.0
    %5196 = vmatpush2.msra.mxu0 0.0
    %5197 = vmatprep.subr.mxu0 0.0
    %5198 = vmatpush2.msra.mxu0 0.0
    %5199 = vmatprep.subr.mxu0 0.0
    %5200 = vmatpush2.msra.mxu0 0.0
    %5201 = vmatprep.subr.mxu0 0.0
    %5202 = vmatpush2.msra.mxu0 0.0
    %5203 = vmatprep.subr.mxu0 0.0
    %5204 = vmatpush2.msra.mxu0 0.0
    %5205 = vmatprep.subr.mxu0 0.0
    %5206 = vmatpush2.msra.mxu0 0.0
    %5207 = vmatprep.mubr.f32.mxu0 0.0
    %5208 = vmatmul.mubr.f32.gmra.mxu0 %v5141
    %v5209 = vpop.f32.mrf.mxu0
    %v5210 = vadd.f32 0.0, %v5209
    %v5211 = vpop.f32.mrf.mxu0
    %5212 = vdwg.mxu0
    %v5213 = vadd.f32 %v5138, %v5210
    %v5215 = vlaneseq
    %v5216 = vshrl.u32 %v5215, 7
    %v5217 = vsub.s32 0, %v5216
    %v5218 = vrot.slane %v5213, %v5217
    %vm5220 = vcmask 1040384
    %v5221 = vsel %vm5220, %v4013, %v5218
    %v5222 = vmax.f32 %v5221, 0.0
    %v5223 = vld [vmem:[%s19] sm:$0xff]
    %v5224 = vld [vmem:[%s19 + $0x8] sm:$0xff]
    %v5225 = vld [vmem:[%s19 + $0x10] sm:$0xff]
    %v5226 = vld [vmem:[%s19 + $0x18] sm:$0xff]
    %v5227 = vld [vmem:[%s20] sm:$0x1]
    %v5229 = vlaneseq
    %v5230 = vshrl.u32 %v5229, 7
    %v5231 = vsub.s32 0, %v5230
    %v5232 = vrot.slane %v5227, %v5231
    %vm5234 = vcmask 261120
    %v5236 = vsel %vm5234, %v5222, 0
    %5238 = vmatprep.subr.mxu0 0.0
    %5239 = vmatpush1.msra.mxu0 0.0
    %5240 = vmatprep.subr.mxu0 0.0
    %5241 = vmatpush1.msra.mxu0 0.0
    %5242 = vmatprep.subr.mxu0 0.0
    %5243 = vmatpush1.msra.mxu0 0.0
    %5244 = vmatprep.subr.mxu0 0.0
    %5245 = vmatpush1.msra.mxu0 0.0
    %5246 = vmatprep.subr.mxu0 0.0
    %5247 = vmatpush1.msra.mxu0 0.0
    %5248 = vmatprep.subr.mxu0 0.0
    %5249 = vmatpush1.msra.mxu0 0.0
    %5250 = vmatprep.subr.mxu0 0.0
    %5251 = vmatpush1.msra.mxu0 0.0
    %5252 = vmatprep.subr.mxu0 0.0
    %5253 = vmatpush1.msra.mxu0 0.0
    %5254 = vmatprep.subr.mxu0 0.0
    %5255 = vmatpush1.msra.mxu0 0.0
    %5256 = vmatprep.subr.mxu0 0.0
    %5257 = vmatpush1.msra.mxu0 0.0
    %5258 = vmatprep.subr.mxu0 0.0
    %5259 = vmatpush1.msra.mxu0 0.0
    %5260 = vmatprep.subr.mxu0 0.0
    %5261 = vmatpush1.msra.mxu0 0.0
    %5262 = vmatprep.subr.mxu0 0.0
    %5263 = vmatpush1.msra.mxu0 %v5226
    %5264 = vmatprep.subr.mxu0 0.0
    %5265 = vmatpush1.msra.mxu0 %v5225
    %5266 = vmatprep.subr.mxu0 0.0
    %5267 = vmatpush1.msra.mxu0 %v5224
    %5268 = vmatprep.subr.mxu0 0.0
    %5269 = vmatpush1.msra.mxu0 %v5223
    %5270 = vmatprep.subr.mxu0 0.0
    %5271 = vmatpush2.msra.mxu0 0.0
    %5272 = vmatprep.subr.mxu0 0.0
    %5273 = vmatpush2.msra.mxu0 0.0
    %5274 = vmatprep.subr.mxu0 0.0
    %5275 = vmatpush2.msra.mxu0 0.0
    %5276 = vmatprep.subr.mxu0 0.0
    %5277 = vmatpush2.msra.mxu0 0.0
    %5278 = vmatprep.subr.mxu0 0.0
    %5279 = vmatpush2.msra.mxu0 0.0
    %5280 = vmatprep.subr.mxu0 0.0
    %5281 = vmatpush2.msra.mxu0 0.0
    %5282 = vmatprep.subr.mxu0 0.0
    %5283 = vmatpush2.msra.mxu0 0.0
    %5284 = vmatprep.subr.mxu0 0.0
    %5285 = vmatpush2.msra.mxu0 0.0
    %5286 = vmatprep.subr.mxu0 0.0
    %5287 = vmatpush2.msra.mxu0 0.0
    %5288 = vmatprep.subr.mxu0 0.0
    %5289 = vmatpush2.msra.mxu0 0.0
    %5290 = vmatprep.subr.mxu0 0.0
    %5291 = vmatpush2.msra.mxu0 0.0
    %5292 = vmatprep.subr.mxu0 0.0
    %5293 = vmatpush2.msra.mxu0 0.0
    %5294 = vmatprep.subr.mxu0 0.0
    %5295 = vmatpush2.msra.mxu0 0.0
    %5296 = vmatprep.subr.mxu0 0.0
    %5297 = vmatpush2.msra.mxu0 0.0
    %5298 = vmatprep.subr.mxu0 0.0
    %5299 = vmatpush2.msra.mxu0 0.0
    %5300 = vmatprep.subr.mxu0 0.0
    %5301 = vmatpush2.msra.mxu0 0.0
    %5302 = vmatprep.mubr.f32.mxu0 0.0
    %5303 = vmatmul.mubr.f32.gmra.mxu0 %v5236
    %v5304 = vpop.f32.mrf.mxu0
    %v5305 = vadd.f32 %v5232, %v5304
    %v5306 = vpop.f32.mrf.mxu0
    %5307 = vdwg.mxu0
    %vm5308 = vcmask 41984
    %5309 = vst.msk [vmem:[#allocation2] sm:$0x3] %vm5308, %v5305
    // Predicated region
    $region86: #{cnn_forward.1} parent=1 // pred_check
      _
    $region87: #{cnn_forward.1} parent=1 // pred_check_branch
      %5311 = sbr.rel (0) target = $region89
    $region88: #{cnn_forward.1} parent=1 // pred_region
      %s5313 = ssub.s32 32, 32
      %5314 = vsyncadd [#allocation3], %s5313
      %s5316 = sshll.u32 [#allocation2], 4
      %s5317 = int_to_ptr.vmem [resolvable:$true] %s5316
      %5319 = dma.vmem_to_hbm [thread:$0]  %s5317, 32, %s21, [#allocation3]
    $region89: #{cnn_forward.1} parent=1 // pred_fallthru
      _
    // Predicated region
    $region90: #{cnn_forward.1} parent=1 // pred_check
      _
    $region91: #{cnn_forward.1} parent=1 // pred_check_branch
      %5321 = sbr.rel (0) target = $region93
    $region92: #{cnn_forward.1} parent=1 // pred_region
      %5322 = dma.done [#allocation3], 32
    $region93: #{cnn_forward.1} parent=1 // pred_fallthru
      _
    %5323 = vsyncpa [#allocation3], 1

</llo_original>
